<compile_context>
chip_gen: v7x
topology: tpu7x:2x2x1
jax: 0.10.0
libtpu: 0.0.40
codegen_flags: <defaults>
</compile_context>

<pallas_src>
import jax
import jax.numpy as jnp
from jax.experimental import pallas as pl
from jax.experimental.pallas import tpu as pltpu

# ---------------- model hyperparameters (small, consistent with the module) ----
VOCAB_SIZE = 50
EMBED_DIM = 32
HIDDEN_DIM = 32
OUTPUT_DIM = 1
N_LAYERS = 2
BIDIRECTIONAL = True
PAD_IDX = 0
SEQ_LEN = 8
BATCH = 2


def _sigmoid(x):
    # expit(x) == 0.5*(tanh(x/2)+1): tanh lives on the EUP (free bundle slot),
    # avoids a VPU divide sequence on the serial recurrence path, and is
    # numerically stable for large |x|.
    return 0.5 * (jnp.tanh(0.5 * x) + 1.0)


def _lstm_cell(gates, c_prev, H):
    i_g = _sigmoid(gates[:, 0 * H:1 * H])
    f_g = _sigmoid(gates[:, 1 * H:2 * H])
    g_g = jnp.tanh(gates[:, 2 * H:3 * H])
    o_g = _sigmoid(gates[:, 3 * H:4 * H])
    c_new = f_g * c_prev + i_g * g_g
    h_new = o_g * jnp.tanh(c_new)
    return h_new, c_new


def _bidir_layer(x2d, T, B, H, w_ih_f, w_hh_f, b_f, w_ih_b, w_hh_b, b_b,
                 collect_output):
    """One bidirectional LSTM layer, fwd+bwd interleaved in one unrolled loop.

    x2d: (T*B, IN), row block t = timestep t.
    Returns (y2d, h_f_final, h_b_final); y2d is (T*B, 2H) or None.
    """
    # Hoisted input projection + combined bias: one batched matmul per direction
    # (M = T*B), computed once, off the serial critical path.
    gx_f = jnp.dot(x2d, w_ih_f, preferred_element_type=jnp.float32) + b_f
    gx_b = jnp.dot(x2d, w_ih_b, preferred_element_type=jnp.float32) + b_b

    h_f = jnp.zeros((B, H), jnp.float32)
    c_f = jnp.zeros((B, H), jnp.float32)
    h_b = jnp.zeros((B, H), jnp.float32)
    c_b = jnp.zeros((B, H), jnp.float32)
    y_f = [None] * T
    y_b = [None] * T
    for t in range(T):          # static unroll: T is fixed and small, gives the
        tb = T - 1 - t          # LLO scheduler cross-step visibility.
        g_f = gx_f[t * B:(t + 1) * B] + jnp.dot(
            h_f, w_hh_f, preferred_element_type=jnp.float32)
        h_f, c_f = _lstm_cell(g_f, c_f, H)
        g_b = gx_b[tb * B:(tb + 1) * B] + jnp.dot(
            h_b, w_hh_b, preferred_element_type=jnp.float32)
        h_b, c_b = _lstm_cell(g_b, c_b, H)
        y_f[t] = h_f
        y_b[tb] = h_b

    if collect_output:
        # Lane-dense (T*B, 2H) slab: [h_fwd(t) | h_bwd(t)] per row block,
        # built in-register (no HBM concat / reverse).
        y2d = jnp.concatenate(
            [jnp.concatenate(y_f, axis=0), jnp.concatenate(y_b, axis=0)],
            axis=1)
    else:
        y2d = None
    return y2d, h_f, h_b


def _make_fused_kernel(T, B, H):
    def kernel(x_ref,
               w0f_ih, w0f_hh, b0f, w0b_ih, w0b_hh, b0b,
               w1f_ih, w1f_hh, b1f, w1b_ih, w1b_hh, b1b,
               fcw_ref, fcb_ref, out_ref):
        x2d = x_ref[...]                                          # (T*B, E)
        # ---- layer 0 (need per-step outputs as layer-1 input) -------------
        y1, _, _ = _bidir_layer(
            x2d, T, B, H,
            w0f_ih[...], w0f_hh[...], b0f[...],
            w0b_ih[...], w0b_hh[...], b0b[...], collect_output=True)
        # TODO(synk): inter-layer nn.Dropout has no inference-time effect; identity.
        # ---- layer 1 (only the final hidden states are needed) ------------
        _, h_f, h_b = _bidir_layer(
            y1, T, B, H,
            w1f_ih[...], w1f_hh[...], b1f[...],
            w1b_ih[...], w1b_hh[...], b1b[...], collect_output=False)
        # hidden[-2] (last layer fwd) ++ hidden[-1] (last layer bwd), then fc.
        h_cat = jnp.concatenate([h_f, h_b], axis=1)               # (B, 2H)
        out_ref[...] = (jnp.dot(h_cat, fcw_ref[...],
                                preferred_element_type=jnp.float32)
                        + fcb_ref[...])
    return kernel


# ---------------- wrapper -------------------------------------------------------
def rnn_forward(text, params):
    # Embedding lookup is glue (plain JAX gather); everything else is one kernel.
    x = params["embedding"][text]                                 # (T, B, E)
    T, B, E = x.shape
    x2d = x.reshape(T * B, E)
    H = HIDDEN_DIM
    p0, p1 = params["lstm"]
    vmem = pl.BlockSpec(memory_space=pltpu.MemorySpace.VMEM)
    return pl.pallas_call(
        _make_fused_kernel(T, B, H),
        out_shape=jax.ShapeDtypeStruct((B, OUTPUT_DIM), jnp.float32),
        in_specs=[vmem] * 15,
        out_specs=vmem,
    )(x2d,
      p0["w_ih_f"], p0["w_hh_f"], p0["b_f"],
      p0["w_ih_b"], p0["w_hh_b"], p0["b_b"],
      p1["w_ih_f"], p1["w_hh_f"], p1["b_f"],
      p1["w_ih_b"], p1["w_hh_b"], p1["b_b"],
      params["fc_w_t"], params["fc_b"])


# ---------------- parameter init (deterministic, PyTorch-like uniform) ---------
def init_params(key):
    k = 1.0 / jnp.sqrt(HIDDEN_DIM)

    def uni(key, shape):
        return jax.random.uniform(key, shape, jnp.float32, -k, k)

    keys = jax.random.split(key, 4 + N_LAYERS * 2 * 6)
    ki = iter(keys)

    emb = jax.random.normal(next(ki), (VOCAB_SIZE, EMBED_DIM), jnp.float32)
    emb = emb.at[PAD_IDX].set(0.0)            # padding_idx row is zero

    lstm_params = []
    for layer in range(N_LAYERS):
        in_dim = EMBED_DIM if layer == 0 else 2 * HIDDEN_DIM
        layer_p = {}
        for tag in ("f", "b"):
            w_ih = uni(next(ki), (4 * HIDDEN_DIM, in_dim))      # torch layout
            w_hh = uni(next(ki), (4 * HIDDEN_DIM, HIDDEN_DIM))
            b_ih = uni(next(ki), (4 * HIDDEN_DIM,))
            b_hh = uni(next(ki), (4 * HIDDEN_DIM,))
            layer_p[f"w_ih_{tag}"] = jnp.transpose(w_ih)        # (in, 4H)
            layer_p[f"w_hh_{tag}"] = jnp.transpose(w_hh)        # (H, 4H)
            layer_p[f"b_{tag}"] = (b_ih + b_hh).reshape(1, 4 * HIDDEN_DIM)
            next(ki); next(ki)  # keep key consumption fixed
        lstm_params.append(layer_p)

    fc_w = uni(next(ki), (OUTPUT_DIM, 2 * HIDDEN_DIM))          # torch layout
    fc_b = uni(next(ki), (OUTPUT_DIM,))
    return {
        "embedding": emb,
        "lstm": lstm_params,
        "fc_w_t": jnp.transpose(fc_w),                          # (2H, out)
        "fc_b": fc_b.reshape(1, OUTPUT_DIM),
    }


if __name__ == "__main__":
    key = jax.random.PRNGKey(0)
    pkey, tkey = jax.random.split(key)
    params = init_params(pkey)
    text = jax.random.randint(tkey, (SEQ_LEN, BATCH), 0, VOCAB_SIZE,
                              dtype=jnp.int32)                  # (T, B) token ids
    out = jax.jit(rnn_forward)(text, params)
    jax.block_until_ready(out)
    assert out.shape == (BATCH, OUTPUT_DIM)
    print("KERNEL_OK")
</pallas_src>

<mosaic_0001>
module attributes {stable_mosaic.version = 11 : i64} {
  func.func @kernel(%arg0: memref<16x32xf32, #tpu.memory_space<vmem>>, %arg1: memref<32x128xf32, #tpu.memory_space<vmem>>, %arg2: memref<32x128xf32, #tpu.memory_space<vmem>>, %arg3: memref<1x128xf32, #tpu.memory_space<vmem>>, %arg4: memref<32x128xf32, #tpu.memory_space<vmem>>, %arg5: memref<32x128xf32, #tpu.memory_space<vmem>>, %arg6: memref<1x128xf32, #tpu.memory_space<vmem>>, %arg7: memref<64x128xf32, #tpu.memory_space<vmem>>, %arg8: memref<32x128xf32, #tpu.memory_space<vmem>>, %arg9: memref<1x128xf32, #tpu.memory_space<vmem>>, %arg10: memref<64x128xf32, #tpu.memory_space<vmem>>, %arg11: memref<32x128xf32, #tpu.memory_space<vmem>>, %arg12: memref<1x128xf32, #tpu.memory_space<vmem>>, %arg13: memref<64x1xf32, #tpu.memory_space<vmem>>, %arg14: memref<1x1xf32, #tpu.memory_space<vmem>>, %arg15: memref<2x1xf32, #tpu.memory_space<vmem>>) attributes {dimension_semantics = [], scalar_prefetch = 0 : i64, scratch_operands = 0 : i64, tpu.core_type = #tpu.core_type<tc>} {
    %c0 = arith.constant 0 : index
    %c0_0 = arith.constant 0 : index
    %0 = vector.load %arg0[%c0, %c0_0] : memref<16x32xf32, #tpu.memory_space<vmem>>, vector<16x32xf32>
    %c0_1 = arith.constant 0 : index
    %c0_2 = arith.constant 0 : index
    %1 = vector.load %arg1[%c0_1, %c0_2] : memref<32x128xf32, #tpu.memory_space<vmem>>, vector<32x128xf32>
    %c0_3 = arith.constant 0 : index
    %c0_4 = arith.constant 0 : index
    %2 = vector.load %arg2[%c0_3, %c0_4] : memref<32x128xf32, #tpu.memory_space<vmem>>, vector<32x128xf32>
    %c0_5 = arith.constant 0 : index
    %c0_6 = arith.constant 0 : index
    %3 = vector.load %arg3[%c0_5, %c0_6] : memref<1x128xf32, #tpu.memory_space<vmem>>, vector<1x128xf32>
    %c0_7 = arith.constant 0 : index
    %c0_8 = arith.constant 0 : index
    %4 = vector.load %arg4[%c0_7, %c0_8] : memref<32x128xf32, #tpu.memory_space<vmem>>, vector<32x128xf32>
    %c0_9 = arith.constant 0 : index
    %c0_10 = arith.constant 0 : index
    %5 = vector.load %arg5[%c0_9, %c0_10] : memref<32x128xf32, #tpu.memory_space<vmem>>, vector<32x128xf32>
    %c0_11 = arith.constant 0 : index
    %c0_12 = arith.constant 0 : index
    %6 = vector.load %arg6[%c0_11, %c0_12] : memref<1x128xf32, #tpu.memory_space<vmem>>, vector<1x128xf32>
    %cst = arith.constant dense<0.000000e+00> : vector<16x128xf32>
    %7 = tpu.matmul %0, %1, %cst {dimension_numbers = #tpu.dot_dimension_numbers<[1], [0], [0], [1], [0, 0, 1, 1], [], []>} : vector<16x32xf32>, vector<32x128xf32>, vector<16x128xf32> -> vector<16x128xf32>
    %8 = vector.broadcast %3 : vector<1x128xf32> to vector<16x128xf32>
    %9 = arith.addf %7, %8 : vector<16x128xf32>
    %cst_13 = arith.constant dense<0.000000e+00> : vector<16x128xf32>
    %10 = tpu.matmul %0, %4, %cst_13 {dimension_numbers = #tpu.dot_dimension_numbers<[1], [0], [0], [1], [0, 0, 1, 1], [], []>} : vector<16x32xf32>, vector<32x128xf32>, vector<16x128xf32> -> vector<16x128xf32>
    %11 = vector.broadcast %6 : vector<1x128xf32> to vector<16x128xf32>
    %12 = arith.addf %10, %11 : vector<16x128xf32>
    %cst_14 = arith.constant 0.000000e+00 : f32
    %13 = vector.broadcast %cst_14 : f32 to vector<2x32xf32>
    %cst_15 = arith.constant 0.000000e+00 : f32
    %14 = vector.broadcast %cst_15 : f32 to vector<2x32xf32>
    %cst_16 = arith.constant 0.000000e+00 : f32
    %15 = vector.broadcast %cst_16 : f32 to vector<2x32xf32>
    %cst_17 = arith.constant 0.000000e+00 : f32
    %16 = vector.broadcast %cst_17 : f32 to vector<2x32xf32>
    %17 = vector.extract_strided_slice %9 {offsets = [0, 0], sizes = [2, 128], strides = [1, 1]} : vector<16x128xf32> to vector<2x128xf32>
    %cst_18 = arith.constant dense<0.000000e+00> : vector<2x128xf32>
    %18 = tpu.matmul %13, %2, %cst_18 {dimension_numbers = #tpu.dot_dimension_numbers<[1], [0], [0], [1], [0, 0, 1, 1], [], []>} : vector<2x32xf32>, vector<32x128xf32>, vector<2x128xf32> -> vector<2x128xf32>
    %19 = arith.addf %17, %18 : vector<2x128xf32>
    %20 = vector.extract_strided_slice %19 {offsets = [0, 0], sizes = [2, 32], strides = [1, 1]} : vector<2x128xf32> to vector<2x32xf32>
    %cst_19 = arith.constant 5.000000e-01 : f32
    %21 = vector.broadcast %cst_19 : f32 to vector<2x32xf32>
    %22 = arith.mulf %21, %20 : vector<2x32xf32>
    %23 = math.tanh %22 : vector<2x32xf32>
    %cst_20 = arith.constant 1.000000e+00 : f32
    %24 = vector.broadcast %cst_20 : f32 to vector<2x32xf32>
    %25 = arith.addf %23, %24 : vector<2x32xf32>
    %cst_21 = arith.constant 5.000000e-01 : f32
    %26 = vector.broadcast %cst_21 : f32 to vector<2x32xf32>
    %27 = arith.mulf %26, %25 : vector<2x32xf32>
    %28 = vector.extract_strided_slice %19 {offsets = [0, 32], sizes = [2, 32], strides = [1, 1]} : vector<2x128xf32> to vector<2x32xf32>
    %cst_22 = arith.constant 5.000000e-01 : f32
    %29 = vector.broadcast %cst_22 : f32 to vector<2x32xf32>
    %30 = arith.mulf %29, %28 : vector<2x32xf32>
    %31 = math.tanh %30 : vector<2x32xf32>
    %cst_23 = arith.constant 1.000000e+00 : f32
    %32 = vector.broadcast %cst_23 : f32 to vector<2x32xf32>
    %33 = arith.addf %31, %32 : vector<2x32xf32>
    %cst_24 = arith.constant 5.000000e-01 : f32
    %34 = vector.broadcast %cst_24 : f32 to vector<2x32xf32>
    %35 = arith.mulf %34, %33 : vector<2x32xf32>
    %36 = vector.extract_strided_slice %19 {offsets = [0, 64], sizes = [2, 32], strides = [1, 1]} : vector<2x128xf32> to vector<2x32xf32>
    %37 = math.tanh %36 : vector<2x32xf32>
    %38 = vector.extract_strided_slice %19 {offsets = [0, 96], sizes = [2, 32], strides = [1, 1]} : vector<2x128xf32> to vector<2x32xf32>
    %cst_25 = arith.constant 5.000000e-01 : f32
    %39 = vector.broadcast %cst_25 : f32 to vector<2x32xf32>
    %40 = arith.mulf %39, %38 : vector<2x32xf32>
    %41 = math.tanh %40 : vector<2x32xf32>
    %cst_26 = arith.constant 1.000000e+00 : f32
    %42 = vector.broadcast %cst_26 : f32 to vector<2x32xf32>
    %43 = arith.addf %41, %42 : vector<2x32xf32>
    %cst_27 = arith.constant 5.000000e-01 : f32
    %44 = vector.broadcast %cst_27 : f32 to vector<2x32xf32>
    %45 = arith.mulf %44, %43 : vector<2x32xf32>
    %46 = arith.mulf %35, %14 : vector<2x32xf32>
    %47 = arith.mulf %27, %37 : vector<2x32xf32>
    %48 = arith.addf %46, %47 : vector<2x32xf32>
    %49 = math.tanh %48 : vector<2x32xf32>
    %50 = arith.mulf %45, %49 : vector<2x32xf32>
    %51 = vector.extract_strided_slice %12 {offsets = [14, 0], sizes = [2, 128], strides = [1, 1]} : vector<16x128xf32> to vector<2x128xf32>
    %cst_28 = arith.constant dense<0.000000e+00> : vector<2x128xf32>
    %52 = tpu.matmul %15, %5, %cst_28 {dimension_numbers = #tpu.dot_dimension_numbers<[1], [0], [0], [1], [0, 0, 1, 1], [], []>} : vector<2x32xf32>, vector<32x128xf32>, vector<2x128xf32> -> vector<2x128xf32>
    %53 = arith.addf %51, %52 : vector<2x128xf32>
    %54 = vector.extract_strided_slice %53 {offsets = [0, 0], sizes = [2, 32], strides = [1, 1]} : vector<2x128xf32> to vector<2x32xf32>
    %cst_29 = arith.constant 5.000000e-01 : f32
    %55 = vector.broadcast %cst_29 : f32 to vector<2x32xf32>
    %56 = arith.mulf %55, %54 : vector<2x32xf32>
    %57 = math.tanh %56 : vector<2x32xf32>
    %cst_30 = arith.constant 1.000000e+00 : f32
    %58 = vector.broadcast %cst_30 : f32 to vector<2x32xf32>
    %59 = arith.addf %57, %58 : vector<2x32xf32>
    %cst_31 = arith.constant 5.000000e-01 : f32
    %60 = vector.broadcast %cst_31 : f32 to vector<2x32xf32>
    %61 = arith.mulf %60, %59 : vector<2x32xf32>
    %62 = vector.extract_strided_slice %53 {offsets = [0, 32], sizes = [2, 32], strides = [1, 1]} : vector<2x128xf32> to vector<2x32xf32>
    %cst_32 = arith.constant 5.000000e-01 : f32
    %63 = vector.broadcast %cst_32 : f32 to vector<2x32xf32>
    %64 = arith.mulf %63, %62 : vector<2x32xf32>
    %65 = math.tanh %64 : vector<2x32xf32>
    %cst_33 = arith.constant 1.000000e+00 : f32
    %66 = vector.broadcast %cst_33 : f32 to vector<2x32xf32>
    %67 = arith.addf %65, %66 : vector<2x32xf32>
    %cst_34 = arith.constant 5.000000e-01 : f32
    %68 = vector.broadcast %cst_34 : f32 to vector<2x32xf32>
    %69 = arith.mulf %68, %67 : vector<2x32xf32>
    %70 = vector.extract_strided_slice %53 {offsets = [0, 64], sizes = [2, 32], strides = [1, 1]} : vector<2x128xf32> to vector<2x32xf32>
    %71 = math.tanh %70 : vector<2x32xf32>
    %72 = vector.extract_strided_slice %53 {offsets = [0, 96], sizes = [2, 32], strides = [1, 1]} : vector<2x128xf32> to vector<2x32xf32>
    %cst_35 = arith.constant 5.000000e-01 : f32
    %73 = vector.broadcast %cst_35 : f32 to vector<2x32xf32>
    %74 = arith.mulf %73, %72 : vector<2x32xf32>
    %75 = math.tanh %74 : vector<2x32xf32>
    %cst_36 = arith.constant 1.000000e+00 : f32
    %76 = vector.broadcast %cst_36 : f32 to vector<2x32xf32>
    %77 = arith.addf %75, %76 : vector<2x32xf32>
    %cst_37 = arith.constant 5.000000e-01 : f32
    %78 = vector.broadcast %cst_37 : f32 to vector<2x32xf32>
    %79 = arith.mulf %78, %77 : vector<2x32xf32>
    %80 = arith.mulf %69, %16 : vector<2x32xf32>
    %81 = arith.mulf %61, %71 : vector<2x32xf32>
    %82 = arith.addf %80, %81 : vector<2x32xf32>
    %83 = math.tanh %82 : vector<2x32xf32>
    %84 = arith.mulf %79, %83 : vector<2x32xf32>
    %85 = vector.extract_strided_slice %9 {offsets = [2, 0], sizes = [2, 128], strides = [1, 1]} : vector<16x128xf32> to vector<2x128xf32>
    %cst_38 = arith.constant dense<0.000000e+00> : vector<2x128xf32>
    %86 = tpu.matmul %50, %2, %cst_38 {dimension_numbers = #tpu.dot_dimension_numbers<[1], [0], [0], [1], [0, 0, 1, 1], [], []>} : vector<2x32xf32>, vector<32x128xf32>, vector<2x128xf32> -> vector<2x128xf32>
    %87 = arith.addf %85, %86 : vector<2x128xf32>
    %88 = vector.extract_strided_slice %87 {offsets = [0, 0], sizes = [2, 32], strides = [1, 1]} : vector<2x128xf32> to vector<2x32xf32>
    %cst_39 = arith.constant 5.000000e-01 : f32
    %89 = vector.broadcast %cst_39 : f32 to vector<2x32xf32>
    %90 = arith.mulf %89, %88 : vector<2x32xf32>
    %91 = math.tanh %90 : vector<2x32xf32>
    %cst_40 = arith.constant 1.000000e+00 : f32
    %92 = vector.broadcast %cst_40 : f32 to vector<2x32xf32>
    %93 = arith.addf %91, %92 : vector<2x32xf32>
    %cst_41 = arith.constant 5.000000e-01 : f32
    %94 = vector.broadcast %cst_41 : f32 to vector<2x32xf32>
    %95 = arith.mulf %94, %93 : vector<2x32xf32>
    %96 = vector.extract_strided_slice %87 {offsets = [0, 32], sizes = [2, 32], strides = [1, 1]} : vector<2x128xf32> to vector<2x32xf32>
    %cst_42 = arith.constant 5.000000e-01 : f32
    %97 = vector.broadcast %cst_42 : f32 to vector<2x32xf32>
    %98 = arith.mulf %97, %96 : vector<2x32xf32>
    %99 = math.tanh %98 : vector<2x32xf32>
    %cst_43 = arith.constant 1.000000e+00 : f32
    %100 = vector.broadcast %cst_43 : f32 to vector<2x32xf32>
    %101 = arith.addf %99, %100 : vector<2x32xf32>
    %cst_44 = arith.constant 5.000000e-01 : f32
    %102 = vector.broadcast %cst_44 : f32 to vector<2x32xf32>
    %103 = arith.mulf %102, %101 : vector<2x32xf32>
    %104 = vector.extract_strided_slice %87 {offsets = [0, 64], sizes = [2, 32], strides = [1, 1]} : vector<2x128xf32> to vector<2x32xf32>
    %105 = math.tanh %104 : vector<2x32xf32>
    %106 = vector.extract_strided_slice %87 {offsets = [0, 96], sizes = [2, 32], strides = [1, 1]} : vector<2x128xf32> to vector<2x32xf32>
    %cst_45 = arith.constant 5.000000e-01 : f32
    %107 = vector.broadcast %cst_45 : f32 to vector<2x32xf32>
    %108 = arith.mulf %107, %106 : vector<2x32xf32>
    %109 = math.tanh %108 : vector<2x32xf32>
    %cst_46 = arith.constant 1.000000e+00 : f32
    %110 = vector.broadcast %cst_46 : f32 to vector<2x32xf32>
    %111 = arith.addf %109, %110 : vector<2x32xf32>
    %cst_47 = arith.constant 5.000000e-01 : f32
    %112 = vector.broadcast %cst_47 : f32 to vector<2x32xf32>
    %113 = arith.mulf %112, %111 : vector<2x32xf32>
    %114 = arith.mulf %103, %48 : vector<2x32xf32>
    %115 = arith.mulf %95, %105 : vector<2x32xf32>
    %116 = arith.addf %114, %115 : vector<2x32xf32>
    %117 = math.tanh %116 : vector<2x32xf32>
    %118 = arith.mulf %113, %117 : vector<2x32xf32>
    %119 = vector.extract_strided_slice %12 {offsets = [12, 0], sizes = [2, 128], strides = [1, 1]} : vector<16x128xf32> to vector<2x128xf32>
    %cst_48 = arith.constant dense<0.000000e+00> : vector<2x128xf32>
    %120 = tpu.matmul %84, %5, %cst_48 {dimension_numbers = #tpu.dot_dimension_numbers<[1], [0], [0], [1], [0, 0, 1, 1], [], []>} : vector<2x32xf32>, vector<32x128xf32>, vector<2x128xf32> -> vector<2x128xf32>
    %121 = arith.addf %119, %120 : vector<2x128xf32>
    %122 = vector.extract_strided_slice %121 {offsets = [0, 0], sizes = [2, 32], strides = [1, 1]} : vector<2x128xf32> to vector<2x32xf32>
    %cst_49 = arith.constant 5.000000e-01 : f32
    %123 = vector.broadcast %cst_49 : f32 to vector<2x32xf32>
    %124 = arith.mulf %123, %122 : vector<2x32xf32>
    %125 = math.tanh %124 : vector<2x32xf32>
    %cst_50 = arith.constant 1.000000e+00 : f32
    %126 = vector.broadcast %cst_50 : f32 to vector<2x32xf32>
    %127 = arith.addf %125, %126 : vector<2x32xf32>
    %cst_51 = arith.constant 5.000000e-01 : f32
    %128 = vector.broadcast %cst_51 : f32 to vector<2x32xf32>
    %129 = arith.mulf %128, %127 : vector<2x32xf32>
    %130 = vector.extract_strided_slice %121 {offsets = [0, 32], sizes = [2, 32], strides = [1, 1]} : vector<2x128xf32> to vector<2x32xf32>
    %cst_52 = arith.constant 5.000000e-01 : f32
    %131 = vector.broadcast %cst_52 : f32 to vector<2x32xf32>
    %132 = arith.mulf %131, %130 : vector<2x32xf32>
    %133 = math.tanh %132 : vector<2x32xf32>
    %cst_53 = arith.constant 1.000000e+00 : f32
    %134 = vector.broadcast %cst_53 : f32 to vector<2x32xf32>
    %135 = arith.addf %133, %134 : vector<2x32xf32>
    %cst_54 = arith.constant 5.000000e-01 : f32
    %136 = vector.broadcast %cst_54 : f32 to vector<2x32xf32>
    %137 = arith.mulf %136, %135 : vector<2x32xf32>
    %138 = vector.extract_strided_slice %121 {offsets = [0, 64], sizes = [2, 32], strides = [1, 1]} : vector<2x128xf32> to vector<2x32xf32>
    %139 = math.tanh %138 : vector<2x32xf32>
    %140 = vector.extract_strided_slice %121 {offsets = [0, 96], sizes = [2, 32], strides = [1, 1]} : vector<2x128xf32> to vector<2x32xf32>
    %cst_55 = arith.constant 5.000000e-01 : f32
    %141 = vector.broadcast %cst_55 : f32 to vector<2x32xf32>
    %142 = arith.mulf %141, %140 : vector<2x32xf32>
    %143 = math.tanh %142 : vector<2x32xf32>
    %cst_56 = arith.constant 1.000000e+00 : f32
    %144 = vector.broadcast %cst_56 : f32 to vector<2x32xf32>
    %145 = arith.addf %143, %144 : vector<2x32xf32>
    %cst_57 = arith.constant 5.000000e-01 : f32
    %146 = vector.broadcast %cst_57 : f32 to vector<2x32xf32>
    %147 = arith.mulf %146, %145 : vector<2x32xf32>
    %148 = arith.mulf %137, %82 : vector<2x32xf32>
    %149 = arith.mulf %129, %139 : vector<2x32xf32>
    %150 = arith.addf %148, %149 : vector<2x32xf32>
    %151 = math.tanh %150 : vector<2x32xf32>
    %152 = arith.mulf %147, %151 : vector<2x32xf32>
    %153 = vector.extract_strided_slice %9 {offsets = [4, 0], sizes = [2, 128], strides = [1, 1]} : vector<16x128xf32> to vector<2x128xf32>
    %cst_58 = arith.constant dense<0.000000e+00> : vector<2x128xf32>
    %154 = tpu.matmul %118, %2, %cst_58 {dimension_numbers = #tpu.dot_dimension_numbers<[1], [0], [0], [1], [0, 0, 1, 1], [], []>} : vector<2x32xf32>, vector<32x128xf32>, vector<2x128xf32> -> vector<2x128xf32>
    %155 = arith.addf %153, %154 : vector<2x128xf32>
    %156 = vector.extract_strided_slice %155 {offsets = [0, 0], sizes = [2, 32], strides = [1, 1]} : vector<2x128xf32> to vector<2x32xf32>
    %cst_59 = arith.constant 5.000000e-01 : f32
    %157 = vector.broadcast %cst_59 : f32 to vector<2x32xf32>
    %158 = arith.mulf %157, %156 : vector<2x32xf32>
    %159 = math.tanh %158 : vector<2x32xf32>
    %cst_60 = arith.constant 1.000000e+00 : f32
    %160 = vector.broadcast %cst_60 : f32 to vector<2x32xf32>
    %161 = arith.addf %159, %160 : vector<2x32xf32>
    %cst_61 = arith.constant 5.000000e-01 : f32
    %162 = vector.broadcast %cst_61 : f32 to vector<2x32xf32>
    %163 = arith.mulf %162, %161 : vector<2x32xf32>
    %164 = vector.extract_strided_slice %155 {offsets = [0, 32], sizes = [2, 32], strides = [1, 1]} : vector<2x128xf32> to vector<2x32xf32>
    %cst_62 = arith.constant 5.000000e-01 : f32
    %165 = vector.broadcast %cst_62 : f32 to vector<2x32xf32>
    %166 = arith.mulf %165, %164 : vector<2x32xf32>
    %167 = math.tanh %166 : vector<2x32xf32>
    %cst_63 = arith.constant 1.000000e+00 : f32
    %168 = vector.broadcast %cst_63 : f32 to vector<2x32xf32>
    %169 = arith.addf %167, %168 : vector<2x32xf32>
    %cst_64 = arith.constant 5.000000e-01 : f32
    %170 = vector.broadcast %cst_64 : f32 to vector<2x32xf32>
    %171 = arith.mulf %170, %169 : vector<2x32xf32>
    %172 = vector.extract_strided_slice %155 {offsets = [0, 64], sizes = [2, 32], strides = [1, 1]} : vector<2x128xf32> to vector<2x32xf32>
    %173 = math.tanh %172 : vector<2x32xf32>
    %174 = vector.extract_strided_slice %155 {offsets = [0, 96], sizes = [2, 32], strides = [1, 1]} : vector<2x128xf32> to vector<2x32xf32>
    %cst_65 = arith.constant 5.000000e-01 : f32
    %175 = vector.broadcast %cst_65 : f32 to vector<2x32xf32>
    %176 = arith.mulf %175, %174 : vector<2x32xf32>
    %177 = math.tanh %176 : vector<2x32xf32>
    %cst_66 = arith.constant 1.000000e+00 : f32
    %178 = vector.broadcast %cst_66 : f32 to vector<2x32xf32>
    %179 = arith.addf %177, %178 : vector<2x32xf32>
    %cst_67 = arith.constant 5.000000e-01 : f32
    %180 = vector.broadcast %cst_67 : f32 to vector<2x32xf32>
    %181 = arith.mulf %180, %179 : vector<2x32xf32>
    %182 = arith.mulf %171, %116 : vector<2x32xf32>
    %183 = arith.mulf %163, %173 : vector<2x32xf32>
    %184 = arith.addf %182, %183 : vector<2x32xf32>
    %185 = math.tanh %184 : vector<2x32xf32>
    %186 = arith.mulf %181, %185 : vector<2x32xf32>
    %187 = vector.extract_strided_slice %12 {offsets = [10, 0], sizes = [2, 128], strides = [1, 1]} : vector<16x128xf32> to vector<2x128xf32>
    %cst_68 = arith.constant dense<0.000000e+00> : vector<2x128xf32>
    %188 = tpu.matmul %152, %5, %cst_68 {dimension_numbers = #tpu.dot_dimension_numbers<[1], [0], [0], [1], [0, 0, 1, 1], [], []>} : vector<2x32xf32>, vector<32x128xf32>, vector<2x128xf32> -> vector<2x128xf32>
    %189 = arith.addf %187, %188 : vector<2x128xf32>
    %190 = vector.extract_strided_slice %189 {offsets = [0, 0], sizes = [2, 32], strides = [1, 1]} : vector<2x128xf32> to vector<2x32xf32>
    %cst_69 = arith.constant 5.000000e-01 : f32
    %191 = vector.broadcast %cst_69 : f32 to vector<2x32xf32>
    %192 = arith.mulf %191, %190 : vector<2x32xf32>
    %193 = math.tanh %192 : vector<2x32xf32>
    %cst_70 = arith.constant 1.000000e+00 : f32
    %194 = vector.broadcast %cst_70 : f32 to vector<2x32xf32>
    %195 = arith.addf %193, %194 : vector<2x32xf32>
    %cst_71 = arith.constant 5.000000e-01 : f32
    %196 = vector.broadcast %cst_71 : f32 to vector<2x32xf32>
    %197 = arith.mulf %196, %195 : vector<2x32xf32>
    %198 = vector.extract_strided_slice %189 {offsets = [0, 32], sizes = [2, 32], strides = [1, 1]} : vector<2x128xf32> to vector<2x32xf32>
    %cst_72 = arith.constant 5.000000e-01 : f32
    %199 = vector.broadcast %cst_72 : f32 to vector<2x32xf32>
    %200 = arith.mulf %199, %198 : vector<2x32xf32>
    %201 = math.tanh %200 : vector<2x32xf32>
    %cst_73 = arith.constant 1.000000e+00 : f32
    %202 = vector.broadcast %cst_73 : f32 to vector<2x32xf32>
    %203 = arith.addf %201, %202 : vector<2x32xf32>
    %cst_74 = arith.constant 5.000000e-01 : f32
    %204 = vector.broadcast %cst_74 : f32 to vector<2x32xf32>
    %205 = arith.mulf %204, %203 : vector<2x32xf32>
    %206 = vector.extract_strided_slice %189 {offsets = [0, 64], sizes = [2, 32], strides = [1, 1]} : vector<2x128xf32> to vector<2x32xf32>
    %207 = math.tanh %206 : vector<2x32xf32>
    %208 = vector.extract_strided_slice %189 {offsets = [0, 96], sizes = [2, 32], strides = [1, 1]} : vector<2x128xf32> to vector<2x32xf32>
    %cst_75 = arith.constant 5.000000e-01 : f32
    %209 = vector.broadcast %cst_75 : f32 to vector<2x32xf32>
    %210 = arith.mulf %209, %208 : vector<2x32xf32>
    %211 = math.tanh %210 : vector<2x32xf32>
    %cst_76 = arith.constant 1.000000e+00 : f32
    %212 = vector.broadcast %cst_76 : f32 to vector<2x32xf32>
    %213 = arith.addf %211, %212 : vector<2x32xf32>
    %cst_77 = arith.constant 5.000000e-01 : f32
    %214 = vector.broadcast %cst_77 : f32 to vector<2x32xf32>
    %215 = arith.mulf %214, %213 : vector<2x32xf32>
    %216 = arith.mulf %205, %150 : vector<2x32xf32>
    %217 = arith.mulf %197, %207 : vector<2x32xf32>
    %218 = arith.addf %216, %217 : vector<2x32xf32>
    %219 = math.tanh %218 : vector<2x32xf32>
    %220 = arith.mulf %215, %219 : vector<2x32xf32>
    %221 = vector.extract_strided_slice %9 {offsets = [6, 0], sizes = [2, 128], strides = [1, 1]} : vector<16x128xf32> to vector<2x128xf32>
    %cst_78 = arith.constant dense<0.000000e+00> : vector<2x128xf32>
    %222 = tpu.matmul %186, %2, %cst_78 {dimension_numbers = #tpu.dot_dimension_numbers<[1], [0], [0], [1], [0, 0, 1, 1], [], []>} : vector<2x32xf32>, vector<32x128xf32>, vector<2x128xf32> -> vector<2x128xf32>
    %223 = arith.addf %221, %222 : vector<2x128xf32>
    %224 = vector.extract_strided_slice %223 {offsets = [0, 0], sizes = [2, 32], strides = [1, 1]} : vector<2x128xf32> to vector<2x32xf32>
    %cst_79 = arith.constant 5.000000e-01 : f32
    %225 = vector.broadcast %cst_79 : f32 to vector<2x32xf32>
    %226 = arith.mulf %225, %224 : vector<2x32xf32>
    %227 = math.tanh %226 : vector<2x32xf32>
    %cst_80 = arith.constant 1.000000e+00 : f32
    %228 = vector.broadcast %cst_80 : f32 to vector<2x32xf32>
    %229 = arith.addf %227, %228 : vector<2x32xf32>
    %cst_81 = arith.constant 5.000000e-01 : f32
    %230 = vector.broadcast %cst_81 : f32 to vector<2x32xf32>
    %231 = arith.mulf %230, %229 : vector<2x32xf32>
    %232 = vector.extract_strided_slice %223 {offsets = [0, 32], sizes = [2, 32], strides = [1, 1]} : vector<2x128xf32> to vector<2x32xf32>
    %cst_82 = arith.constant 5.000000e-01 : f32
    %233 = vector.broadcast %cst_82 : f32 to vector<2x32xf32>
    %234 = arith.mulf %233, %232 : vector<2x32xf32>
    %235 = math.tanh %234 : vector<2x32xf32>
    %cst_83 = arith.constant 1.000000e+00 : f32
    %236 = vector.broadcast %cst_83 : f32 to vector<2x32xf32>
    %237 = arith.addf %235, %236 : vector<2x32xf32>
    %cst_84 = arith.constant 5.000000e-01 : f32
    %238 = vector.broadcast %cst_84 : f32 to vector<2x32xf32>
    %239 = arith.mulf %238, %237 : vector<2x32xf32>
    %240 = vector.extract_strided_slice %223 {offsets = [0, 64], sizes = [2, 32], strides = [1, 1]} : vector<2x128xf32> to vector<2x32xf32>
    %241 = math.tanh %240 : vector<2x32xf32>
    %242 = vector.extract_strided_slice %223 {offsets = [0, 96], sizes = [2, 32], strides = [1, 1]} : vector<2x128xf32> to vector<2x32xf32>
    %cst_85 = arith.constant 5.000000e-01 : f32
    %243 = vector.broadcast %cst_85 : f32 to vector<2x32xf32>
    %244 = arith.mulf %243, %242 : vector<2x32xf32>
    %245 = math.tanh %244 : vector<2x32xf32>
    %cst_86 = arith.constant 1.000000e+00 : f32
    %246 = vector.broadcast %cst_86 : f32 to vector<2x32xf32>
    %247 = arith.addf %245, %246 : vector<2x32xf32>
    %cst_87 = arith.constant 5.000000e-01 : f32
    %248 = vector.broadcast %cst_87 : f32 to vector<2x32xf32>
    %249 = arith.mulf %248, %247 : vector<2x32xf32>
    %250 = arith.mulf %239, %184 : vector<2x32xf32>
    %251 = arith.mulf %231, %241 : vector<2x32xf32>
    %252 = arith.addf %250, %251 : vector<2x32xf32>
    %253 = math.tanh %252 : vector<2x32xf32>
    %254 = arith.mulf %249, %253 : vector<2x32xf32>
    %255 = vector.extract_strided_slice %12 {offsets = [8, 0], sizes = [2, 128], strides = [1, 1]} : vector<16x128xf32> to vector<2x128xf32>
    %cst_88 = arith.constant dense<0.000000e+00> : vector<2x128xf32>
    %256 = tpu.matmul %220, %5, %cst_88 {dimension_numbers = #tpu.dot_dimension_numbers<[1], [0], [0], [1], [0, 0, 1, 1], [], []>} : vector<2x32xf32>, vector<32x128xf32>, vector<2x128xf32> -> vector<2x128xf32>
    %257 = arith.addf %255, %256 : vector<2x128xf32>
    %258 = vector.extract_strided_slice %257 {offsets = [0, 0], sizes = [2, 32], strides = [1, 1]} : vector<2x128xf32> to vector<2x32xf32>
    %cst_89 = arith.constant 5.000000e-01 : f32
    %259 = vector.broadcast %cst_89 : f32 to vector<2x32xf32>
    %260 = arith.mulf %259, %258 : vector<2x32xf32>
    %261 = math.tanh %260 : vector<2x32xf32>
    %cst_90 = arith.constant 1.000000e+00 : f32
    %262 = vector.broadcast %cst_90 : f32 to vector<2x32xf32>
    %263 = arith.addf %261, %262 : vector<2x32xf32>
    %cst_91 = arith.constant 5.000000e-01 : f32
    %264 = vector.broadcast %cst_91 : f32 to vector<2x32xf32>
    %265 = arith.mulf %264, %263 : vector<2x32xf32>
    %266 = vector.extract_strided_slice %257 {offsets = [0, 32], sizes = [2, 32], strides = [1, 1]} : vector<2x128xf32> to vector<2x32xf32>
    %cst_92 = arith.constant 5.000000e-01 : f32
    %267 = vector.broadcast %cst_92 : f32 to vector<2x32xf32>
    %268 = arith.mulf %267, %266 : vector<2x32xf32>
    %269 = math.tanh %268 : vector<2x32xf32>
    %cst_93 = arith.constant 1.000000e+00 : f32
    %270 = vector.broadcast %cst_93 : f32 to vector<2x32xf32>
    %271 = arith.addf %269, %270 : vector<2x32xf32>
    %cst_94 = arith.constant 5.000000e-01 : f32
    %272 = vector.broadcast %cst_94 : f32 to vector<2x32xf32>
    %273 = arith.mulf %272, %271 : vector<2x32xf32>
    %274 = vector.extract_strided_slice %257 {offsets = [0, 64], sizes = [2, 32], strides = [1, 1]} : vector<2x128xf32> to vector<2x32xf32>
    %275 = math.tanh %274 : vector<2x32xf32>
    %276 = vector.extract_strided_slice %257 {offsets = [0, 96], sizes = [2, 32], strides = [1, 1]} : vector<2x128xf32> to vector<2x32xf32>
    %cst_95 = arith.constant 5.000000e-01 : f32
    %277 = vector.broadcast %cst_95 : f32 to vector<2x32xf32>
    %278 = arith.mulf %277, %276 : vector<2x32xf32>
    %279 = math.tanh %278 : vector<2x32xf32>
    %cst_96 = arith.constant 1.000000e+00 : f32
    %280 = vector.broadcast %cst_96 : f32 to vector<2x32xf32>
    %281 = arith.addf %279, %280 : vector<2x32xf32>
    %cst_97 = arith.constant 5.000000e-01 : f32
    %282 = vector.broadcast %cst_97 : f32 to vector<2x32xf32>
    %283 = arith.mulf %282, %281 : vector<2x32xf32>
    %284 = arith.mulf %273, %218 : vector<2x32xf32>
    %285 = arith.mulf %265, %275 : vector<2x32xf32>
    %286 = arith.addf %284, %285 : vector<2x32xf32>
    %287 = math.tanh %286 : vector<2x32xf32>
    %288 = arith.mulf %283, %287 : vector<2x32xf32>
    %289 = vector.extract_strided_slice %9 {offsets = [8, 0], sizes = [2, 128], strides = [1, 1]} : vector<16x128xf32> to vector<2x128xf32>
    %cst_98 = arith.constant dense<0.000000e+00> : vector<2x128xf32>
    %290 = tpu.matmul %254, %2, %cst_98 {dimension_numbers = #tpu.dot_dimension_numbers<[1], [0], [0], [1], [0, 0, 1, 1], [], []>} : vector<2x32xf32>, vector<32x128xf32>, vector<2x128xf32> -> vector<2x128xf32>
    %291 = arith.addf %289, %290 : vector<2x128xf32>
    %292 = vector.extract_strided_slice %291 {offsets = [0, 0], sizes = [2, 32], strides = [1, 1]} : vector<2x128xf32> to vector<2x32xf32>
    %cst_99 = arith.constant 5.000000e-01 : f32
    %293 = vector.broadcast %cst_99 : f32 to vector<2x32xf32>
    %294 = arith.mulf %293, %292 : vector<2x32xf32>
    %295 = math.tanh %294 : vector<2x32xf32>
    %cst_100 = arith.constant 1.000000e+00 : f32
    %296 = vector.broadcast %cst_100 : f32 to vector<2x32xf32>
    %297 = arith.addf %295, %296 : vector<2x32xf32>
    %cst_101 = arith.constant 5.000000e-01 : f32
    %298 = vector.broadcast %cst_101 : f32 to vector<2x32xf32>
    %299 = arith.mulf %298, %297 : vector<2x32xf32>
    %300 = vector.extract_strided_slice %291 {offsets = [0, 32], sizes = [2, 32], strides = [1, 1]} : vector<2x128xf32> to vector<2x32xf32>
    %cst_102 = arith.constant 5.000000e-01 : f32
    %301 = vector.broadcast %cst_102 : f32 to vector<2x32xf32>
    %302 = arith.mulf %301, %300 : vector<2x32xf32>
    %303 = math.tanh %302 : vector<2x32xf32>
    %cst_103 = arith.constant 1.000000e+00 : f32
    %304 = vector.broadcast %cst_103 : f32 to vector<2x32xf32>
    %305 = arith.addf %303, %304 : vector<2x32xf32>
    %cst_104 = arith.constant 5.000000e-01 : f32
    %306 = vector.broadcast %cst_104 : f32 to vector<2x32xf32>
    %307 = arith.mulf %306, %305 : vector<2x32xf32>
    %308 = vector.extract_strided_slice %291 {offsets = [0, 64], sizes = [2, 32], strides = [1, 1]} : vector<2x128xf32> to vector<2x32xf32>
    %309 = math.tanh %308 : vector<2x32xf32>
    %310 = vector.extract_strided_slice %291 {offsets = [0, 96], sizes = [2, 32], strides = [1, 1]} : vector<2x128xf32> to vector<2x32xf32>
    %cst_105 = arith.constant 5.000000e-01 : f32
    %311 = vector.broadcast %cst_105 : f32 to vector<2x32xf32>
    %312 = arith.mulf %311, %310 : vector<2x32xf32>
    %313 = math.tanh %312 : vector<2x32xf32>
    %cst_106 = arith.constant 1.000000e+00 : f32
    %314 = vector.broadcast %cst_106 : f32 to vector<2x32xf32>
    %315 = arith.addf %313, %314 : vector<2x32xf32>
    %cst_107 = arith.constant 5.000000e-01 : f32
    %316 = vector.broadcast %cst_107 : f32 to vector<2x32xf32>
    %317 = arith.mulf %316, %315 : vector<2x32xf32>
    %318 = arith.mulf %307, %252 : vector<2x32xf32>
    %319 = arith.mulf %299, %309 : vector<2x32xf32>
    %320 = arith.addf %318, %319 : vector<2x32xf32>
    %321 = math.tanh %320 : vector<2x32xf32>
    %322 = arith.mulf %317, %321 : vector<2x32xf32>
    %323 = vector.extract_strided_slice %12 {offsets = [6, 0], sizes = [2, 128], strides = [1, 1]} : vector<16x128xf32> to vector<2x128xf32>
    %cst_108 = arith.constant dense<0.000000e+00> : vector<2x128xf32>
    %324 = tpu.matmul %288, %5, %cst_108 {dimension_numbers = #tpu.dot_dimension_numbers<[1], [0], [0], [1], [0, 0, 1, 1], [], []>} : vector<2x32xf32>, vector<32x128xf32>, vector<2x128xf32> -> vector<2x128xf32>
    %325 = arith.addf %323, %324 : vector<2x128xf32>
    %326 = vector.extract_strided_slice %325 {offsets = [0, 0], sizes = [2, 32], strides = [1, 1]} : vector<2x128xf32> to vector<2x32xf32>
    %cst_109 = arith.constant 5.000000e-01 : f32
    %327 = vector.broadcast %cst_109 : f32 to vector<2x32xf32>
    %328 = arith.mulf %327, %326 : vector<2x32xf32>
    %329 = math.tanh %328 : vector<2x32xf32>
    %cst_110 = arith.constant 1.000000e+00 : f32
    %330 = vector.broadcast %cst_110 : f32 to vector<2x32xf32>
    %331 = arith.addf %329, %330 : vector<2x32xf32>
    %cst_111 = arith.constant 5.000000e-01 : f32
    %332 = vector.broadcast %cst_111 : f32 to vector<2x32xf32>
    %333 = arith.mulf %332, %331 : vector<2x32xf32>
    %334 = vector.extract_strided_slice %325 {offsets = [0, 32], sizes = [2, 32], strides = [1, 1]} : vector<2x128xf32> to vector<2x32xf32>
    %cst_112 = arith.constant 5.000000e-01 : f32
    %335 = vector.broadcast %cst_112 : f32 to vector<2x32xf32>
    %336 = arith.mulf %335, %334 : vector<2x32xf32>
    %337 = math.tanh %336 : vector<2x32xf32>
    %cst_113 = arith.constant 1.000000e+00 : f32
    %338 = vector.broadcast %cst_113 : f32 to vector<2x32xf32>
    %339 = arith.addf %337, %338 : vector<2x32xf32>
    %cst_114 = arith.constant 5.000000e-01 : f32
    %340 = vector.broadcast %cst_114 : f32 to vector<2x32xf32>
    %341 = arith.mulf %340, %339 : vector<2x32xf32>
    %342 = vector.extract_strided_slice %325 {offsets = [0, 64], sizes = [2, 32], strides = [1, 1]} : vector<2x128xf32> to vector<2x32xf32>
    %343 = math.tanh %342 : vector<2x32xf32>
    %344 = vector.extract_strided_slice %325 {offsets = [0, 96], sizes = [2, 32], strides = [1, 1]} : vector<2x128xf32> to vector<2x32xf32>
    %cst_115 = arith.constant 5.000000e-01 : f32
    %345 = vector.broadcast %cst_115 : f32 to vector<2x32xf32>
    %346 = arith.mulf %345, %344 : vector<2x32xf32>
    %347 = math.tanh %346 : vector<2x32xf32>
    %cst_116 = arith.constant 1.000000e+00 : f32
    %348 = vector.broadcast %cst_116 : f32 to vector<2x32xf32>
    %349 = arith.addf %347, %348 : vector<2x32xf32>
    %cst_117 = arith.constant 5.000000e-01 : f32
    %350 = vector.broadcast %cst_117 : f32 to vector<2x32xf32>
    %351 = arith.mulf %350, %349 : vector<2x32xf32>
    %352 = arith.mulf %341, %286 : vector<2x32xf32>
    %353 = arith.mulf %333, %343 : vector<2x32xf32>
    %354 = arith.addf %352, %353 : vector<2x32xf32>
    %355 = math.tanh %354 : vector<2x32xf32>
    %356 = arith.mulf %351, %355 : vector<2x32xf32>
    %357 = vector.extract_strided_slice %9 {offsets = [10, 0], sizes = [2, 128], strides = [1, 1]} : vector<16x128xf32> to vector<2x128xf32>
    %cst_118 = arith.constant dense<0.000000e+00> : vector<2x128xf32>
    %358 = tpu.matmul %322, %2, %cst_118 {dimension_numbers = #tpu.dot_dimension_numbers<[1], [0], [0], [1], [0, 0, 1, 1], [], []>} : vector<2x32xf32>, vector<32x128xf32>, vector<2x128xf32> -> vector<2x128xf32>
    %359 = arith.addf %357, %358 : vector<2x128xf32>
    %360 = vector.extract_strided_slice %359 {offsets = [0, 0], sizes = [2, 32], strides = [1, 1]} : vector<2x128xf32> to vector<2x32xf32>
    %cst_119 = arith.constant 5.000000e-01 : f32
    %361 = vector.broadcast %cst_119 : f32 to vector<2x32xf32>
    %362 = arith.mulf %361, %360 : vector<2x32xf32>
    %363 = math.tanh %362 : vector<2x32xf32>
    %cst_120 = arith.constant 1.000000e+00 : f32
    %364 = vector.broadcast %cst_120 : f32 to vector<2x32xf32>
    %365 = arith.addf %363, %364 : vector<2x32xf32>
    %cst_121 = arith.constant 5.000000e-01 : f32
    %366 = vector.broadcast %cst_121 : f32 to vector<2x32xf32>
    %367 = arith.mulf %366, %365 : vector<2x32xf32>
    %368 = vector.extract_strided_slice %359 {offsets = [0, 32], sizes = [2, 32], strides = [1, 1]} : vector<2x128xf32> to vector<2x32xf32>
    %cst_122 = arith.constant 5.000000e-01 : f32
    %369 = vector.broadcast %cst_122 : f32 to vector<2x32xf32>
    %370 = arith.mulf %369, %368 : vector<2x32xf32>
    %371 = math.tanh %370 : vector<2x32xf32>
    %cst_123 = arith.constant 1.000000e+00 : f32
    %372 = vector.broadcast %cst_123 : f32 to vector<2x32xf32>
    %373 = arith.addf %371, %372 : vector<2x32xf32>
    %cst_124 = arith.constant 5.000000e-01 : f32
    %374 = vector.broadcast %cst_124 : f32 to vector<2x32xf32>
    %375 = arith.mulf %374, %373 : vector<2x32xf32>
    %376 = vector.extract_strided_slice %359 {offsets = [0, 64], sizes = [2, 32], strides = [1, 1]} : vector<2x128xf32> to vector<2x32xf32>
    %377 = math.tanh %376 : vector<2x32xf32>
    %378 = vector.extract_strided_slice %359 {offsets = [0, 96], sizes = [2, 32], strides = [1, 1]} : vector<2x128xf32> to vector<2x32xf32>
    %cst_125 = arith.constant 5.000000e-01 : f32
    %379 = vector.broadcast %cst_125 : f32 to vector<2x32xf32>
    %380 = arith.mulf %379, %378 : vector<2x32xf32>
    %381 = math.tanh %380 : vector<2x32xf32>
    %cst_126 = arith.constant 1.000000e+00 : f32
    %382 = vector.broadcast %cst_126 : f32 to vector<2x32xf32>
    %383 = arith.addf %381, %382 : vector<2x32xf32>
    %cst_127 = arith.constant 5.000000e-01 : f32
    %384 = vector.broadcast %cst_127 : f32 to vector<2x32xf32>
    %385 = arith.mulf %384, %383 : vector<2x32xf32>
    %386 = arith.mulf %375, %320 : vector<2x32xf32>
    %387 = arith.mulf %367, %377 : vector<2x32xf32>
    %388 = arith.addf %386, %387 : vector<2x32xf32>
    %389 = math.tanh %388 : vector<2x32xf32>
    %390 = arith.mulf %385, %389 : vector<2x32xf32>
    %391 = vector.extract_strided_slice %12 {offsets = [4, 0], sizes = [2, 128], strides = [1, 1]} : vector<16x128xf32> to vector<2x128xf32>
    %cst_128 = arith.constant dense<0.000000e+00> : vector<2x128xf32>
    %392 = tpu.matmul %356, %5, %cst_128 {dimension_numbers = #tpu.dot_dimension_numbers<[1], [0], [0], [1], [0, 0, 1, 1], [], []>} : vector<2x32xf32>, vector<32x128xf32>, vector<2x128xf32> -> vector<2x128xf32>
    %393 = arith.addf %391, %392 : vector<2x128xf32>
    %394 = vector.extract_strided_slice %393 {offsets = [0, 0], sizes = [2, 32], strides = [1, 1]} : vector<2x128xf32> to vector<2x32xf32>
    %cst_129 = arith.constant 5.000000e-01 : f32
    %395 = vector.broadcast %cst_129 : f32 to vector<2x32xf32>
    %396 = arith.mulf %395, %394 : vector<2x32xf32>
    %397 = math.tanh %396 : vector<2x32xf32>
    %cst_130 = arith.constant 1.000000e+00 : f32
    %398 = vector.broadcast %cst_130 : f32 to vector<2x32xf32>
    %399 = arith.addf %397, %398 : vector<2x32xf32>
    %cst_131 = arith.constant 5.000000e-01 : f32
    %400 = vector.broadcast %cst_131 : f32 to vector<2x32xf32>
    %401 = arith.mulf %400, %399 : vector<2x32xf32>
    %402 = vector.extract_strided_slice %393 {offsets = [0, 32], sizes = [2, 32], strides = [1, 1]} : vector<2x128xf32> to vector<2x32xf32>
    %cst_132 = arith.constant 5.000000e-01 : f32
    %403 = vector.broadcast %cst_132 : f32 to vector<2x32xf32>
    %404 = arith.mulf %403, %402 : vector<2x32xf32>
    %405 = math.tanh %404 : vector<2x32xf32>
    %cst_133 = arith.constant 1.000000e+00 : f32
    %406 = vector.broadcast %cst_133 : f32 to vector<2x32xf32>
    %407 = arith.addf %405, %406 : vector<2x32xf32>
    %cst_134 = arith.constant 5.000000e-01 : f32
    %408 = vector.broadcast %cst_134 : f32 to vector<2x32xf32>
    %409 = arith.mulf %408, %407 : vector<2x32xf32>
    %410 = vector.extract_strided_slice %393 {offsets = [0, 64], sizes = [2, 32], strides = [1, 1]} : vector<2x128xf32> to vector<2x32xf32>
    %411 = math.tanh %410 : vector<2x32xf32>
    %412 = vector.extract_strided_slice %393 {offsets = [0, 96], sizes = [2, 32], strides = [1, 1]} : vector<2x128xf32> to vector<2x32xf32>
    %cst_135 = arith.constant 5.000000e-01 : f32
    %413 = vector.broadcast %cst_135 : f32 to vector<2x32xf32>
    %414 = arith.mulf %413, %412 : vector<2x32xf32>
    %415 = math.tanh %414 : vector<2x32xf32>
    %cst_136 = arith.constant 1.000000e+00 : f32
    %416 = vector.broadcast %cst_136 : f32 to vector<2x32xf32>
    %417 = arith.addf %415, %416 : vector<2x32xf32>
    %cst_137 = arith.constant 5.000000e-01 : f32
    %418 = vector.broadcast %cst_137 : f32 to vector<2x32xf32>
    %419 = arith.mulf %418, %417 : vector<2x32xf32>
    %420 = arith.mulf %409, %354 : vector<2x32xf32>
    %421 = arith.mulf %401, %411 : vector<2x32xf32>
    %422 = arith.addf %420, %421 : vector<2x32xf32>
    %423 = math.tanh %422 : vector<2x32xf32>
    %424 = arith.mulf %419, %423 : vector<2x32xf32>
    %425 = vector.extract_strided_slice %9 {offsets = [12, 0], sizes = [2, 128], strides = [1, 1]} : vector<16x128xf32> to vector<2x128xf32>
    %cst_138 = arith.constant dense<0.000000e+00> : vector<2x128xf32>
    %426 = tpu.matmul %390, %2, %cst_138 {dimension_numbers = #tpu.dot_dimension_numbers<[1], [0], [0], [1], [0, 0, 1, 1], [], []>} : vector<2x32xf32>, vector<32x128xf32>, vector<2x128xf32> -> vector<2x128xf32>
    %427 = arith.addf %425, %426 : vector<2x128xf32>
    %428 = vector.extract_strided_slice %427 {offsets = [0, 0], sizes = [2, 32], strides = [1, 1]} : vector<2x128xf32> to vector<2x32xf32>
    %cst_139 = arith.constant 5.000000e-01 : f32
    %429 = vector.broadcast %cst_139 : f32 to vector<2x32xf32>
    %430 = arith.mulf %429, %428 : vector<2x32xf32>
    %431 = math.tanh %430 : vector<2x32xf32>
    %cst_140 = arith.constant 1.000000e+00 : f32
    %432 = vector.broadcast %cst_140 : f32 to vector<2x32xf32>
    %433 = arith.addf %431, %432 : vector<2x32xf32>
    %cst_141 = arith.constant 5.000000e-01 : f32
    %434 = vector.broadcast %cst_141 : f32 to vector<2x32xf32>
    %435 = arith.mulf %434, %433 : vector<2x32xf32>
    %436 = vector.extract_strided_slice %427 {offsets = [0, 32], sizes = [2, 32], strides = [1, 1]} : vector<2x128xf32> to vector<2x32xf32>
    %cst_142 = arith.constant 5.000000e-01 : f32
    %437 = vector.broadcast %cst_142 : f32 to vector<2x32xf32>
    %438 = arith.mulf %437, %436 : vector<2x32xf32>
    %439 = math.tanh %438 : vector<2x32xf32>
    %cst_143 = arith.constant 1.000000e+00 : f32
    %440 = vector.broadcast %cst_143 : f32 to vector<2x32xf32>
    %441 = arith.addf %439, %440 : vector<2x32xf32>
    %cst_144 = arith.constant 5.000000e-01 : f32
    %442 = vector.broadcast %cst_144 : f32 to vector<2x32xf32>
    %443 = arith.mulf %442, %441 : vector<2x32xf32>
    %444 = vector.extract_strided_slice %427 {offsets = [0, 64], sizes = [2, 32], strides = [1, 1]} : vector<2x128xf32> to vector<2x32xf32>
    %445 = math.tanh %444 : vector<2x32xf32>
    %446 = vector.extract_strided_slice %427 {offsets = [0, 96], sizes = [2, 32], strides = [1, 1]} : vector<2x128xf32> to vector<2x32xf32>
    %cst_145 = arith.constant 5.000000e-01 : f32
    %447 = vector.broadcast %cst_145 : f32 to vector<2x32xf32>
    %448 = arith.mulf %447, %446 : vector<2x32xf32>
    %449 = math.tanh %448 : vector<2x32xf32>
    %cst_146 = arith.constant 1.000000e+00 : f32
    %450 = vector.broadcast %cst_146 : f32 to vector<2x32xf32>
    %451 = arith.addf %449, %450 : vector<2x32xf32>
    %cst_147 = arith.constant 5.000000e-01 : f32
    %452 = vector.broadcast %cst_147 : f32 to vector<2x32xf32>
    %453 = arith.mulf %452, %451 : vector<2x32xf32>
    %454 = arith.mulf %443, %388 : vector<2x32xf32>
    %455 = arith.mulf %435, %445 : vector<2x32xf32>
    %456 = arith.addf %454, %455 : vector<2x32xf32>
    %457 = math.tanh %456 : vector<2x32xf32>
    %458 = arith.mulf %453, %457 : vector<2x32xf32>
    %459 = vector.extract_strided_slice %12 {offsets = [2, 0], sizes = [2, 128], strides = [1, 1]} : vector<16x128xf32> to vector<2x128xf32>
    %cst_148 = arith.constant dense<0.000000e+00> : vector<2x128xf32>
    %460 = tpu.matmul %424, %5, %cst_148 {dimension_numbers = #tpu.dot_dimension_numbers<[1], [0], [0], [1], [0, 0, 1, 1], [], []>} : vector<2x32xf32>, vector<32x128xf32>, vector<2x128xf32> -> vector<2x128xf32>
    %461 = arith.addf %459, %460 : vector<2x128xf32>
    %462 = vector.extract_strided_slice %461 {offsets = [0, 0], sizes = [2, 32], strides = [1, 1]} : vector<2x128xf32> to vector<2x32xf32>
    %cst_149 = arith.constant 5.000000e-01 : f32
    %463 = vector.broadcast %cst_149 : f32 to vector<2x32xf32>
    %464 = arith.mulf %463, %462 : vector<2x32xf32>
    %465 = math.tanh %464 : vector<2x32xf32>
    %cst_150 = arith.constant 1.000000e+00 : f32
    %466 = vector.broadcast %cst_150 : f32 to vector<2x32xf32>
    %467 = arith.addf %465, %466 : vector<2x32xf32>
    %cst_151 = arith.constant 5.000000e-01 : f32
    %468 = vector.broadcast %cst_151 : f32 to vector<2x32xf32>
    %469 = arith.mulf %468, %467 : vector<2x32xf32>
    %470 = vector.extract_strided_slice %461 {offsets = [0, 32], sizes = [2, 32], strides = [1, 1]} : vector<2x128xf32> to vector<2x32xf32>
    %cst_152 = arith.constant 5.000000e-01 : f32
    %471 = vector.broadcast %cst_152 : f32 to vector<2x32xf32>
    %472 = arith.mulf %471, %470 : vector<2x32xf32>
    %473 = math.tanh %472 : vector<2x32xf32>
    %cst_153 = arith.constant 1.000000e+00 : f32
    %474 = vector.broadcast %cst_153 : f32 to vector<2x32xf32>
    %475 = arith.addf %473, %474 : vector<2x32xf32>
    %cst_154 = arith.constant 5.000000e-01 : f32
    %476 = vector.broadcast %cst_154 : f32 to vector<2x32xf32>
    %477 = arith.mulf %476, %475 : vector<2x32xf32>
    %478 = vector.extract_strided_slice %461 {offsets = [0, 64], sizes = [2, 32], strides = [1, 1]} : vector<2x128xf32> to vector<2x32xf32>
    %479 = math.tanh %478 : vector<2x32xf32>
    %480 = vector.extract_strided_slice %461 {offsets = [0, 96], sizes = [2, 32], strides = [1, 1]} : vector<2x128xf32> to vector<2x32xf32>
    %cst_155 = arith.constant 5.000000e-01 : f32
    %481 = vector.broadcast %cst_155 : f32 to vector<2x32xf32>
    %482 = arith.mulf %481, %480 : vector<2x32xf32>
    %483 = math.tanh %482 : vector<2x32xf32>
    %cst_156 = arith.constant 1.000000e+00 : f32
    %484 = vector.broadcast %cst_156 : f32 to vector<2x32xf32>
    %485 = arith.addf %483, %484 : vector<2x32xf32>
    %cst_157 = arith.constant 5.000000e-01 : f32
    %486 = vector.broadcast %cst_157 : f32 to vector<2x32xf32>
    %487 = arith.mulf %486, %485 : vector<2x32xf32>
    %488 = arith.mulf %477, %422 : vector<2x32xf32>
    %489 = arith.mulf %469, %479 : vector<2x32xf32>
    %490 = arith.addf %488, %489 : vector<2x32xf32>
    %491 = math.tanh %490 : vector<2x32xf32>
    %492 = arith.mulf %487, %491 : vector<2x32xf32>
    %493 = vector.extract_strided_slice %9 {offsets = [14, 0], sizes = [2, 128], strides = [1, 1]} : vector<16x128xf32> to vector<2x128xf32>
    %cst_158 = arith.constant dense<0.000000e+00> : vector<2x128xf32>
    %494 = tpu.matmul %458, %2, %cst_158 {dimension_numbers = #tpu.dot_dimension_numbers<[1], [0], [0], [1], [0, 0, 1, 1], [], []>} : vector<2x32xf32>, vector<32x128xf32>, vector<2x128xf32> -> vector<2x128xf32>
    %495 = arith.addf %493, %494 : vector<2x128xf32>
    %496 = vector.extract_strided_slice %495 {offsets = [0, 0], sizes = [2, 32], strides = [1, 1]} : vector<2x128xf32> to vector<2x32xf32>
    %cst_159 = arith.constant 5.000000e-01 : f32
    %497 = vector.broadcast %cst_159 : f32 to vector<2x32xf32>
    %498 = arith.mulf %497, %496 : vector<2x32xf32>
    %499 = math.tanh %498 : vector<2x32xf32>
    %cst_160 = arith.constant 1.000000e+00 : f32
    %500 = vector.broadcast %cst_160 : f32 to vector<2x32xf32>
    %501 = arith.addf %499, %500 : vector<2x32xf32>
    %cst_161 = arith.constant 5.000000e-01 : f32
    %502 = vector.broadcast %cst_161 : f32 to vector<2x32xf32>
    %503 = arith.mulf %502, %501 : vector<2x32xf32>
    %504 = vector.extract_strided_slice %495 {offsets = [0, 32], sizes = [2, 32], strides = [1, 1]} : vector<2x128xf32> to vector<2x32xf32>
    %cst_162 = arith.constant 5.000000e-01 : f32
    %505 = vector.broadcast %cst_162 : f32 to vector<2x32xf32>
    %506 = arith.mulf %505, %504 : vector<2x32xf32>
    %507 = math.tanh %506 : vector<2x32xf32>
    %cst_163 = arith.constant 1.000000e+00 : f32
    %508 = vector.broadcast %cst_163 : f32 to vector<2x32xf32>
    %509 = arith.addf %507, %508 : vector<2x32xf32>
    %cst_164 = arith.constant 5.000000e-01 : f32
    %510 = vector.broadcast %cst_164 : f32 to vector<2x32xf32>
    %511 = arith.mulf %510, %509 : vector<2x32xf32>
    %512 = vector.extract_strided_slice %495 {offsets = [0, 64], sizes = [2, 32], strides = [1, 1]} : vector<2x128xf32> to vector<2x32xf32>
    %513 = math.tanh %512 : vector<2x32xf32>
    %514 = vector.extract_strided_slice %495 {offsets = [0, 96], sizes = [2, 32], strides = [1, 1]} : vector<2x128xf32> to vector<2x32xf32>
    %cst_165 = arith.constant 5.000000e-01 : f32
    %515 = vector.broadcast %cst_165 : f32 to vector<2x32xf32>
    %516 = arith.mulf %515, %514 : vector<2x32xf32>
    %517 = math.tanh %516 : vector<2x32xf32>
    %cst_166 = arith.constant 1.000000e+00 : f32
    %518 = vector.broadcast %cst_166 : f32 to vector<2x32xf32>
    %519 = arith.addf %517, %518 : vector<2x32xf32>
    %cst_167 = arith.constant 5.000000e-01 : f32
    %520 = vector.broadcast %cst_167 : f32 to vector<2x32xf32>
    %521 = arith.mulf %520, %519 : vector<2x32xf32>
    %522 = arith.mulf %511, %456 : vector<2x32xf32>
    %523 = arith.mulf %503, %513 : vector<2x32xf32>
    %524 = arith.addf %522, %523 : vector<2x32xf32>
    %525 = math.tanh %524 : vector<2x32xf32>
    %526 = arith.mulf %521, %525 : vector<2x32xf32>
    %527 = vector.extract_strided_slice %12 {offsets = [0, 0], sizes = [2, 128], strides = [1, 1]} : vector<16x128xf32> to vector<2x128xf32>
    %cst_168 = arith.constant dense<0.000000e+00> : vector<2x128xf32>
    %528 = tpu.matmul %492, %5, %cst_168 {dimension_numbers = #tpu.dot_dimension_numbers<[1], [0], [0], [1], [0, 0, 1, 1], [], []>} : vector<2x32xf32>, vector<32x128xf32>, vector<2x128xf32> -> vector<2x128xf32>
    %529 = arith.addf %527, %528 : vector<2x128xf32>
    %530 = vector.extract_strided_slice %529 {offsets = [0, 0], sizes = [2, 32], strides = [1, 1]} : vector<2x128xf32> to vector<2x32xf32>
    %cst_169 = arith.constant 5.000000e-01 : f32
    %531 = vector.broadcast %cst_169 : f32 to vector<2x32xf32>
    %532 = arith.mulf %531, %530 : vector<2x32xf32>
    %533 = math.tanh %532 : vector<2x32xf32>
    %cst_170 = arith.constant 1.000000e+00 : f32
    %534 = vector.broadcast %cst_170 : f32 to vector<2x32xf32>
    %535 = arith.addf %533, %534 : vector<2x32xf32>
    %cst_171 = arith.constant 5.000000e-01 : f32
    %536 = vector.broadcast %cst_171 : f32 to vector<2x32xf32>
    %537 = arith.mulf %536, %535 : vector<2x32xf32>
    %538 = vector.extract_strided_slice %529 {offsets = [0, 32], sizes = [2, 32], strides = [1, 1]} : vector<2x128xf32> to vector<2x32xf32>
    %cst_172 = arith.constant 5.000000e-01 : f32
    %539 = vector.broadcast %cst_172 : f32 to vector<2x32xf32>
    %540 = arith.mulf %539, %538 : vector<2x32xf32>
    %541 = math.tanh %540 : vector<2x32xf32>
    %cst_173 = arith.constant 1.000000e+00 : f32
    %542 = vector.broadcast %cst_173 : f32 to vector<2x32xf32>
    %543 = arith.addf %541, %542 : vector<2x32xf32>
    %cst_174 = arith.constant 5.000000e-01 : f32
    %544 = vector.broadcast %cst_174 : f32 to vector<2x32xf32>
    %545 = arith.mulf %544, %543 : vector<2x32xf32>
    %546 = vector.extract_strided_slice %529 {offsets = [0, 64], sizes = [2, 32], strides = [1, 1]} : vector<2x128xf32> to vector<2x32xf32>
    %547 = math.tanh %546 : vector<2x32xf32>
    %548 = vector.extract_strided_slice %529 {offsets = [0, 96], sizes = [2, 32], strides = [1, 1]} : vector<2x128xf32> to vector<2x32xf32>
    %cst_175 = arith.constant 5.000000e-01 : f32
    %549 = vector.broadcast %cst_175 : f32 to vector<2x32xf32>
    %550 = arith.mulf %549, %548 : vector<2x32xf32>
    %551 = math.tanh %550 : vector<2x32xf32>
    %cst_176 = arith.constant 1.000000e+00 : f32
    %552 = vector.broadcast %cst_176 : f32 to vector<2x32xf32>
    %553 = arith.addf %551, %552 : vector<2x32xf32>
    %cst_177 = arith.constant 5.000000e-01 : f32
    %554 = vector.broadcast %cst_177 : f32 to vector<2x32xf32>
    %555 = arith.mulf %554, %553 : vector<2x32xf32>
    %556 = arith.mulf %545, %490 : vector<2x32xf32>
    %557 = arith.mulf %537, %547 : vector<2x32xf32>
    %558 = arith.addf %556, %557 : vector<2x32xf32>
    %559 = math.tanh %558 : vector<2x32xf32>
    %560 = arith.mulf %555, %559 : vector<2x32xf32>
    %561 = tpu.concatenate %50, %118, %186, %254, %322, %390, %458, %526 in 0 : vector<2x32xf32>, vector<2x32xf32>, vector<2x32xf32>, vector<2x32xf32>, vector<2x32xf32>, vector<2x32xf32>, vector<2x32xf32>, vector<2x32xf32> -> vector<16x32xf32>
    %562 = tpu.concatenate %560, %492, %424, %356, %288, %220, %152, %84 in 0 : vector<2x32xf32>, vector<2x32xf32>, vector<2x32xf32>, vector<2x32xf32>, vector<2x32xf32>, vector<2x32xf32>, vector<2x32xf32>, vector<2x32xf32> -> vector<16x32xf32>
    %563 = tpu.concatenate %561, %562 in 1 : vector<16x32xf32>, vector<16x32xf32> -> vector<16x64xf32>
    %c0_178 = arith.constant 0 : index
    %c0_179 = arith.constant 0 : index
    %564 = vector.load %arg7[%c0_178, %c0_179] : memref<64x128xf32, #tpu.memory_space<vmem>>, vector<64x128xf32>
    %c0_180 = arith.constant 0 : index
    %c0_181 = arith.constant 0 : index
    %565 = vector.load %arg8[%c0_180, %c0_181] : memref<32x128xf32, #tpu.memory_space<vmem>>, vector<32x128xf32>
    %c0_182 = arith.constant 0 : index
    %c0_183 = arith.constant 0 : index
    %566 = vector.load %arg9[%c0_182, %c0_183] : memref<1x128xf32, #tpu.memory_space<vmem>>, vector<1x128xf32>
    %c0_184 = arith.constant 0 : index
    %c0_185 = arith.constant 0 : index
    %567 = vector.load %arg10[%c0_184, %c0_185] : memref<64x128xf32, #tpu.memory_space<vmem>>, vector<64x128xf32>
    %c0_186 = arith.constant 0 : index
    %c0_187 = arith.constant 0 : index
    %568 = vector.load %arg11[%c0_186, %c0_187] : memref<32x128xf32, #tpu.memory_space<vmem>>, vector<32x128xf32>
    %c0_188 = arith.constant 0 : index
    %c0_189 = arith.constant 0 : index
    %569 = vector.load %arg12[%c0_188, %c0_189] : memref<1x128xf32, #tpu.memory_space<vmem>>, vector<1x128xf32>
    %cst_190 = arith.constant dense<0.000000e+00> : vector<16x128xf32>
    %570 = tpu.matmul %563, %564, %cst_190 {dimension_numbers = #tpu.dot_dimension_numbers<[1], [0], [0], [1], [0, 0, 1, 1], [], []>} : vector<16x64xf32>, vector<64x128xf32>, vector<16x128xf32> -> vector<16x128xf32>
    %571 = vector.broadcast %566 : vector<1x128xf32> to vector<16x128xf32>
    %572 = arith.addf %570, %571 : vector<16x128xf32>
    %cst_191 = arith.constant dense<0.000000e+00> : vector<16x128xf32>
    %573 = tpu.matmul %563, %567, %cst_191 {dimension_numbers = #tpu.dot_dimension_numbers<[1], [0], [0], [1], [0, 0, 1, 1], [], []>} : vector<16x64xf32>, vector<64x128xf32>, vector<16x128xf32> -> vector<16x128xf32>
    %574 = vector.broadcast %569 : vector<1x128xf32> to vector<16x128xf32>
    %575 = arith.addf %573, %574 : vector<16x128xf32>
    %cst_192 = arith.constant 0.000000e+00 : f32
    %576 = vector.broadcast %cst_192 : f32 to vector<2x32xf32>
    %cst_193 = arith.constant 0.000000e+00 : f32
    %577 = vector.broadcast %cst_193 : f32 to vector<2x32xf32>
    %cst_194 = arith.constant 0.000000e+00 : f32
    %578 = vector.broadcast %cst_194 : f32 to vector<2x32xf32>
    %cst_195 = arith.constant 0.000000e+00 : f32
    %579 = vector.broadcast %cst_195 : f32 to vector<2x32xf32>
    %580 = vector.extract_strided_slice %572 {offsets = [0, 0], sizes = [2, 128], strides = [1, 1]} : vector<16x128xf32> to vector<2x128xf32>
    %cst_196 = arith.constant dense<0.000000e+00> : vector<2x128xf32>
    %581 = tpu.matmul %576, %565, %cst_196 {dimension_numbers = #tpu.dot_dimension_numbers<[1], [0], [0], [1], [0, 0, 1, 1], [], []>} : vector<2x32xf32>, vector<32x128xf32>, vector<2x128xf32> -> vector<2x128xf32>
    %582 = arith.addf %580, %581 : vector<2x128xf32>
    %583 = vector.extract_strided_slice %582 {offsets = [0, 0], sizes = [2, 32], strides = [1, 1]} : vector<2x128xf32> to vector<2x32xf32>
    %cst_197 = arith.constant 5.000000e-01 : f32
    %584 = vector.broadcast %cst_197 : f32 to vector<2x32xf32>
    %585 = arith.mulf %584, %583 : vector<2x32xf32>
    %586 = math.tanh %585 : vector<2x32xf32>
    %cst_198 = arith.constant 1.000000e+00 : f32
    %587 = vector.broadcast %cst_198 : f32 to vector<2x32xf32>
    %588 = arith.addf %586, %587 : vector<2x32xf32>
    %cst_199 = arith.constant 5.000000e-01 : f32
    %589 = vector.broadcast %cst_199 : f32 to vector<2x32xf32>
    %590 = arith.mulf %589, %588 : vector<2x32xf32>
    %591 = vector.extract_strided_slice %582 {offsets = [0, 32], sizes = [2, 32], strides = [1, 1]} : vector<2x128xf32> to vector<2x32xf32>
    %cst_200 = arith.constant 5.000000e-01 : f32
    %592 = vector.broadcast %cst_200 : f32 to vector<2x32xf32>
    %593 = arith.mulf %592, %591 : vector<2x32xf32>
    %594 = math.tanh %593 : vector<2x32xf32>
    %cst_201 = arith.constant 1.000000e+00 : f32
    %595 = vector.broadcast %cst_201 : f32 to vector<2x32xf32>
    %596 = arith.addf %594, %595 : vector<2x32xf32>
    %cst_202 = arith.constant 5.000000e-01 : f32
    %597 = vector.broadcast %cst_202 : f32 to vector<2x32xf32>
    %598 = arith.mulf %597, %596 : vector<2x32xf32>
    %599 = vector.extract_strided_slice %582 {offsets = [0, 64], sizes = [2, 32], strides = [1, 1]} : vector<2x128xf32> to vector<2x32xf32>
    %600 = math.tanh %599 : vector<2x32xf32>
    %601 = vector.extract_strided_slice %582 {offsets = [0, 96], sizes = [2, 32], strides = [1, 1]} : vector<2x128xf32> to vector<2x32xf32>
    %cst_203 = arith.constant 5.000000e-01 : f32
    %602 = vector.broadcast %cst_203 : f32 to vector<2x32xf32>
    %603 = arith.mulf %602, %601 : vector<2x32xf32>
    %604 = math.tanh %603 : vector<2x32xf32>
    %cst_204 = arith.constant 1.000000e+00 : f32
    %605 = vector.broadcast %cst_204 : f32 to vector<2x32xf32>
    %606 = arith.addf %604, %605 : vector<2x32xf32>
    %cst_205 = arith.constant 5.000000e-01 : f32
    %607 = vector.broadcast %cst_205 : f32 to vector<2x32xf32>
    %608 = arith.mulf %607, %606 : vector<2x32xf32>
    %609 = arith.mulf %598, %577 : vector<2x32xf32>
    %610 = arith.mulf %590, %600 : vector<2x32xf32>
    %611 = arith.addf %609, %610 : vector<2x32xf32>
    %612 = math.tanh %611 : vector<2x32xf32>
    %613 = arith.mulf %608, %612 : vector<2x32xf32>
    %614 = vector.extract_strided_slice %575 {offsets = [14, 0], sizes = [2, 128], strides = [1, 1]} : vector<16x128xf32> to vector<2x128xf32>
    %cst_206 = arith.constant dense<0.000000e+00> : vector<2x128xf32>
    %615 = tpu.matmul %578, %568, %cst_206 {dimension_numbers = #tpu.dot_dimension_numbers<[1], [0], [0], [1], [0, 0, 1, 1], [], []>} : vector<2x32xf32>, vector<32x128xf32>, vector<2x128xf32> -> vector<2x128xf32>
    %616 = arith.addf %614, %615 : vector<2x128xf32>
    %617 = vector.extract_strided_slice %616 {offsets = [0, 0], sizes = [2, 32], strides = [1, 1]} : vector<2x128xf32> to vector<2x32xf32>
    %cst_207 = arith.constant 5.000000e-01 : f32
    %618 = vector.broadcast %cst_207 : f32 to vector<2x32xf32>
    %619 = arith.mulf %618, %617 : vector<2x32xf32>
    %620 = math.tanh %619 : vector<2x32xf32>
    %cst_208 = arith.constant 1.000000e+00 : f32
    %621 = vector.broadcast %cst_208 : f32 to vector<2x32xf32>
    %622 = arith.addf %620, %621 : vector<2x32xf32>
    %cst_209 = arith.constant 5.000000e-01 : f32
    %623 = vector.broadcast %cst_209 : f32 to vector<2x32xf32>
    %624 = arith.mulf %623, %622 : vector<2x32xf32>
    %625 = vector.extract_strided_slice %616 {offsets = [0, 32], sizes = [2, 32], strides = [1, 1]} : vector<2x128xf32> to vector<2x32xf32>
    %cst_210 = arith.constant 5.000000e-01 : f32
    %626 = vector.broadcast %cst_210 : f32 to vector<2x32xf32>
    %627 = arith.mulf %626, %625 : vector<2x32xf32>
    %628 = math.tanh %627 : vector<2x32xf32>
    %cst_211 = arith.constant 1.000000e+00 : f32
    %629 = vector.broadcast %cst_211 : f32 to vector<2x32xf32>
    %630 = arith.addf %628, %629 : vector<2x32xf32>
    %cst_212 = arith.constant 5.000000e-01 : f32
    %631 = vector.broadcast %cst_212 : f32 to vector<2x32xf32>
    %632 = arith.mulf %631, %630 : vector<2x32xf32>
    %633 = vector.extract_strided_slice %616 {offsets = [0, 64], sizes = [2, 32], strides = [1, 1]} : vector<2x128xf32> to vector<2x32xf32>
    %634 = math.tanh %633 : vector<2x32xf32>
    %635 = vector.extract_strided_slice %616 {offsets = [0, 96], sizes = [2, 32], strides = [1, 1]} : vector<2x128xf32> to vector<2x32xf32>
    %cst_213 = arith.constant 5.000000e-01 : f32
    %636 = vector.broadcast %cst_213 : f32 to vector<2x32xf32>
    %637 = arith.mulf %636, %635 : vector<2x32xf32>
    %638 = math.tanh %637 : vector<2x32xf32>
    %cst_214 = arith.constant 1.000000e+00 : f32
    %639 = vector.broadcast %cst_214 : f32 to vector<2x32xf32>
    %640 = arith.addf %638, %639 : vector<2x32xf32>
    %cst_215 = arith.constant 5.000000e-01 : f32
    %641 = vector.broadcast %cst_215 : f32 to vector<2x32xf32>
    %642 = arith.mulf %641, %640 : vector<2x32xf32>
    %643 = arith.mulf %632, %579 : vector<2x32xf32>
    %644 = arith.mulf %624, %634 : vector<2x32xf32>
    %645 = arith.addf %643, %644 : vector<2x32xf32>
    %646 = math.tanh %645 : vector<2x32xf32>
    %647 = arith.mulf %642, %646 : vector<2x32xf32>
    %648 = vector.extract_strided_slice %572 {offsets = [2, 0], sizes = [2, 128], strides = [1, 1]} : vector<16x128xf32> to vector<2x128xf32>
    %cst_216 = arith.constant dense<0.000000e+00> : vector<2x128xf32>
    %649 = tpu.matmul %613, %565, %cst_216 {dimension_numbers = #tpu.dot_dimension_numbers<[1], [0], [0], [1], [0, 0, 1, 1], [], []>} : vector<2x32xf32>, vector<32x128xf32>, vector<2x128xf32> -> vector<2x128xf32>
    %650 = arith.addf %648, %649 : vector<2x128xf32>
    %651 = vector.extract_strided_slice %650 {offsets = [0, 0], sizes = [2, 32], strides = [1, 1]} : vector<2x128xf32> to vector<2x32xf32>
    %cst_217 = arith.constant 5.000000e-01 : f32
    %652 = vector.broadcast %cst_217 : f32 to vector<2x32xf32>
    %653 = arith.mulf %652, %651 : vector<2x32xf32>
    %654 = math.tanh %653 : vector<2x32xf32>
    %cst_218 = arith.constant 1.000000e+00 : f32
    %655 = vector.broadcast %cst_218 : f32 to vector<2x32xf32>
    %656 = arith.addf %654, %655 : vector<2x32xf32>
    %cst_219 = arith.constant 5.000000e-01 : f32
    %657 = vector.broadcast %cst_219 : f32 to vector<2x32xf32>
    %658 = arith.mulf %657, %656 : vector<2x32xf32>
    %659 = vector.extract_strided_slice %650 {offsets = [0, 32], sizes = [2, 32], strides = [1, 1]} : vector<2x128xf32> to vector<2x32xf32>
    %cst_220 = arith.constant 5.000000e-01 : f32
    %660 = vector.broadcast %cst_220 : f32 to vector<2x32xf32>
    %661 = arith.mulf %660, %659 : vector<2x32xf32>
    %662 = math.tanh %661 : vector<2x32xf32>
    %cst_221 = arith.constant 1.000000e+00 : f32
    %663 = vector.broadcast %cst_221 : f32 to vector<2x32xf32>
    %664 = arith.addf %662, %663 : vector<2x32xf32>
    %cst_222 = arith.constant 5.000000e-01 : f32
    %665 = vector.broadcast %cst_222 : f32 to vector<2x32xf32>
    %666 = arith.mulf %665, %664 : vector<2x32xf32>
    %667 = vector.extract_strided_slice %650 {offsets = [0, 64], sizes = [2, 32], strides = [1, 1]} : vector<2x128xf32> to vector<2x32xf32>
    %668 = math.tanh %667 : vector<2x32xf32>
    %669 = vector.extract_strided_slice %650 {offsets = [0, 96], sizes = [2, 32], strides = [1, 1]} : vector<2x128xf32> to vector<2x32xf32>
    %cst_223 = arith.constant 5.000000e-01 : f32
    %670 = vector.broadcast %cst_223 : f32 to vector<2x32xf32>
    %671 = arith.mulf %670, %669 : vector<2x32xf32>
    %672 = math.tanh %671 : vector<2x32xf32>
    %cst_224 = arith.constant 1.000000e+00 : f32
    %673 = vector.broadcast %cst_224 : f32 to vector<2x32xf32>
    %674 = arith.addf %672, %673 : vector<2x32xf32>
    %cst_225 = arith.constant 5.000000e-01 : f32
    %675 = vector.broadcast %cst_225 : f32 to vector<2x32xf32>
    %676 = arith.mulf %675, %674 : vector<2x32xf32>
    %677 = arith.mulf %666, %611 : vector<2x32xf32>
    %678 = arith.mulf %658, %668 : vector<2x32xf32>
    %679 = arith.addf %677, %678 : vector<2x32xf32>
    %680 = math.tanh %679 : vector<2x32xf32>
    %681 = arith.mulf %676, %680 : vector<2x32xf32>
    %682 = vector.extract_strided_slice %575 {offsets = [12, 0], sizes = [2, 128], strides = [1, 1]} : vector<16x128xf32> to vector<2x128xf32>
    %cst_226 = arith.constant dense<0.000000e+00> : vector<2x128xf32>
    %683 = tpu.matmul %647, %568, %cst_226 {dimension_numbers = #tpu.dot_dimension_numbers<[1], [0], [0], [1], [0, 0, 1, 1], [], []>} : vector<2x32xf32>, vector<32x128xf32>, vector<2x128xf32> -> vector<2x128xf32>
    %684 = arith.addf %682, %683 : vector<2x128xf32>
    %685 = vector.extract_strided_slice %684 {offsets = [0, 0], sizes = [2, 32], strides = [1, 1]} : vector<2x128xf32> to vector<2x32xf32>
    %cst_227 = arith.constant 5.000000e-01 : f32
    %686 = vector.broadcast %cst_227 : f32 to vector<2x32xf32>
    %687 = arith.mulf %686, %685 : vector<2x32xf32>
    %688 = math.tanh %687 : vector<2x32xf32>
    %cst_228 = arith.constant 1.000000e+00 : f32
    %689 = vector.broadcast %cst_228 : f32 to vector<2x32xf32>
    %690 = arith.addf %688, %689 : vector<2x32xf32>
    %cst_229 = arith.constant 5.000000e-01 : f32
    %691 = vector.broadcast %cst_229 : f32 to vector<2x32xf32>
    %692 = arith.mulf %691, %690 : vector<2x32xf32>
    %693 = vector.extract_strided_slice %684 {offsets = [0, 32], sizes = [2, 32], strides = [1, 1]} : vector<2x128xf32> to vector<2x32xf32>
    %cst_230 = arith.constant 5.000000e-01 : f32
    %694 = vector.broadcast %cst_230 : f32 to vector<2x32xf32>
    %695 = arith.mulf %694, %693 : vector<2x32xf32>
    %696 = math.tanh %695 : vector<2x32xf32>
    %cst_231 = arith.constant 1.000000e+00 : f32
    %697 = vector.broadcast %cst_231 : f32 to vector<2x32xf32>
    %698 = arith.addf %696, %697 : vector<2x32xf32>
    %cst_232 = arith.constant 5.000000e-01 : f32
    %699 = vector.broadcast %cst_232 : f32 to vector<2x32xf32>
    %700 = arith.mulf %699, %698 : vector<2x32xf32>
    %701 = vector.extract_strided_slice %684 {offsets = [0, 64], sizes = [2, 32], strides = [1, 1]} : vector<2x128xf32> to vector<2x32xf32>
    %702 = math.tanh %701 : vector<2x32xf32>
    %703 = vector.extract_strided_slice %684 {offsets = [0, 96], sizes = [2, 32], strides = [1, 1]} : vector<2x128xf32> to vector<2x32xf32>
    %cst_233 = arith.constant 5.000000e-01 : f32
    %704 = vector.broadcast %cst_233 : f32 to vector<2x32xf32>
    %705 = arith.mulf %704, %703 : vector<2x32xf32>
    %706 = math.tanh %705 : vector<2x32xf32>
    %cst_234 = arith.constant 1.000000e+00 : f32
    %707 = vector.broadcast %cst_234 : f32 to vector<2x32xf32>
    %708 = arith.addf %706, %707 : vector<2x32xf32>
    %cst_235 = arith.constant 5.000000e-01 : f32
    %709 = vector.broadcast %cst_235 : f32 to vector<2x32xf32>
    %710 = arith.mulf %709, %708 : vector<2x32xf32>
    %711 = arith.mulf %700, %645 : vector<2x32xf32>
    %712 = arith.mulf %692, %702 : vector<2x32xf32>
    %713 = arith.addf %711, %712 : vector<2x32xf32>
    %714 = math.tanh %713 : vector<2x32xf32>
    %715 = arith.mulf %710, %714 : vector<2x32xf32>
    %716 = vector.extract_strided_slice %572 {offsets = [4, 0], sizes = [2, 128], strides = [1, 1]} : vector<16x128xf32> to vector<2x128xf32>
    %cst_236 = arith.constant dense<0.000000e+00> : vector<2x128xf32>
    %717 = tpu.matmul %681, %565, %cst_236 {dimension_numbers = #tpu.dot_dimension_numbers<[1], [0], [0], [1], [0, 0, 1, 1], [], []>} : vector<2x32xf32>, vector<32x128xf32>, vector<2x128xf32> -> vector<2x128xf32>
    %718 = arith.addf %716, %717 : vector<2x128xf32>
    %719 = vector.extract_strided_slice %718 {offsets = [0, 0], sizes = [2, 32], strides = [1, 1]} : vector<2x128xf32> to vector<2x32xf32>
    %cst_237 = arith.constant 5.000000e-01 : f32
    %720 = vector.broadcast %cst_237 : f32 to vector<2x32xf32>
    %721 = arith.mulf %720, %719 : vector<2x32xf32>
    %722 = math.tanh %721 : vector<2x32xf32>
    %cst_238 = arith.constant 1.000000e+00 : f32
    %723 = vector.broadcast %cst_238 : f32 to vector<2x32xf32>
    %724 = arith.addf %722, %723 : vector<2x32xf32>
    %cst_239 = arith.constant 5.000000e-01 : f32
    %725 = vector.broadcast %cst_239 : f32 to vector<2x32xf32>
    %726 = arith.mulf %725, %724 : vector<2x32xf32>
    %727 = vector.extract_strided_slice %718 {offsets = [0, 32], sizes = [2, 32], strides = [1, 1]} : vector<2x128xf32> to vector<2x32xf32>
    %cst_240 = arith.constant 5.000000e-01 : f32
    %728 = vector.broadcast %cst_240 : f32 to vector<2x32xf32>
    %729 = arith.mulf %728, %727 : vector<2x32xf32>
    %730 = math.tanh %729 : vector<2x32xf32>
    %cst_241 = arith.constant 1.000000e+00 : f32
    %731 = vector.broadcast %cst_241 : f32 to vector<2x32xf32>
    %732 = arith.addf %730, %731 : vector<2x32xf32>
    %cst_242 = arith.constant 5.000000e-01 : f32
    %733 = vector.broadcast %cst_242 : f32 to vector<2x32xf32>
    %734 = arith.mulf %733, %732 : vector<2x32xf32>
    %735 = vector.extract_strided_slice %718 {offsets = [0, 64], sizes = [2, 32], strides = [1, 1]} : vector<2x128xf32> to vector<2x32xf32>
    %736 = math.tanh %735 : vector<2x32xf32>
    %737 = vector.extract_strided_slice %718 {offsets = [0, 96], sizes = [2, 32], strides = [1, 1]} : vector<2x128xf32> to vector<2x32xf32>
    %cst_243 = arith.constant 5.000000e-01 : f32
    %738 = vector.broadcast %cst_243 : f32 to vector<2x32xf32>
    %739 = arith.mulf %738, %737 : vector<2x32xf32>
    %740 = math.tanh %739 : vector<2x32xf32>
    %cst_244 = arith.constant 1.000000e+00 : f32
    %741 = vector.broadcast %cst_244 : f32 to vector<2x32xf32>
    %742 = arith.addf %740, %741 : vector<2x32xf32>
    %cst_245 = arith.constant 5.000000e-01 : f32
    %743 = vector.broadcast %cst_245 : f32 to vector<2x32xf32>
    %744 = arith.mulf %743, %742 : vector<2x32xf32>
    %745 = arith.mulf %734, %679 : vector<2x32xf32>
    %746 = arith.mulf %726, %736 : vector<2x32xf32>
    %747 = arith.addf %745, %746 : vector<2x32xf32>
    %748 = math.tanh %747 : vector<2x32xf32>
    %749 = arith.mulf %744, %748 : vector<2x32xf32>
    %750 = vector.extract_strided_slice %575 {offsets = [10, 0], sizes = [2, 128], strides = [1, 1]} : vector<16x128xf32> to vector<2x128xf32>
    %cst_246 = arith.constant dense<0.000000e+00> : vector<2x128xf32>
    %751 = tpu.matmul %715, %568, %cst_246 {dimension_numbers = #tpu.dot_dimension_numbers<[1], [0], [0], [1], [0, 0, 1, 1], [], []>} : vector<2x32xf32>, vector<32x128xf32>, vector<2x128xf32> -> vector<2x128xf32>
    %752 = arith.addf %750, %751 : vector<2x128xf32>
    %753 = vector.extract_strided_slice %752 {offsets = [0, 0], sizes = [2, 32], strides = [1, 1]} : vector<2x128xf32> to vector<2x32xf32>
    %cst_247 = arith.constant 5.000000e-01 : f32
    %754 = vector.broadcast %cst_247 : f32 to vector<2x32xf32>
    %755 = arith.mulf %754, %753 : vector<2x32xf32>
    %756 = math.tanh %755 : vector<2x32xf32>
    %cst_248 = arith.constant 1.000000e+00 : f32
    %757 = vector.broadcast %cst_248 : f32 to vector<2x32xf32>
    %758 = arith.addf %756, %757 : vector<2x32xf32>
    %cst_249 = arith.constant 5.000000e-01 : f32
    %759 = vector.broadcast %cst_249 : f32 to vector<2x32xf32>
    %760 = arith.mulf %759, %758 : vector<2x32xf32>
    %761 = vector.extract_strided_slice %752 {offsets = [0, 32], sizes = [2, 32], strides = [1, 1]} : vector<2x128xf32> to vector<2x32xf32>
    %cst_250 = arith.constant 5.000000e-01 : f32
    %762 = vector.broadcast %cst_250 : f32 to vector<2x32xf32>
    %763 = arith.mulf %762, %761 : vector<2x32xf32>
    %764 = math.tanh %763 : vector<2x32xf32>
    %cst_251 = arith.constant 1.000000e+00 : f32
    %765 = vector.broadcast %cst_251 : f32 to vector<2x32xf32>
    %766 = arith.addf %764, %765 : vector<2x32xf32>
    %cst_252 = arith.constant 5.000000e-01 : f32
    %767 = vector.broadcast %cst_252 : f32 to vector<2x32xf32>
    %768 = arith.mulf %767, %766 : vector<2x32xf32>
    %769 = vector.extract_strided_slice %752 {offsets = [0, 64], sizes = [2, 32], strides = [1, 1]} : vector<2x128xf32> to vector<2x32xf32>
    %770 = math.tanh %769 : vector<2x32xf32>
    %771 = vector.extract_strided_slice %752 {offsets = [0, 96], sizes = [2, 32], strides = [1, 1]} : vector<2x128xf32> to vector<2x32xf32>
    %cst_253 = arith.constant 5.000000e-01 : f32
    %772 = vector.broadcast %cst_253 : f32 to vector<2x32xf32>
    %773 = arith.mulf %772, %771 : vector<2x32xf32>
    %774 = math.tanh %773 : vector<2x32xf32>
    %cst_254 = arith.constant 1.000000e+00 : f32
    %775 = vector.broadcast %cst_254 : f32 to vector<2x32xf32>
    %776 = arith.addf %774, %775 : vector<2x32xf32>
    %cst_255 = arith.constant 5.000000e-01 : f32
    %777 = vector.broadcast %cst_255 : f32 to vector<2x32xf32>
    %778 = arith.mulf %777, %776 : vector<2x32xf32>
    %779 = arith.mulf %768, %713 : vector<2x32xf32>
    %780 = arith.mulf %760, %770 : vector<2x32xf32>
    %781 = arith.addf %779, %780 : vector<2x32xf32>
    %782 = math.tanh %781 : vector<2x32xf32>
    %783 = arith.mulf %778, %782 : vector<2x32xf32>
    %784 = vector.extract_strided_slice %572 {offsets = [6, 0], sizes = [2, 128], strides = [1, 1]} : vector<16x128xf32> to vector<2x128xf32>
    %cst_256 = arith.constant dense<0.000000e+00> : vector<2x128xf32>
    %785 = tpu.matmul %749, %565, %cst_256 {dimension_numbers = #tpu.dot_dimension_numbers<[1], [0], [0], [1], [0, 0, 1, 1], [], []>} : vector<2x32xf32>, vector<32x128xf32>, vector<2x128xf32> -> vector<2x128xf32>
    %786 = arith.addf %784, %785 : vector<2x128xf32>
    %787 = vector.extract_strided_slice %786 {offsets = [0, 0], sizes = [2, 32], strides = [1, 1]} : vector<2x128xf32> to vector<2x32xf32>
    %cst_257 = arith.constant 5.000000e-01 : f32
    %788 = vector.broadcast %cst_257 : f32 to vector<2x32xf32>
    %789 = arith.mulf %788, %787 : vector<2x32xf32>
    %790 = math.tanh %789 : vector<2x32xf32>
    %cst_258 = arith.constant 1.000000e+00 : f32
    %791 = vector.broadcast %cst_258 : f32 to vector<2x32xf32>
    %792 = arith.addf %790, %791 : vector<2x32xf32>
    %cst_259 = arith.constant 5.000000e-01 : f32
    %793 = vector.broadcast %cst_259 : f32 to vector<2x32xf32>
    %794 = arith.mulf %793, %792 : vector<2x32xf32>
    %795 = vector.extract_strided_slice %786 {offsets = [0, 32], sizes = [2, 32], strides = [1, 1]} : vector<2x128xf32> to vector<2x32xf32>
    %cst_260 = arith.constant 5.000000e-01 : f32
    %796 = vector.broadcast %cst_260 : f32 to vector<2x32xf32>
    %797 = arith.mulf %796, %795 : vector<2x32xf32>
    %798 = math.tanh %797 : vector<2x32xf32>
    %cst_261 = arith.constant 1.000000e+00 : f32
    %799 = vector.broadcast %cst_261 : f32 to vector<2x32xf32>
    %800 = arith.addf %798, %799 : vector<2x32xf32>
    %cst_262 = arith.constant 5.000000e-01 : f32
    %801 = vector.broadcast %cst_262 : f32 to vector<2x32xf32>
    %802 = arith.mulf %801, %800 : vector<2x32xf32>
    %803 = vector.extract_strided_slice %786 {offsets = [0, 64], sizes = [2, 32], strides = [1, 1]} : vector<2x128xf32> to vector<2x32xf32>
    %804 = math.tanh %803 : vector<2x32xf32>
    %805 = vector.extract_strided_slice %786 {offsets = [0, 96], sizes = [2, 32], strides = [1, 1]} : vector<2x128xf32> to vector<2x32xf32>
    %cst_263 = arith.constant 5.000000e-01 : f32
    %806 = vector.broadcast %cst_263 : f32 to vector<2x32xf32>
    %807 = arith.mulf %806, %805 : vector<2x32xf32>
    %808 = math.tanh %807 : vector<2x32xf32>
    %cst_264 = arith.constant 1.000000e+00 : f32
    %809 = vector.broadcast %cst_264 : f32 to vector<2x32xf32>
    %810 = arith.addf %808, %809 : vector<2x32xf32>
    %cst_265 = arith.constant 5.000000e-01 : f32
    %811 = vector.broadcast %cst_265 : f32 to vector<2x32xf32>
    %812 = arith.mulf %811, %810 : vector<2x32xf32>
    %813 = arith.mulf %802, %747 : vector<2x32xf32>
    %814 = arith.mulf %794, %804 : vector<2x32xf32>
    %815 = arith.addf %813, %814 : vector<2x32xf32>
    %816 = math.tanh %815 : vector<2x32xf32>
    %817 = arith.mulf %812, %816 : vector<2x32xf32>
    %818 = vector.extract_strided_slice %575 {offsets = [8, 0], sizes = [2, 128], strides = [1, 1]} : vector<16x128xf32> to vector<2x128xf32>
    %cst_266 = arith.constant dense<0.000000e+00> : vector<2x128xf32>
    %819 = tpu.matmul %783, %568, %cst_266 {dimension_numbers = #tpu.dot_dimension_numbers<[1], [0], [0], [1], [0, 0, 1, 1], [], []>} : vector<2x32xf32>, vector<32x128xf32>, vector<2x128xf32> -> vector<2x128xf32>
    %820 = arith.addf %818, %819 : vector<2x128xf32>
    %821 = vector.extract_strided_slice %820 {offsets = [0, 0], sizes = [2, 32], strides = [1, 1]} : vector<2x128xf32> to vector<2x32xf32>
    %cst_267 = arith.constant 5.000000e-01 : f32
    %822 = vector.broadcast %cst_267 : f32 to vector<2x32xf32>
    %823 = arith.mulf %822, %821 : vector<2x32xf32>
    %824 = math.tanh %823 : vector<2x32xf32>
    %cst_268 = arith.constant 1.000000e+00 : f32
    %825 = vector.broadcast %cst_268 : f32 to vector<2x32xf32>
    %826 = arith.addf %824, %825 : vector<2x32xf32>
    %cst_269 = arith.constant 5.000000e-01 : f32
    %827 = vector.broadcast %cst_269 : f32 to vector<2x32xf32>
    %828 = arith.mulf %827, %826 : vector<2x32xf32>
    %829 = vector.extract_strided_slice %820 {offsets = [0, 32], sizes = [2, 32], strides = [1, 1]} : vector<2x128xf32> to vector<2x32xf32>
    %cst_270 = arith.constant 5.000000e-01 : f32
    %830 = vector.broadcast %cst_270 : f32 to vector<2x32xf32>
    %831 = arith.mulf %830, %829 : vector<2x32xf32>
    %832 = math.tanh %831 : vector<2x32xf32>
    %cst_271 = arith.constant 1.000000e+00 : f32
    %833 = vector.broadcast %cst_271 : f32 to vector<2x32xf32>
    %834 = arith.addf %832, %833 : vector<2x32xf32>
    %cst_272 = arith.constant 5.000000e-01 : f32
    %835 = vector.broadcast %cst_272 : f32 to vector<2x32xf32>
    %836 = arith.mulf %835, %834 : vector<2x32xf32>
    %837 = vector.extract_strided_slice %820 {offsets = [0, 64], sizes = [2, 32], strides = [1, 1]} : vector<2x128xf32> to vector<2x32xf32>
    %838 = math.tanh %837 : vector<2x32xf32>
    %839 = vector.extract_strided_slice %820 {offsets = [0, 96], sizes = [2, 32], strides = [1, 1]} : vector<2x128xf32> to vector<2x32xf32>
    %cst_273 = arith.constant 5.000000e-01 : f32
    %840 = vector.broadcast %cst_273 : f32 to vector<2x32xf32>
    %841 = arith.mulf %840, %839 : vector<2x32xf32>
    %842 = math.tanh %841 : vector<2x32xf32>
    %cst_274 = arith.constant 1.000000e+00 : f32
    %843 = vector.broadcast %cst_274 : f32 to vector<2x32xf32>
    %844 = arith.addf %842, %843 : vector<2x32xf32>
    %cst_275 = arith.constant 5.000000e-01 : f32
    %845 = vector.broadcast %cst_275 : f32 to vector<2x32xf32>
    %846 = arith.mulf %845, %844 : vector<2x32xf32>
    %847 = arith.mulf %836, %781 : vector<2x32xf32>
    %848 = arith.mulf %828, %838 : vector<2x32xf32>
    %849 = arith.addf %847, %848 : vector<2x32xf32>
    %850 = math.tanh %849 : vector<2x32xf32>
    %851 = arith.mulf %846, %850 : vector<2x32xf32>
    %852 = vector.extract_strided_slice %572 {offsets = [8, 0], sizes = [2, 128], strides = [1, 1]} : vector<16x128xf32> to vector<2x128xf32>
    %cst_276 = arith.constant dense<0.000000e+00> : vector<2x128xf32>
    %853 = tpu.matmul %817, %565, %cst_276 {dimension_numbers = #tpu.dot_dimension_numbers<[1], [0], [0], [1], [0, 0, 1, 1], [], []>} : vector<2x32xf32>, vector<32x128xf32>, vector<2x128xf32> -> vector<2x128xf32>
    %854 = arith.addf %852, %853 : vector<2x128xf32>
    %855 = vector.extract_strided_slice %854 {offsets = [0, 0], sizes = [2, 32], strides = [1, 1]} : vector<2x128xf32> to vector<2x32xf32>
    %cst_277 = arith.constant 5.000000e-01 : f32
    %856 = vector.broadcast %cst_277 : f32 to vector<2x32xf32>
    %857 = arith.mulf %856, %855 : vector<2x32xf32>
    %858 = math.tanh %857 : vector<2x32xf32>
    %cst_278 = arith.constant 1.000000e+00 : f32
    %859 = vector.broadcast %cst_278 : f32 to vector<2x32xf32>
    %860 = arith.addf %858, %859 : vector<2x32xf32>
    %cst_279 = arith.constant 5.000000e-01 : f32
    %861 = vector.broadcast %cst_279 : f32 to vector<2x32xf32>
    %862 = arith.mulf %861, %860 : vector<2x32xf32>
    %863 = vector.extract_strided_slice %854 {offsets = [0, 32], sizes = [2, 32], strides = [1, 1]} : vector<2x128xf32> to vector<2x32xf32>
    %cst_280 = arith.constant 5.000000e-01 : f32
    %864 = vector.broadcast %cst_280 : f32 to vector<2x32xf32>
    %865 = arith.mulf %864, %863 : vector<2x32xf32>
    %866 = math.tanh %865 : vector<2x32xf32>
    %cst_281 = arith.constant 1.000000e+00 : f32
    %867 = vector.broadcast %cst_281 : f32 to vector<2x32xf32>
    %868 = arith.addf %866, %867 : vector<2x32xf32>
    %cst_282 = arith.constant 5.000000e-01 : f32
    %869 = vector.broadcast %cst_282 : f32 to vector<2x32xf32>
    %870 = arith.mulf %869, %868 : vector<2x32xf32>
    %871 = vector.extract_strided_slice %854 {offsets = [0, 64], sizes = [2, 32], strides = [1, 1]} : vector<2x128xf32> to vector<2x32xf32>
    %872 = math.tanh %871 : vector<2x32xf32>
    %873 = vector.extract_strided_slice %854 {offsets = [0, 96], sizes = [2, 32], strides = [1, 1]} : vector<2x128xf32> to vector<2x32xf32>
    %cst_283 = arith.constant 5.000000e-01 : f32
    %874 = vector.broadcast %cst_283 : f32 to vector<2x32xf32>
    %875 = arith.mulf %874, %873 : vector<2x32xf32>
    %876 = math.tanh %875 : vector<2x32xf32>
    %cst_284 = arith.constant 1.000000e+00 : f32
    %877 = vector.broadcast %cst_284 : f32 to vector<2x32xf32>
    %878 = arith.addf %876, %877 : vector<2x32xf32>
    %cst_285 = arith.constant 5.000000e-01 : f32
    %879 = vector.broadcast %cst_285 : f32 to vector<2x32xf32>
    %880 = arith.mulf %879, %878 : vector<2x32xf32>
    %881 = arith.mulf %870, %815 : vector<2x32xf32>
    %882 = arith.mulf %862, %872 : vector<2x32xf32>
    %883 = arith.addf %881, %882 : vector<2x32xf32>
    %884 = math.tanh %883 : vector<2x32xf32>
    %885 = arith.mulf %880, %884 : vector<2x32xf32>
    %886 = vector.extract_strided_slice %575 {offsets = [6, 0], sizes = [2, 128], strides = [1, 1]} : vector<16x128xf32> to vector<2x128xf32>
    %cst_286 = arith.constant dense<0.000000e+00> : vector<2x128xf32>
    %887 = tpu.matmul %851, %568, %cst_286 {dimension_numbers = #tpu.dot_dimension_numbers<[1], [0], [0], [1], [0, 0, 1, 1], [], []>} : vector<2x32xf32>, vector<32x128xf32>, vector<2x128xf32> -> vector<2x128xf32>
    %888 = arith.addf %886, %887 : vector<2x128xf32>
    %889 = vector.extract_strided_slice %888 {offsets = [0, 0], sizes = [2, 32], strides = [1, 1]} : vector<2x128xf32> to vector<2x32xf32>
    %cst_287 = arith.constant 5.000000e-01 : f32
    %890 = vector.broadcast %cst_287 : f32 to vector<2x32xf32>
    %891 = arith.mulf %890, %889 : vector<2x32xf32>
    %892 = math.tanh %891 : vector<2x32xf32>
    %cst_288 = arith.constant 1.000000e+00 : f32
    %893 = vector.broadcast %cst_288 : f32 to vector<2x32xf32>
    %894 = arith.addf %892, %893 : vector<2x32xf32>
    %cst_289 = arith.constant 5.000000e-01 : f32
    %895 = vector.broadcast %cst_289 : f32 to vector<2x32xf32>
    %896 = arith.mulf %895, %894 : vector<2x32xf32>
    %897 = vector.extract_strided_slice %888 {offsets = [0, 32], sizes = [2, 32], strides = [1, 1]} : vector<2x128xf32> to vector<2x32xf32>
    %cst_290 = arith.constant 5.000000e-01 : f32
    %898 = vector.broadcast %cst_290 : f32 to vector<2x32xf32>
    %899 = arith.mulf %898, %897 : vector<2x32xf32>
    %900 = math.tanh %899 : vector<2x32xf32>
    %cst_291 = arith.constant 1.000000e+00 : f32
    %901 = vector.broadcast %cst_291 : f32 to vector<2x32xf32>
    %902 = arith.addf %900, %901 : vector<2x32xf32>
    %cst_292 = arith.constant 5.000000e-01 : f32
    %903 = vector.broadcast %cst_292 : f32 to vector<2x32xf32>
    %904 = arith.mulf %903, %902 : vector<2x32xf32>
    %905 = vector.extract_strided_slice %888 {offsets = [0, 64], sizes = [2, 32], strides = [1, 1]} : vector<2x128xf32> to vector<2x32xf32>
    %906 = math.tanh %905 : vector<2x32xf32>
    %907 = vector.extract_strided_slice %888 {offsets = [0, 96], sizes = [2, 32], strides = [1, 1]} : vector<2x128xf32> to vector<2x32xf32>
    %cst_293 = arith.constant 5.000000e-01 : f32
    %908 = vector.broadcast %cst_293 : f32 to vector<2x32xf32>
    %909 = arith.mulf %908, %907 : vector<2x32xf32>
    %910 = math.tanh %909 : vector<2x32xf32>
    %cst_294 = arith.constant 1.000000e+00 : f32
    %911 = vector.broadcast %cst_294 : f32 to vector<2x32xf32>
    %912 = arith.addf %910, %911 : vector<2x32xf32>
    %cst_295 = arith.constant 5.000000e-01 : f32
    %913 = vector.broadcast %cst_295 : f32 to vector<2x32xf32>
    %914 = arith.mulf %913, %912 : vector<2x32xf32>
    %915 = arith.mulf %904, %849 : vector<2x32xf32>
    %916 = arith.mulf %896, %906 : vector<2x32xf32>
    %917 = arith.addf %915, %916 : vector<2x32xf32>
    %918 = math.tanh %917 : vector<2x32xf32>
    %919 = arith.mulf %914, %918 : vector<2x32xf32>
    %920 = vector.extract_strided_slice %572 {offsets = [10, 0], sizes = [2, 128], strides = [1, 1]} : vector<16x128xf32> to vector<2x128xf32>
    %cst_296 = arith.constant dense<0.000000e+00> : vector<2x128xf32>
    %921 = tpu.matmul %885, %565, %cst_296 {dimension_numbers = #tpu.dot_dimension_numbers<[1], [0], [0], [1], [0, 0, 1, 1], [], []>} : vector<2x32xf32>, vector<32x128xf32>, vector<2x128xf32> -> vector<2x128xf32>
    %922 = arith.addf %920, %921 : vector<2x128xf32>
    %923 = vector.extract_strided_slice %922 {offsets = [0, 0], sizes = [2, 32], strides = [1, 1]} : vector<2x128xf32> to vector<2x32xf32>
    %cst_297 = arith.constant 5.000000e-01 : f32
    %924 = vector.broadcast %cst_297 : f32 to vector<2x32xf32>
    %925 = arith.mulf %924, %923 : vector<2x32xf32>
    %926 = math.tanh %925 : vector<2x32xf32>
    %cst_298 = arith.constant 1.000000e+00 : f32
    %927 = vector.broadcast %cst_298 : f32 to vector<2x32xf32>
    %928 = arith.addf %926, %927 : vector<2x32xf32>
    %cst_299 = arith.constant 5.000000e-01 : f32
    %929 = vector.broadcast %cst_299 : f32 to vector<2x32xf32>
    %930 = arith.mulf %929, %928 : vector<2x32xf32>
    %931 = vector.extract_strided_slice %922 {offsets = [0, 32], sizes = [2, 32], strides = [1, 1]} : vector<2x128xf32> to vector<2x32xf32>
    %cst_300 = arith.constant 5.000000e-01 : f32
    %932 = vector.broadcast %cst_300 : f32 to vector<2x32xf32>
    %933 = arith.mulf %932, %931 : vector<2x32xf32>
    %934 = math.tanh %933 : vector<2x32xf32>
    %cst_301 = arith.constant 1.000000e+00 : f32
    %935 = vector.broadcast %cst_301 : f32 to vector<2x32xf32>
    %936 = arith.addf %934, %935 : vector<2x32xf32>
    %cst_302 = arith.constant 5.000000e-01 : f32
    %937 = vector.broadcast %cst_302 : f32 to vector<2x32xf32>
    %938 = arith.mulf %937, %936 : vector<2x32xf32>
    %939 = vector.extract_strided_slice %922 {offsets = [0, 64], sizes = [2, 32], strides = [1, 1]} : vector<2x128xf32> to vector<2x32xf32>
    %940 = math.tanh %939 : vector<2x32xf32>
    %941 = vector.extract_strided_slice %922 {offsets = [0, 96], sizes = [2, 32], strides = [1, 1]} : vector<2x128xf32> to vector<2x32xf32>
    %cst_303 = arith.constant 5.000000e-01 : f32
    %942 = vector.broadcast %cst_303 : f32 to vector<2x32xf32>
    %943 = arith.mulf %942, %941 : vector<2x32xf32>
    %944 = math.tanh %943 : vector<2x32xf32>
    %cst_304 = arith.constant 1.000000e+00 : f32
    %945 = vector.broadcast %cst_304 : f32 to vector<2x32xf32>
    %946 = arith.addf %944, %945 : vector<2x32xf32>
    %cst_305 = arith.constant 5.000000e-01 : f32
    %947 = vector.broadcast %cst_305 : f32 to vector<2x32xf32>
    %948 = arith.mulf %947, %946 : vector<2x32xf32>
    %949 = arith.mulf %938, %883 : vector<2x32xf32>
    %950 = arith.mulf %930, %940 : vector<2x32xf32>
    %951 = arith.addf %949, %950 : vector<2x32xf32>
    %952 = math.tanh %951 : vector<2x32xf32>
    %953 = arith.mulf %948, %952 : vector<2x32xf32>
    %954 = vector.extract_strided_slice %575 {offsets = [4, 0], sizes = [2, 128], strides = [1, 1]} : vector<16x128xf32> to vector<2x128xf32>
    %cst_306 = arith.constant dense<0.000000e+00> : vector<2x128xf32>
    %955 = tpu.matmul %919, %568, %cst_306 {dimension_numbers = #tpu.dot_dimension_numbers<[1], [0], [0], [1], [0, 0, 1, 1], [], []>} : vector<2x32xf32>, vector<32x128xf32>, vector<2x128xf32> -> vector<2x128xf32>
    %956 = arith.addf %954, %955 : vector<2x128xf32>
    %957 = vector.extract_strided_slice %956 {offsets = [0, 0], sizes = [2, 32], strides = [1, 1]} : vector<2x128xf32> to vector<2x32xf32>
    %cst_307 = arith.constant 5.000000e-01 : f32
    %958 = vector.broadcast %cst_307 : f32 to vector<2x32xf32>
    %959 = arith.mulf %958, %957 : vector<2x32xf32>
    %960 = math.tanh %959 : vector<2x32xf32>
    %cst_308 = arith.constant 1.000000e+00 : f32
    %961 = vector.broadcast %cst_308 : f32 to vector<2x32xf32>
    %962 = arith.addf %960, %961 : vector<2x32xf32>
    %cst_309 = arith.constant 5.000000e-01 : f32
    %963 = vector.broadcast %cst_309 : f32 to vector<2x32xf32>
    %964 = arith.mulf %963, %962 : vector<2x32xf32>
    %965 = vector.extract_strided_slice %956 {offsets = [0, 32], sizes = [2, 32], strides = [1, 1]} : vector<2x128xf32> to vector<2x32xf32>
    %cst_310 = arith.constant 5.000000e-01 : f32
    %966 = vector.broadcast %cst_310 : f32 to vector<2x32xf32>
    %967 = arith.mulf %966, %965 : vector<2x32xf32>
    %968 = math.tanh %967 : vector<2x32xf32>
    %cst_311 = arith.constant 1.000000e+00 : f32
    %969 = vector.broadcast %cst_311 : f32 to vector<2x32xf32>
    %970 = arith.addf %968, %969 : vector<2x32xf32>
    %cst_312 = arith.constant 5.000000e-01 : f32
    %971 = vector.broadcast %cst_312 : f32 to vector<2x32xf32>
    %972 = arith.mulf %971, %970 : vector<2x32xf32>
    %973 = vector.extract_strided_slice %956 {offsets = [0, 64], sizes = [2, 32], strides = [1, 1]} : vector<2x128xf32> to vector<2x32xf32>
    %974 = math.tanh %973 : vector<2x32xf32>
    %975 = vector.extract_strided_slice %956 {offsets = [0, 96], sizes = [2, 32], strides = [1, 1]} : vector<2x128xf32> to vector<2x32xf32>
    %cst_313 = arith.constant 5.000000e-01 : f32
    %976 = vector.broadcast %cst_313 : f32 to vector<2x32xf32>
    %977 = arith.mulf %976, %975 : vector<2x32xf32>
    %978 = math.tanh %977 : vector<2x32xf32>
    %cst_314 = arith.constant 1.000000e+00 : f32
    %979 = vector.broadcast %cst_314 : f32 to vector<2x32xf32>
    %980 = arith.addf %978, %979 : vector<2x32xf32>
    %cst_315 = arith.constant 5.000000e-01 : f32
    %981 = vector.broadcast %cst_315 : f32 to vector<2x32xf32>
    %982 = arith.mulf %981, %980 : vector<2x32xf32>
    %983 = arith.mulf %972, %917 : vector<2x32xf32>
    %984 = arith.mulf %964, %974 : vector<2x32xf32>
    %985 = arith.addf %983, %984 : vector<2x32xf32>
    %986 = math.tanh %985 : vector<2x32xf32>
    %987 = arith.mulf %982, %986 : vector<2x32xf32>
    %988 = vector.extract_strided_slice %572 {offsets = [12, 0], sizes = [2, 128], strides = [1, 1]} : vector<16x128xf32> to vector<2x128xf32>
    %cst_316 = arith.constant dense<0.000000e+00> : vector<2x128xf32>
    %989 = tpu.matmul %953, %565, %cst_316 {dimension_numbers = #tpu.dot_dimension_numbers<[1], [0], [0], [1], [0, 0, 1, 1], [], []>} : vector<2x32xf32>, vector<32x128xf32>, vector<2x128xf32> -> vector<2x128xf32>
    %990 = arith.addf %988, %989 : vector<2x128xf32>
    %991 = vector.extract_strided_slice %990 {offsets = [0, 0], sizes = [2, 32], strides = [1, 1]} : vector<2x128xf32> to vector<2x32xf32>
    %cst_317 = arith.constant 5.000000e-01 : f32
    %992 = vector.broadcast %cst_317 : f32 to vector<2x32xf32>
    %993 = arith.mulf %992, %991 : vector<2x32xf32>
    %994 = math.tanh %993 : vector<2x32xf32>
    %cst_318 = arith.constant 1.000000e+00 : f32
    %995 = vector.broadcast %cst_318 : f32 to vector<2x32xf32>
    %996 = arith.addf %994, %995 : vector<2x32xf32>
    %cst_319 = arith.constant 5.000000e-01 : f32
    %997 = vector.broadcast %cst_319 : f32 to vector<2x32xf32>
    %998 = arith.mulf %997, %996 : vector<2x32xf32>
    %999 = vector.extract_strided_slice %990 {offsets = [0, 32], sizes = [2, 32], strides = [1, 1]} : vector<2x128xf32> to vector<2x32xf32>
    %cst_320 = arith.constant 5.000000e-01 : f32
    %1000 = vector.broadcast %cst_320 : f32 to vector<2x32xf32>
    %1001 = arith.mulf %1000, %999 : vector<2x32xf32>
    %1002 = math.tanh %1001 : vector<2x32xf32>
    %cst_321 = arith.constant 1.000000e+00 : f32
    %1003 = vector.broadcast %cst_321 : f32 to vector<2x32xf32>
    %1004 = arith.addf %1002, %1003 : vector<2x32xf32>
    %cst_322 = arith.constant 5.000000e-01 : f32
    %1005 = vector.broadcast %cst_322 : f32 to vector<2x32xf32>
    %1006 = arith.mulf %1005, %1004 : vector<2x32xf32>
    %1007 = vector.extract_strided_slice %990 {offsets = [0, 64], sizes = [2, 32], strides = [1, 1]} : vector<2x128xf32> to vector<2x32xf32>
    %1008 = math.tanh %1007 : vector<2x32xf32>
    %1009 = vector.extract_strided_slice %990 {offsets = [0, 96], sizes = [2, 32], strides = [1, 1]} : vector<2x128xf32> to vector<2x32xf32>
    %cst_323 = arith.constant 5.000000e-01 : f32
    %1010 = vector.broadcast %cst_323 : f32 to vector<2x32xf32>
    %1011 = arith.mulf %1010, %1009 : vector<2x32xf32>
    %1012 = math.tanh %1011 : vector<2x32xf32>
    %cst_324 = arith.constant 1.000000e+00 : f32
    %1013 = vector.broadcast %cst_324 : f32 to vector<2x32xf32>
    %1014 = arith.addf %1012, %1013 : vector<2x32xf32>
    %cst_325 = arith.constant 5.000000e-01 : f32
    %1015 = vector.broadcast %cst_325 : f32 to vector<2x32xf32>
    %1016 = arith.mulf %1015, %1014 : vector<2x32xf32>
    %1017 = arith.mulf %1006, %951 : vector<2x32xf32>
    %1018 = arith.mulf %998, %1008 : vector<2x32xf32>
    %1019 = arith.addf %1017, %1018 : vector<2x32xf32>
    %1020 = math.tanh %1019 : vector<2x32xf32>
    %1021 = arith.mulf %1016, %1020 : vector<2x32xf32>
    %1022 = vector.extract_strided_slice %575 {offsets = [2, 0], sizes = [2, 128], strides = [1, 1]} : vector<16x128xf32> to vector<2x128xf32>
    %cst_326 = arith.constant dense<0.000000e+00> : vector<2x128xf32>
    %1023 = tpu.matmul %987, %568, %cst_326 {dimension_numbers = #tpu.dot_dimension_numbers<[1], [0], [0], [1], [0, 0, 1, 1], [], []>} : vector<2x32xf32>, vector<32x128xf32>, vector<2x128xf32> -> vector<2x128xf32>
    %1024 = arith.addf %1022, %1023 : vector<2x128xf32>
    %1025 = vector.extract_strided_slice %1024 {offsets = [0, 0], sizes = [2, 32], strides = [1, 1]} : vector<2x128xf32> to vector<2x32xf32>
    %cst_327 = arith.constant 5.000000e-01 : f32
    %1026 = vector.broadcast %cst_327 : f32 to vector<2x32xf32>
    %1027 = arith.mulf %1026, %1025 : vector<2x32xf32>
    %1028 = math.tanh %1027 : vector<2x32xf32>
    %cst_328 = arith.constant 1.000000e+00 : f32
    %1029 = vector.broadcast %cst_328 : f32 to vector<2x32xf32>
    %1030 = arith.addf %1028, %1029 : vector<2x32xf32>
    %cst_329 = arith.constant 5.000000e-01 : f32
    %1031 = vector.broadcast %cst_329 : f32 to vector<2x32xf32>
    %1032 = arith.mulf %1031, %1030 : vector<2x32xf32>
    %1033 = vector.extract_strided_slice %1024 {offsets = [0, 32], sizes = [2, 32], strides = [1, 1]} : vector<2x128xf32> to vector<2x32xf32>
    %cst_330 = arith.constant 5.000000e-01 : f32
    %1034 = vector.broadcast %cst_330 : f32 to vector<2x32xf32>
    %1035 = arith.mulf %1034, %1033 : vector<2x32xf32>
    %1036 = math.tanh %1035 : vector<2x32xf32>
    %cst_331 = arith.constant 1.000000e+00 : f32
    %1037 = vector.broadcast %cst_331 : f32 to vector<2x32xf32>
    %1038 = arith.addf %1036, %1037 : vector<2x32xf32>
    %cst_332 = arith.constant 5.000000e-01 : f32
    %1039 = vector.broadcast %cst_332 : f32 to vector<2x32xf32>
    %1040 = arith.mulf %1039, %1038 : vector<2x32xf32>
    %1041 = vector.extract_strided_slice %1024 {offsets = [0, 64], sizes = [2, 32], strides = [1, 1]} : vector<2x128xf32> to vector<2x32xf32>
    %1042 = math.tanh %1041 : vector<2x32xf32>
    %1043 = vector.extract_strided_slice %1024 {offsets = [0, 96], sizes = [2, 32], strides = [1, 1]} : vector<2x128xf32> to vector<2x32xf32>
    %cst_333 = arith.constant 5.000000e-01 : f32
    %1044 = vector.broadcast %cst_333 : f32 to vector<2x32xf32>
    %1045 = arith.mulf %1044, %1043 : vector<2x32xf32>
    %1046 = math.tanh %1045 : vector<2x32xf32>
    %cst_334 = arith.constant 1.000000e+00 : f32
    %1047 = vector.broadcast %cst_334 : f32 to vector<2x32xf32>
    %1048 = arith.addf %1046, %1047 : vector<2x32xf32>
    %cst_335 = arith.constant 5.000000e-01 : f32
    %1049 = vector.broadcast %cst_335 : f32 to vector<2x32xf32>
    %1050 = arith.mulf %1049, %1048 : vector<2x32xf32>
    %1051 = arith.mulf %1040, %985 : vector<2x32xf32>
    %1052 = arith.mulf %1032, %1042 : vector<2x32xf32>
    %1053 = arith.addf %1051, %1052 : vector<2x32xf32>
    %1054 = math.tanh %1053 : vector<2x32xf32>
    %1055 = arith.mulf %1050, %1054 : vector<2x32xf32>
    %1056 = vector.extract_strided_slice %572 {offsets = [14, 0], sizes = [2, 128], strides = [1, 1]} : vector<16x128xf32> to vector<2x128xf32>
    %cst_336 = arith.constant dense<0.000000e+00> : vector<2x128xf32>
    %1057 = tpu.matmul %1021, %565, %cst_336 {dimension_numbers = #tpu.dot_dimension_numbers<[1], [0], [0], [1], [0, 0, 1, 1], [], []>} : vector<2x32xf32>, vector<32x128xf32>, vector<2x128xf32> -> vector<2x128xf32>
    %1058 = arith.addf %1056, %1057 : vector<2x128xf32>
    %1059 = vector.extract_strided_slice %1058 {offsets = [0, 0], sizes = [2, 32], strides = [1, 1]} : vector<2x128xf32> to vector<2x32xf32>
    %cst_337 = arith.constant 5.000000e-01 : f32
    %1060 = vector.broadcast %cst_337 : f32 to vector<2x32xf32>
    %1061 = arith.mulf %1060, %1059 : vector<2x32xf32>
    %1062 = math.tanh %1061 : vector<2x32xf32>
    %cst_338 = arith.constant 1.000000e+00 : f32
    %1063 = vector.broadcast %cst_338 : f32 to vector<2x32xf32>
    %1064 = arith.addf %1062, %1063 : vector<2x32xf32>
    %cst_339 = arith.constant 5.000000e-01 : f32
    %1065 = vector.broadcast %cst_339 : f32 to vector<2x32xf32>
    %1066 = arith.mulf %1065, %1064 : vector<2x32xf32>
    %1067 = vector.extract_strided_slice %1058 {offsets = [0, 32], sizes = [2, 32], strides = [1, 1]} : vector<2x128xf32> to vector<2x32xf32>
    %cst_340 = arith.constant 5.000000e-01 : f32
    %1068 = vector.broadcast %cst_340 : f32 to vector<2x32xf32>
    %1069 = arith.mulf %1068, %1067 : vector<2x32xf32>
    %1070 = math.tanh %1069 : vector<2x32xf32>
    %cst_341 = arith.constant 1.000000e+00 : f32
    %1071 = vector.broadcast %cst_341 : f32 to vector<2x32xf32>
    %1072 = arith.addf %1070, %1071 : vector<2x32xf32>
    %cst_342 = arith.constant 5.000000e-01 : f32
    %1073 = vector.broadcast %cst_342 : f32 to vector<2x32xf32>
    %1074 = arith.mulf %1073, %1072 : vector<2x32xf32>
    %1075 = vector.extract_strided_slice %1058 {offsets = [0, 64], sizes = [2, 32], strides = [1, 1]} : vector<2x128xf32> to vector<2x32xf32>
    %1076 = math.tanh %1075 : vector<2x32xf32>
    %1077 = vector.extract_strided_slice %1058 {offsets = [0, 96], sizes = [2, 32], strides = [1, 1]} : vector<2x128xf32> to vector<2x32xf32>
    %cst_343 = arith.constant 5.000000e-01 : f32
    %1078 = vector.broadcast %cst_343 : f32 to vector<2x32xf32>
    %1079 = arith.mulf %1078, %1077 : vector<2x32xf32>
    %1080 = math.tanh %1079 : vector<2x32xf32>
    %cst_344 = arith.constant 1.000000e+00 : f32
    %1081 = vector.broadcast %cst_344 : f32 to vector<2x32xf32>
    %1082 = arith.addf %1080, %1081 : vector<2x32xf32>
    %cst_345 = arith.constant 5.000000e-01 : f32
    %1083 = vector.broadcast %cst_345 : f32 to vector<2x32xf32>
    %1084 = arith.mulf %1083, %1082 : vector<2x32xf32>
    %1085 = arith.mulf %1074, %1019 : vector<2x32xf32>
    %1086 = arith.mulf %1066, %1076 : vector<2x32xf32>
    %1087 = arith.addf %1085, %1086 : vector<2x32xf32>
    %1088 = math.tanh %1087 : vector<2x32xf32>
    %1089 = arith.mulf %1084, %1088 : vector<2x32xf32>
    %1090 = vector.extract_strided_slice %575 {offsets = [0, 0], sizes = [2, 128], strides = [1, 1]} : vector<16x128xf32> to vector<2x128xf32>
    %cst_346 = arith.constant dense<0.000000e+00> : vector<2x128xf32>
    %1091 = tpu.matmul %1055, %568, %cst_346 {dimension_numbers = #tpu.dot_dimension_numbers<[1], [0], [0], [1], [0, 0, 1, 1], [], []>} : vector<2x32xf32>, vector<32x128xf32>, vector<2x128xf32> -> vector<2x128xf32>
    %1092 = arith.addf %1090, %1091 : vector<2x128xf32>
    %1093 = vector.extract_strided_slice %1092 {offsets = [0, 0], sizes = [2, 32], strides = [1, 1]} : vector<2x128xf32> to vector<2x32xf32>
    %cst_347 = arith.constant 5.000000e-01 : f32
    %1094 = vector.broadcast %cst_347 : f32 to vector<2x32xf32>
    %1095 = arith.mulf %1094, %1093 : vector<2x32xf32>
    %1096 = math.tanh %1095 : vector<2x32xf32>
    %cst_348 = arith.constant 1.000000e+00 : f32
    %1097 = vector.broadcast %cst_348 : f32 to vector<2x32xf32>
    %1098 = arith.addf %1096, %1097 : vector<2x32xf32>
    %cst_349 = arith.constant 5.000000e-01 : f32
    %1099 = vector.broadcast %cst_349 : f32 to vector<2x32xf32>
    %1100 = arith.mulf %1099, %1098 : vector<2x32xf32>
    %1101 = vector.extract_strided_slice %1092 {offsets = [0, 32], sizes = [2, 32], strides = [1, 1]} : vector<2x128xf32> to vector<2x32xf32>
    %cst_350 = arith.constant 5.000000e-01 : f32
    %1102 = vector.broadcast %cst_350 : f32 to vector<2x32xf32>
    %1103 = arith.mulf %1102, %1101 : vector<2x32xf32>
    %1104 = math.tanh %1103 : vector<2x32xf32>
    %cst_351 = arith.constant 1.000000e+00 : f32
    %1105 = vector.broadcast %cst_351 : f32 to vector<2x32xf32>
    %1106 = arith.addf %1104, %1105 : vector<2x32xf32>
    %cst_352 = arith.constant 5.000000e-01 : f32
    %1107 = vector.broadcast %cst_352 : f32 to vector<2x32xf32>
    %1108 = arith.mulf %1107, %1106 : vector<2x32xf32>
    %1109 = vector.extract_strided_slice %1092 {offsets = [0, 64], sizes = [2, 32], strides = [1, 1]} : vector<2x128xf32> to vector<2x32xf32>
    %1110 = math.tanh %1109 : vector<2x32xf32>
    %1111 = vector.extract_strided_slice %1092 {offsets = [0, 96], sizes = [2, 32], strides = [1, 1]} : vector<2x128xf32> to vector<2x32xf32>
    %cst_353 = arith.constant 5.000000e-01 : f32
    %1112 = vector.broadcast %cst_353 : f32 to vector<2x32xf32>
    %1113 = arith.mulf %1112, %1111 : vector<2x32xf32>
    %1114 = math.tanh %1113 : vector<2x32xf32>
    %cst_354 = arith.constant 1.000000e+00 : f32
    %1115 = vector.broadcast %cst_354 : f32 to vector<2x32xf32>
    %1116 = arith.addf %1114, %1115 : vector<2x32xf32>
    %cst_355 = arith.constant 5.000000e-01 : f32
    %1117 = vector.broadcast %cst_355 : f32 to vector<2x32xf32>
    %1118 = arith.mulf %1117, %1116 : vector<2x32xf32>
    %1119 = arith.mulf %1108, %1053 : vector<2x32xf32>
    %1120 = arith.mulf %1100, %1110 : vector<2x32xf32>
    %1121 = arith.addf %1119, %1120 : vector<2x32xf32>
    %1122 = math.tanh %1121 : vector<2x32xf32>
    %1123 = arith.mulf %1118, %1122 : vector<2x32xf32>
    %1124 = tpu.concatenate %1089, %1123 in 1 : vector<2x32xf32>, vector<2x32xf32> -> vector<2x64xf32>
    %c0_356 = arith.constant 0 : index
    %c0_357 = arith.constant 0 : index
    %1125 = vector.load %arg13[%c0_356, %c0_357] : memref<64x1xf32, #tpu.memory_space<vmem>>, vector<64x1xf32>
    %cst_358 = arith.constant dense<0.000000e+00> : vector<2x1xf32>
    %1126 = tpu.matmul %1124, %1125, %cst_358 {dimension_numbers = #tpu.dot_dimension_numbers<[1], [0], [0], [1], [0, 0, 1, 1], [], []>} : vector<2x64xf32>, vector<64x1xf32>, vector<2x1xf32> -> vector<2x1xf32>
    %c0_359 = arith.constant 0 : index
    %c0_360 = arith.constant 0 : index
    %1127 = vector.load %arg14[%c0_359, %c0_360] : memref<1x1xf32, #tpu.memory_space<vmem>>, vector<1x1xf32>
    %1128 = vector.broadcast %1127 : vector<1x1xf32> to vector<2x1xf32>
    %1129 = arith.addf %1126, %1128 : vector<2x1xf32>
    %c0_361 = arith.constant 0 : index
    %c0_362 = arith.constant 0 : index
    %1130 = vector.load %arg15[%c0_361, %c0_362] : memref<2x1xf32, #tpu.memory_space<vmem>>, vector<2x1xf32>
    tpu.vector_store %arg15[%c0_361, %c0_362], %1129 {strides = array<i32>} : memref<2x1xf32, #tpu.memory_space<vmem>>, vector<2x1xf32>,
    return
  }
}

</mosaic_0001>

<llo_original>
// kernel: rnn_forward.1
$region0: #{rnn_forward.1}
  #allocation0 [shape = 'u32[]', space=smem, size = 0x4, offset = 0x4, fixed_abs, tag = 'smem constant byte address 0x4 - core index']
  #allocation1 [shape = 'u32[144,128]{1,0:T(1,128)}', space=vmem, size = 0x12000, scoped, tag = 'internal scratch']
  #allocation2 [shape = 'f32[1,1]{1,0:T(1,128)S(1)}', space=vmem, size = 0x200, scoped, tag = 'scoped memory for rnn_forward.1']
  %s0 = inlined_call_operand.vmem [shape: f32[16,32], index: 0, kind: input, shape index: {}]
  %s1 = inlined_call_operand.vmem [shape: f32[32,128], index: 1, kind: input, shape index: {}]
  %s2 = inlined_call_operand.vmem [shape: f32[32,128], index: 2, kind: input, shape index: {}]
  %s3 = inlined_call_operand.vmem [shape: f32[1,128], index: 3, kind: input, shape index: {}]
  %s4 = inlined_call_operand.vmem [shape: f32[32,128], index: 4, kind: input, shape index: {}]
  %s5 = inlined_call_operand.vmem [shape: f32[32,128], index: 5, kind: input, shape index: {}]
  %s6 = inlined_call_operand.vmem [shape: f32[1,128], index: 6, kind: input, shape index: {}]
  %s7 = inlined_call_operand.vmem [shape: f32[64,128], index: 7, kind: input, shape index: {}]
  %s8 = inlined_call_operand.vmem [shape: f32[32,128], index: 8, kind: input, shape index: {}]
  %s9 = inlined_call_operand.vmem [shape: f32[1,128], index: 9, kind: input, shape index: {}]
  %s10 = inlined_call_operand.vmem [shape: f32[64,128], index: 10, kind: input, shape index: {}]
  %s11 = inlined_call_operand.vmem [shape: f32[32,128], index: 11, kind: input, shape index: {}]
  %s12 = inlined_call_operand.vmem [shape: f32[1,128], index: 12, kind: input, shape index: {}]
  %s13 = inlined_call_operand.vmem [shape: f32[64,1], index: 13, kind: input, shape index: {}]
  %s14 = inlined_call_operand.<no memory space> [shape: f32[1,1], index: 14, kind: input, shape index: {}]
  %s15 = inlined_call_operand.vmem [shape: f32[2,1], index: 15, kind: output, shape index: {}]
  %s16 = sld [smem:[#allocation0]]
  $region70: #{rnn_forward.1} parent=0
    _
  %s18 = ssub.s32 1, %s16
  %s19 = scalar_select 0, %s18, %s16
  %v20 = vstv %s14
  %21 = vst [vmem:[#allocation2] sm:$0x1] %v20
  // Predicated region
  $region2: #{rnn_forward.1} parent=0 // pred_check
    _
  $region3: #{rnn_forward.1} parent=0 // pred_check_branch
    %23 = sbr.rel (0) target = $region5
  $region4: #{rnn_forward.1} parent=0 // pred_region
    _
  $region5: #{rnn_forward.1} parent=0 // pred_fallthru
    _
  // Predicated region
  $region6: #{rnn_forward.1} parent=0 // pred_check
    _
  $region7: #{rnn_forward.1} parent=0 // pred_check_branch
    %25 = sbr.rel (0) target = $region9
  $region8: #{rnn_forward.1} parent=0 // pred_region
    _
  $region9: #{rnn_forward.1} parent=0 // pred_fallthru
    _
  // Predicated region
  $region10: #{rnn_forward.1} parent=0 // pred_check
    _
  $region11: #{rnn_forward.1} parent=0 // pred_check_branch
    %27 = sbr.rel (0) target = $region13
  $region12: #{rnn_forward.1} parent=0 // pred_region
    _
  $region13: #{rnn_forward.1} parent=0 // pred_fallthru
    _
  // Predicated region
  $region14: #{rnn_forward.1} parent=0 // pred_check
    _
  $region15: #{rnn_forward.1} parent=0 // pred_check_branch
    %29 = sbr.rel (0) target = $region17
  $region16: #{rnn_forward.1} parent=0 // pred_region
    _
  $region17: #{rnn_forward.1} parent=0 // pred_fallthru
    _
  // Predicated region
  $region18: #{rnn_forward.1} parent=0 // pred_check
    _
  $region19: #{rnn_forward.1} parent=0 // pred_check_branch
    %31 = sbr.rel (0) target = $region21
  $region20: #{rnn_forward.1} parent=0 // pred_region
    _
  $region21: #{rnn_forward.1} parent=0 // pred_fallthru
    _
  // Predicated region
  $region22: #{rnn_forward.1} parent=0 // pred_check
    _
  $region23: #{rnn_forward.1} parent=0 // pred_check_branch
    %33 = sbr.rel (0) target = $region25
  $region24: #{rnn_forward.1} parent=0 // pred_region
    _
  $region25: #{rnn_forward.1} parent=0 // pred_fallthru
    _
  // Predicated region
  $region26: #{rnn_forward.1} parent=0 // pred_check
    _
  $region27: #{rnn_forward.1} parent=0 // pred_check_branch
    %35 = sbr.rel (0) target = $region29
  $region28: #{rnn_forward.1} parent=0 // pred_region
    _
  $region29: #{rnn_forward.1} parent=0 // pred_fallthru
    _
  // Predicated region
  $region30: #{rnn_forward.1} parent=0 // pred_check
    _
  $region31: #{rnn_forward.1} parent=0 // pred_check_branch
    %37 = sbr.rel (0) target = $region33
  $region32: #{rnn_forward.1} parent=0 // pred_region
    _
  $region33: #{rnn_forward.1} parent=0 // pred_fallthru
    _
  // Predicated region
  $region34: #{rnn_forward.1} parent=0 // pred_check
    _
  $region35: #{rnn_forward.1} parent=0 // pred_check_branch
    %39 = sbr.rel (0) target = $region37
  $region36: #{rnn_forward.1} parent=0 // pred_region
    _
  $region37: #{rnn_forward.1} parent=0 // pred_fallthru
    _
  // Predicated region
  $region38: #{rnn_forward.1} parent=0 // pred_check
    _
  $region39: #{rnn_forward.1} parent=0 // pred_check_branch
    %41 = sbr.rel (0) target = $region41
  $region40: #{rnn_forward.1} parent=0 // pred_region
    _
  $region41: #{rnn_forward.1} parent=0 // pred_fallthru
    _
  // Predicated region
  $region42: #{rnn_forward.1} parent=0 // pred_check
    _
  $region43: #{rnn_forward.1} parent=0 // pred_check_branch
    %43 = sbr.rel (0) target = $region45
  $region44: #{rnn_forward.1} parent=0 // pred_region
    _
  $region45: #{rnn_forward.1} parent=0 // pred_fallthru
    _
  // Predicated region
  $region46: #{rnn_forward.1} parent=0 // pred_check
    _
  $region47: #{rnn_forward.1} parent=0 // pred_check_branch
    %45 = sbr.rel (0) target = $region49
  $region48: #{rnn_forward.1} parent=0 // pred_region
    _
  $region49: #{rnn_forward.1} parent=0 // pred_fallthru
    _
  // Predicated region
  $region50: #{rnn_forward.1} parent=0 // pred_check
    _
  $region51: #{rnn_forward.1} parent=0 // pred_check_branch
    %47 = sbr.rel (0) target = $region53
  $region52: #{rnn_forward.1} parent=0 // pred_region
    _
  $region53: #{rnn_forward.1} parent=0 // pred_fallthru
    _
  // Predicated region
  $region54: #{rnn_forward.1} parent=0 // pred_check
    _
  $region55: #{rnn_forward.1} parent=0 // pred_check_branch
    %49 = sbr.rel (0) target = $region57
  $region56: #{rnn_forward.1} parent=0 // pred_region
    _
  $region57: #{rnn_forward.1} parent=0 // pred_fallthru
    _
  // Predicated region
  $region58: #{rnn_forward.1} parent=0 // pred_check
    _
  $region59: #{rnn_forward.1} parent=0 // pred_check_branch
    %51 = sbr.rel (0) target = $region61
  $region60: #{rnn_forward.1} parent=0 // pred_region
    _
  $region61: #{rnn_forward.1} parent=0 // pred_fallthru
    _
  %v52 = vld [vmem:[%s0] sm:$0xff]
  %v53 = vld [vmem:[%s0 + $0x8] sm:$0xff]
  %v54 = vld [vmem:[%s1] sm:$0xff]
  %v55 = vld [vmem:[%s1 + $0x8] sm:$0xff]
  %v56 = vld [vmem:[%s1 + $0x10] sm:$0xff]
  %v57 = vld [vmem:[%s1 + $0x18] sm:$0xff]
  %v58 = vld [vmem:[%s2] sm:$0xff]
  %v59 = vld [vmem:[%s2 + $0x8] sm:$0xff]
  %v60 = vld [vmem:[%s2 + $0x10] sm:$0xff]
  %v61 = vld [vmem:[%s2 + $0x18] sm:$0xff]
  %v62 = vld [vmem:[%s3] sm:$0x1]
  %v63 = vld [vmem:[%s4] sm:$0xff]
  %v64 = vld [vmem:[%s4 + $0x8] sm:$0xff]
  %v65 = vld [vmem:[%s4 + $0x10] sm:$0xff]
  %v66 = vld [vmem:[%s4 + $0x18] sm:$0xff]
  %v67 = vld [vmem:[%s5] sm:$0xff]
  %v68 = vld [vmem:[%s5 + $0x8] sm:$0xff]
  %v69 = vld [vmem:[%s5 + $0x10] sm:$0xff]
  %v70 = vld [vmem:[%s5 + $0x18] sm:$0xff]
  %v71 = vld [vmem:[%s6] sm:$0x1]
  %v73 = vlaneseq
  %v74 = vshrl.u32 %v73, 7
  %v75 = vsub.s32 0, %v74
  %v76 = vrot.slane %v62, %v75
  %vm78 = vcmask 261120
  %v80 = vsel %vm78, %v52, 0
  %v83 = vsel %vm78, %v53, 0
  %85 = vmatprep.subr.mxu0 0.0
  %86 = vmatpush1.msra.mxu0 %v54
  %87 = vmatprep.subr.mxu0 0.0
  %88 = vmatpush1.msra.mxu0 %v55
  %89 = vmatprep.subr.mxu0 0.0
  %90 = vmatpush1.msra.mxu0 %v56
  %91 = vmatprep.subr.mxu0 0.0
  %92 = vmatpush1.msra.mxu0 %v57
  %93 = vmatprep.subr.mxu0 0.0
  %94 = vmatpush1.msra.mxu0 0.0
  %95 = vmatprep.subr.mxu0 0.0
  %96 = vmatpush1.msra.mxu0 0.0
  %97 = vmatprep.subr.mxu0 0.0
  %98 = vmatpush1.msra.mxu0 0.0
  %99 = vmatprep.subr.mxu0 0.0
  %100 = vmatpush1.msra.mxu0 0.0
  %101 = vmatprep.subr.mxu0 0.0
  %102 = vmatpush1.msra.mxu0 0.0
  %103 = vmatprep.subr.mxu0 0.0
  %104 = vmatpush1.msra.mxu0 0.0
  %105 = vmatprep.subr.mxu0 0.0
  %106 = vmatpush1.msra.mxu0 0.0
  %107 = vmatprep.subr.mxu0 0.0
  %108 = vmatpush1.msra.mxu0 0.0
  %109 = vmatprep.subr.mxu0 0.0
  %110 = vmatpush1.msra.mxu0 0.0
  %111 = vmatprep.subr.mxu0 0.0
  %112 = vmatpush1.msra.mxu0 0.0
  %113 = vmatprep.subr.mxu0 0.0
  %114 = vmatpush1.msra.mxu0 0.0
  %115 = vmatprep.subr.mxu0 0.0
  %116 = vmatpush1.msra.mxu0 0.0
  %117 = vmatprep.subr.mxu0 0.0
  %118 = vmatpush1.msra.mxu0 0.0
  %119 = vmatprep.subr.mxu0 0.0
  %120 = vmatpush1.msra.mxu0 0.0
  %121 = vmatprep.subr.mxu0 0.0
  %122 = vmatpush1.msra.mxu0 0.0
  %123 = vmatprep.subr.mxu0 0.0
  %124 = vmatpush1.msra.mxu0 0.0
  %125 = vmatprep.subr.mxu0 0.0
  %126 = vmatpush1.msra.mxu0 0.0
  %127 = vmatprep.subr.mxu0 0.0
  %128 = vmatpush1.msra.mxu0 0.0
  %129 = vmatprep.subr.mxu0 0.0
  %130 = vmatpush1.msra.mxu0 0.0
  %131 = vmatprep.subr.mxu0 0.0
  %132 = vmatpush1.msra.mxu0 0.0
  %133 = vmatprep.subr.mxu0 0.0
  %134 = vmatpush1.msra.mxu0 0.0
  %135 = vmatprep.subr.mxu0 0.0
  %136 = vmatpush1.msra.mxu0 0.0
  %137 = vmatprep.subr.mxu0 0.0
  %138 = vmatpush1.msra.mxu0 0.0
  %139 = vmatprep.subr.mxu0 0.0
  %140 = vmatpush1.msra.mxu0 0.0
  %141 = vmatprep.subr.mxu0 0.0
  %142 = vmatpush1.msra.mxu0 0.0
  %143 = vmatprep.subr.mxu0 0.0
  %144 = vmatpush1.msra.mxu0 0.0
  %145 = vmatprep.subr.mxu0 0.0
  %146 = vmatpush1.msra.mxu0 0.0
  %147 = vmatprep.subr.mxu0 0.0
  %148 = vmatpush1.msra.mxu0 0.0
  %149 = vmatprep.mubr.f32.mxu0 0.0
  %150 = vmatmul.mubr.f32.gmra.mrb[0].mxu0 %v80
  %v151 = vpop.f32.mrb[0].mxu0
  %v152 = vadd.f32 %v76, %v151
  %v153 = vpop.f32.mrb[0].mxu0
  %154 = vmatprep.mubr.f32.mxu0 0.0
  %155 = vmatmul.mubr.f32.gmra.mrb[0].mxu0 %v83
  %v156 = vpop.f32.mrb[0].mxu0
  %v157 = vadd.f32 %v76, %v156
  %v158 = vpop.f32.mrb[0].mxu0
  %159 = vdwg.mxu0
  %v161 = vlaneseq
  %v162 = vshrl.u32 %v161, 7
  %v163 = vsub.s32 0, %v162
  %v164 = vrot.slane %v71, %v163
  %166 = vmatprep.subr.mxu0 0.0
  %167 = vmatpush1.msra.mxu0 %v63
  %168 = vmatprep.subr.mxu0 0.0
  %169 = vmatpush1.msra.mxu0 %v64
  %170 = vmatprep.subr.mxu0 0.0
  %171 = vmatpush1.msra.mxu0 %v65
  %172 = vmatprep.subr.mxu0 0.0
  %173 = vmatpush1.msra.mxu0 %v66
  %174 = vmatprep.subr.mxu0 0.0
  %175 = vmatpush1.msra.mxu0 0.0
  %176 = vmatprep.subr.mxu0 0.0
  %177 = vmatpush1.msra.mxu0 0.0
  %178 = vmatprep.subr.mxu0 0.0
  %179 = vmatpush1.msra.mxu0 0.0
  %180 = vmatprep.subr.mxu0 0.0
  %181 = vmatpush1.msra.mxu0 0.0
  %182 = vmatprep.subr.mxu0 0.0
  %183 = vmatpush1.msra.mxu0 0.0
  %184 = vmatprep.subr.mxu0 0.0
  %185 = vmatpush1.msra.mxu0 0.0
  %186 = vmatprep.subr.mxu0 0.0
  %187 = vmatpush1.msra.mxu0 0.0
  %188 = vmatprep.subr.mxu0 0.0
  %189 = vmatpush1.msra.mxu0 0.0
  %190 = vmatprep.subr.mxu0 0.0
  %191 = vmatpush1.msra.mxu0 0.0
  %192 = vmatprep.subr.mxu0 0.0
  %193 = vmatpush1.msra.mxu0 0.0
  %194 = vmatprep.subr.mxu0 0.0
  %195 = vmatpush1.msra.mxu0 0.0
  %196 = vmatprep.subr.mxu0 0.0
  %197 = vmatpush1.msra.mxu0 0.0
  %198 = vmatprep.subr.mxu0 0.0
  %199 = vmatpush1.msra.mxu0 0.0
  %200 = vmatprep.subr.mxu0 0.0
  %201 = vmatpush1.msra.mxu0 0.0
  %202 = vmatprep.subr.mxu0 0.0
  %203 = vmatpush1.msra.mxu0 0.0
  %204 = vmatprep.subr.mxu0 0.0
  %205 = vmatpush1.msra.mxu0 0.0
  %206 = vmatprep.subr.mxu0 0.0
  %207 = vmatpush1.msra.mxu0 0.0
  %208 = vmatprep.subr.mxu0 0.0
  %209 = vmatpush1.msra.mxu0 0.0
  %210 = vmatprep.subr.mxu0 0.0
  %211 = vmatpush1.msra.mxu0 0.0
  %212 = vmatprep.subr.mxu0 0.0
  %213 = vmatpush1.msra.mxu0 0.0
  %214 = vmatprep.subr.mxu0 0.0
  %215 = vmatpush1.msra.mxu0 0.0
  %216 = vmatprep.subr.mxu0 0.0
  %217 = vmatpush1.msra.mxu0 0.0
  %218 = vmatprep.subr.mxu0 0.0
  %219 = vmatpush1.msra.mxu0 0.0
  %220 = vmatprep.subr.mxu0 0.0
  %221 = vmatpush1.msra.mxu0 0.0
  %222 = vmatprep.subr.mxu0 0.0
  %223 = vmatpush1.msra.mxu0 0.0
  %224 = vmatprep.subr.mxu0 0.0
  %225 = vmatpush1.msra.mxu0 0.0
  %226 = vmatprep.subr.mxu0 0.0
  %227 = vmatpush1.msra.mxu0 0.0
  %228 = vmatprep.subr.mxu0 0.0
  %229 = vmatpush1.msra.mxu0 0.0
  %230 = vmatprep.mubr.f32.mxu0 0.0
  %231 = vmatmul.mubr.f32.gmra.mrb[0].mxu0 %v80
  %v232 = vpop.f32.mrb[0].mxu0
  %v233 = vadd.f32 %v164, %v232
  %v234 = vpop.f32.mrb[0].mxu0
  %235 = vmatprep.mubr.f32.mxu0 0.0
  %236 = vmatmul.mubr.f32.gmra.mrb[0].mxu0 %v83
  %v237 = vpop.f32.mrb[0].mxu0
  %v238 = vadd.f32 %v164, %v237
  %v239 = vpop.f32.mrb[0].mxu0
  %240 = vdwg.mxu0
  %v242 = vsel %vm78, 0.0, 0
  %244 = vmatprep.subr.mxu0 0.0
  %245 = vmatpush1.msra.mxu0 %v58
  %246 = vmatprep.subr.mxu0 0.0
  %247 = vmatpush1.msra.mxu0 %v59
  %248 = vmatprep.subr.mxu0 0.0
  %249 = vmatpush1.msra.mxu0 %v60
  %250 = vmatprep.subr.mxu0 0.0
  %251 = vmatpush1.msra.mxu0 %v61
  %252 = vmatprep.subr.mxu0 0.0
  %253 = vmatpush1.msra.mxu0 0.0
  %254 = vmatprep.subr.mxu0 0.0
  %255 = vmatpush1.msra.mxu0 0.0
  %256 = vmatprep.subr.mxu0 0.0
  %257 = vmatpush1.msra.mxu0 0.0
  %258 = vmatprep.subr.mxu0 0.0
  %259 = vmatpush1.msra.mxu0 0.0
  %260 = vmatprep.subr.mxu0 0.0
  %261 = vmatpush1.msra.mxu0 0.0
  %262 = vmatprep.subr.mxu0 0.0
  %263 = vmatpush1.msra.mxu0 0.0
  %264 = vmatprep.subr.mxu0 0.0
  %265 = vmatpush1.msra.mxu0 0.0
  %266 = vmatprep.subr.mxu0 0.0
  %267 = vmatpush1.msra.mxu0 0.0
  %268 = vmatprep.subr.mxu0 0.0
  %269 = vmatpush1.msra.mxu0 0.0
  %270 = vmatprep.subr.mxu0 0.0
  %271 = vmatpush1.msra.mxu0 0.0
  %272 = vmatprep.subr.mxu0 0.0
  %273 = vmatpush1.msra.mxu0 0.0
  %274 = vmatprep.subr.mxu0 0.0
  %275 = vmatpush1.msra.mxu0 0.0
  %276 = vmatprep.subr.mxu0 0.0
  %277 = vmatpush1.msra.mxu0 0.0
  %278 = vmatprep.subr.mxu0 0.0
  %279 = vmatpush1.msra.mxu0 0.0
  %280 = vmatprep.subr.mxu0 0.0
  %281 = vmatpush1.msra.mxu0 0.0
  %282 = vmatprep.subr.mxu0 0.0
  %283 = vmatpush1.msra.mxu0 0.0
  %284 = vmatprep.subr.mxu0 0.0
  %285 = vmatpush1.msra.mxu0 0.0
  %286 = vmatprep.subr.mxu0 0.0
  %287 = vmatpush1.msra.mxu0 0.0
  %288 = vmatprep.subr.mxu0 0.0
  %289 = vmatpush1.msra.mxu0 0.0
  %290 = vmatprep.subr.mxu0 0.0
  %291 = vmatpush1.msra.mxu0 0.0
  %292 = vmatprep.subr.mxu0 0.0
  %293 = vmatpush1.msra.mxu0 0.0
  %294 = vmatprep.subr.mxu0 0.0
  %295 = vmatpush1.msra.mxu0 0.0
  %296 = vmatprep.subr.mxu0 0.0
  %297 = vmatpush1.msra.mxu0 0.0
  %298 = vmatprep.subr.mxu0 0.0
  %299 = vmatpush1.msra.mxu0 0.0
  %300 = vmatprep.subr.mxu0 0.0
  %301 = vmatpush1.msra.mxu0 0.0
  %302 = vmatprep.subr.mxu0 0.0
  %303 = vmatpush1.msra.mxu0 0.0
  %304 = vmatprep.subr.mxu0 0.0
  %305 = vmatpush1.msra.mxu0 0.0
  %306 = vmatprep.subr.mxu0 0.0
  %307 = vmatpush1.msra.mxu0 0.0
  %308 = vmatprep.mubr.f32.mxu0 0.0
  %309 = vmatmul.mubr.f32.gmra.mrb[0].mxu0 %v242
  %v310 = vpop.f32.mrb[0].mxu0
  %v311 = vadd.f32 0.0, %v310
  %v312 = vpop.f32.mrb[0].mxu0
  %313 = vdwg.mxu0
  %v314 = vadd.f32 %v152, %v311
  %v315 = vmul.f32 %v314, 0.5
  %v316 = vtanh.pop %v315
  %v317 = vadd.f32 %v316, 1.0
  %v318 = vmul.f32 %v317, 0.5
  %v319 = vtanh.pop %v314
  %v320 = vmul.f32 %v318, 0.0
  %322 = vrot.lane.b32.xlu0 %v319, 64
  %v323 = vpop.permute.xlu0 %322
  %v325 = vmul.f32 %v318, %v323
  %327 = vrot.lane.b32.xlu0 %v325, 32
  %v328 = vpop.permute.xlu0 %327
  %v330 = vadd.f32 %v320, %v328
  %v331 = vtanh.pop %v330
  %333 = vrot.lane.b32.xlu0 %v331, 64
  %v334 = vpop.permute.xlu0 %333
  %v336 = vmul.f32 %v318, %v334
  %337 = vmatprep.subr.mxu0 0.0
  %338 = vmatpush1.msra.mxu0 %v67
  %339 = vmatprep.subr.mxu0 0.0
  %340 = vmatpush1.msra.mxu0 %v68
  %341 = vmatprep.subr.mxu0 0.0
  %342 = vmatpush1.msra.mxu0 %v69
  %343 = vmatprep.subr.mxu0 0.0
  %344 = vmatpush1.msra.mxu0 %v70
  %345 = vmatprep.subr.mxu0 0.0
  %346 = vmatpush1.msra.mxu0 0.0
  %347 = vmatprep.subr.mxu0 0.0
  %348 = vmatpush1.msra.mxu0 0.0
  %349 = vmatprep.subr.mxu0 0.0
  %350 = vmatpush1.msra.mxu0 0.0
  %351 = vmatprep.subr.mxu0 0.0
  %352 = vmatpush1.msra.mxu0 0.0
  %353 = vmatprep.subr.mxu0 0.0
  %354 = vmatpush1.msra.mxu0 0.0
  %355 = vmatprep.subr.mxu0 0.0
  %356 = vmatpush1.msra.mxu0 0.0
  %357 = vmatprep.subr.mxu0 0.0
  %358 = vmatpush1.msra.mxu0 0.0
  %359 = vmatprep.subr.mxu0 0.0
  %360 = vmatpush1.msra.mxu0 0.0
  %361 = vmatprep.subr.mxu0 0.0
  %362 = vmatpush1.msra.mxu0 0.0
  %363 = vmatprep.subr.mxu0 0.0
  %364 = vmatpush1.msra.mxu0 0.0
  %365 = vmatprep.subr.mxu0 0.0
  %366 = vmatpush1.msra.mxu0 0.0
  %367 = vmatprep.subr.mxu0 0.0
  %368 = vmatpush1.msra.mxu0 0.0
  %369 = vmatprep.subr.mxu0 0.0
  %370 = vmatpush1.msra.mxu0 0.0
  %371 = vmatprep.subr.mxu0 0.0
  %372 = vmatpush1.msra.mxu0 0.0
  %373 = vmatprep.subr.mxu0 0.0
  %374 = vmatpush1.msra.mxu0 0.0
  %375 = vmatprep.subr.mxu0 0.0
  %376 = vmatpush1.msra.mxu0 0.0
  %377 = vmatprep.subr.mxu0 0.0
  %378 = vmatpush1.msra.mxu0 0.0
  %379 = vmatprep.subr.mxu0 0.0
  %380 = vmatpush1.msra.mxu0 0.0
  %381 = vmatprep.subr.mxu0 0.0
  %382 = vmatpush1.msra.mxu0 0.0
  %383 = vmatprep.subr.mxu0 0.0
  %384 = vmatpush1.msra.mxu0 0.0
  %385 = vmatprep.subr.mxu0 0.0
  %386 = vmatpush1.msra.mxu0 0.0
  %387 = vmatprep.subr.mxu0 0.0
  %388 = vmatpush1.msra.mxu0 0.0
  %389 = vmatprep.subr.mxu0 0.0
  %390 = vmatpush1.msra.mxu0 0.0
  %391 = vmatprep.subr.mxu0 0.0
  %392 = vmatpush1.msra.mxu0 0.0
  %393 = vmatprep.subr.mxu0 0.0
  %394 = vmatpush1.msra.mxu0 0.0
  %395 = vmatprep.subr.mxu0 0.0
  %396 = vmatpush1.msra.mxu0 0.0
  %397 = vmatprep.subr.mxu0 0.0
  %398 = vmatpush1.msra.mxu0 0.0
  %399 = vmatprep.subr.mxu0 0.0
  %400 = vmatpush1.msra.mxu0 0.0
  %401 = vmatprep.mubr.f32.mxu0 0.0
  %402 = vmatmul.mubr.f32.gmra.mrb[0].mxu0 %v242
  %v403 = vpop.f32.mrb[0].mxu0
  %v404 = vadd.f32 0.0, %v403
  %v405 = vpop.f32.mrb[0].mxu0
  %406 = vdwg.mxu0
  %v408 = vrot.slane %v404, 2
  %v410 = vadd.f32 %v238, %v408
  %v411 = vmul.f32 %v410, 0.5
  %v412 = vtanh.pop %v411
  %v413 = vadd.f32 %v412, 1.0
  %v414 = vmul.f32 %v413, 0.5
  %v415 = vtanh.pop %v410
  %v416 = vmul.f32 %v414, 0.0
  %418 = vrot.lane.b32.xlu0 %v415, 64
  %v419 = vpop.permute.xlu0 %418
  %v421 = vmul.f32 %v414, %v419
  %423 = vrot.lane.b32.xlu0 %v421, 32
  %v424 = vpop.permute.xlu0 %423
  %v426 = vadd.f32 %v416, %v424
  %v427 = vtanh.pop %v426
  %429 = vrot.lane.b32.xlu0 %v427, 64
  %v430 = vpop.permute.xlu0 %429
  %v432 = vmul.f32 %v414, %v430
  %434 = vrot.lane.b32.xlu0 %v336, 32
  %v435 = vpop.permute.xlu0 %434
  %v436 = vsel %vm78, %v435, 0
  %438 = vmatprep.subr.mxu0 0.0
  %439 = vmatpush1.msra.mxu0 %v58
  %440 = vmatprep.subr.mxu0 0.0
  %441 = vmatpush1.msra.mxu0 %v59
  %442 = vmatprep.subr.mxu0 0.0
  %443 = vmatpush1.msra.mxu0 %v60
  %444 = vmatprep.subr.mxu0 0.0
  %445 = vmatpush1.msra.mxu0 %v61
  %446 = vmatprep.subr.mxu0 0.0
  %447 = vmatpush1.msra.mxu0 0.0
  %448 = vmatprep.subr.mxu0 0.0
  %449 = vmatpush1.msra.mxu0 0.0
  %450 = vmatprep.subr.mxu0 0.0
  %451 = vmatpush1.msra.mxu0 0.0
  %452 = vmatprep.subr.mxu0 0.0
  %453 = vmatpush1.msra.mxu0 0.0
  %454 = vmatprep.subr.mxu0 0.0
  %455 = vmatpush1.msra.mxu0 0.0
  %456 = vmatprep.subr.mxu0 0.0
  %457 = vmatpush1.msra.mxu0 0.0
  %458 = vmatprep.subr.mxu0 0.0
  %459 = vmatpush1.msra.mxu0 0.0
  %460 = vmatprep.subr.mxu0 0.0
  %461 = vmatpush1.msra.mxu0 0.0
  %462 = vmatprep.subr.mxu0 0.0
  %463 = vmatpush1.msra.mxu0 0.0
  %464 = vmatprep.subr.mxu0 0.0
  %465 = vmatpush1.msra.mxu0 0.0
  %466 = vmatprep.subr.mxu0 0.0
  %467 = vmatpush1.msra.mxu0 0.0
  %468 = vmatprep.subr.mxu0 0.0
  %469 = vmatpush1.msra.mxu0 0.0
  %470 = vmatprep.subr.mxu0 0.0
  %471 = vmatpush1.msra.mxu0 0.0
  %472 = vmatprep.subr.mxu0 0.0
  %473 = vmatpush1.msra.mxu0 0.0
  %474 = vmatprep.subr.mxu0 0.0
  %475 = vmatpush1.msra.mxu0 0.0
  %476 = vmatprep.subr.mxu0 0.0
  %477 = vmatpush1.msra.mxu0 0.0
  %478 = vmatprep.subr.mxu0 0.0
  %479 = vmatpush1.msra.mxu0 0.0
  %480 = vmatprep.subr.mxu0 0.0
  %481 = vmatpush1.msra.mxu0 0.0
  %482 = vmatprep.subr.mxu0 0.0
  %483 = vmatpush1.msra.mxu0 0.0
  %484 = vmatprep.subr.mxu0 0.0
  %485 = vmatpush1.msra.mxu0 0.0
  %486 = vmatprep.subr.mxu0 0.0
  %487 = vmatpush1.msra.mxu0 0.0
  %488 = vmatprep.subr.mxu0 0.0
  %489 = vmatpush1.msra.mxu0 0.0
  %490 = vmatprep.subr.mxu0 0.0
  %491 = vmatpush1.msra.mxu0 0.0
  %492 = vmatprep.subr.mxu0 0.0
  %493 = vmatpush1.msra.mxu0 0.0
  %494 = vmatprep.subr.mxu0 0.0
  %495 = vmatpush1.msra.mxu0 0.0
  %496 = vmatprep.subr.mxu0 0.0
  %497 = vmatpush1.msra.mxu0 0.0
  %498 = vmatprep.subr.mxu0 0.0
  %499 = vmatpush1.msra.mxu0 0.0
  %500 = vmatprep.subr.mxu0 0.0
  %501 = vmatpush1.msra.mxu0 0.0
  %502 = vmatprep.mubr.f32.mxu0 0.0
  %503 = vmatmul.mubr.f32.gmra.mrb[0].mxu0 %v436
  %v504 = vpop.f32.mrb[0].mxu0
  %v505 = vadd.f32 0.0, %v504
  %v506 = vpop.f32.mrb[0].mxu0
  %507 = vdwg.mxu0
  %v509 = vrot.slane %v505, 6
  %v511 = vadd.f32 %v152, %v509
  %v512 = vmul.f32 %v511, 0.5
  %v513 = vtanh.pop %v512
  %v514 = vadd.f32 %v513, 1.0
  %v515 = vmul.f32 %v514, 0.5
  %v516 = vtanh.pop %v511
  %v518 = vrot.slane %v330, 6
  %v520 = vmul.f32 %v515, %v518
  %522 = vrot.lane.b32.xlu0 %v516, 64
  %v523 = vpop.permute.xlu0 %522
  %v525 = vmul.f32 %v515, %v523
  %527 = vrot.lane.b32.xlu0 %v525, 32
  %v528 = vpop.permute.xlu0 %527
  %v530 = vadd.f32 %v520, %v528
  %v531 = vtanh.pop %v530
  %533 = vrot.lane.b32.xlu0 %v531, 64
  %v534 = vpop.permute.xlu0 %533
  %v536 = vmul.f32 %v515, %v534
  %v538 = vrot.slane %v432, 6
  %539 = vrot.lane.b32.xlu0 %v538, 32
  %v540 = vpop.permute.xlu0 %539
  %v541 = vsel %vm78, %v540, 0
  %543 = vmatprep.subr.mxu0 0.0
  %544 = vmatpush1.msra.mxu0 %v67
  %545 = vmatprep.subr.mxu0 0.0
  %546 = vmatpush1.msra.mxu0 %v68
  %547 = vmatprep.subr.mxu0 0.0
  %548 = vmatpush1.msra.mxu0 %v69
  %549 = vmatprep.subr.mxu0 0.0
  %550 = vmatpush1.msra.mxu0 %v70
  %551 = vmatprep.subr.mxu0 0.0
  %552 = vmatpush1.msra.mxu0 0.0
  %553 = vmatprep.subr.mxu0 0.0
  %554 = vmatpush1.msra.mxu0 0.0
  %555 = vmatprep.subr.mxu0 0.0
  %556 = vmatpush1.msra.mxu0 0.0
  %557 = vmatprep.subr.mxu0 0.0
  %558 = vmatpush1.msra.mxu0 0.0
  %559 = vmatprep.subr.mxu0 0.0
  %560 = vmatpush1.msra.mxu0 0.0
  %561 = vmatprep.subr.mxu0 0.0
  %562 = vmatpush1.msra.mxu0 0.0
  %563 = vmatprep.subr.mxu0 0.0
  %564 = vmatpush1.msra.mxu0 0.0
  %565 = vmatprep.subr.mxu0 0.0
  %566 = vmatpush1.msra.mxu0 0.0
  %567 = vmatprep.subr.mxu0 0.0
  %568 = vmatpush1.msra.mxu0 0.0
  %569 = vmatprep.subr.mxu0 0.0
  %570 = vmatpush1.msra.mxu0 0.0
  %571 = vmatprep.subr.mxu0 0.0
  %572 = vmatpush1.msra.mxu0 0.0
  %573 = vmatprep.subr.mxu0 0.0
  %574 = vmatpush1.msra.mxu0 0.0
  %575 = vmatprep.subr.mxu0 0.0
  %576 = vmatpush1.msra.mxu0 0.0
  %577 = vmatprep.subr.mxu0 0.0
  %578 = vmatpush1.msra.mxu0 0.0
  %579 = vmatprep.subr.mxu0 0.0
  %580 = vmatpush1.msra.mxu0 0.0
  %581 = vmatprep.subr.mxu0 0.0
  %582 = vmatpush1.msra.mxu0 0.0
  %583 = vmatprep.subr.mxu0 0.0
  %584 = vmatpush1.msra.mxu0 0.0
  %585 = vmatprep.subr.mxu0 0.0
  %586 = vmatpush1.msra.mxu0 0.0
  %587 = vmatprep.subr.mxu0 0.0
  %588 = vmatpush1.msra.mxu0 0.0
  %589 = vmatprep.subr.mxu0 0.0
  %590 = vmatpush1.msra.mxu0 0.0
  %591 = vmatprep.subr.mxu0 0.0
  %592 = vmatpush1.msra.mxu0 0.0
  %593 = vmatprep.subr.mxu0 0.0
  %594 = vmatpush1.msra.mxu0 0.0
  %595 = vmatprep.subr.mxu0 0.0
  %596 = vmatpush1.msra.mxu0 0.0
  %597 = vmatprep.subr.mxu0 0.0
  %598 = vmatpush1.msra.mxu0 0.0
  %599 = vmatprep.subr.mxu0 0.0
  %600 = vmatpush1.msra.mxu0 0.0
  %601 = vmatprep.subr.mxu0 0.0
  %602 = vmatpush1.msra.mxu0 0.0
  %603 = vmatprep.subr.mxu0 0.0
  %604 = vmatpush1.msra.mxu0 0.0
  %605 = vmatprep.subr.mxu0 0.0
  %606 = vmatpush1.msra.mxu0 0.0
  %607 = vmatprep.mubr.f32.mxu0 0.0
  %608 = vmatmul.mubr.f32.gmra.mrb[0].mxu0 %v541
  %v609 = vpop.f32.mrb[0].mxu0
  %v610 = vadd.f32 0.0, %v609
  %v611 = vpop.f32.mrb[0].mxu0
  %612 = vdwg.mxu0
  %v614 = vrot.slane %v610, 4
  %v616 = vadd.f32 %v238, %v614
  %v617 = vmul.f32 %v616, 0.5
  %v618 = vtanh.pop %v617
  %v619 = vadd.f32 %v618, 1.0
  %v620 = vmul.f32 %v619, 0.5
  %v621 = vtanh.pop %v616
  %v623 = vrot.slane %v426, 2
  %v625 = vmul.f32 %v620, %v623
  %627 = vrot.lane.b32.xlu0 %v621, 64
  %v628 = vpop.permute.xlu0 %627
  %v630 = vmul.f32 %v620, %v628
  %632 = vrot.lane.b32.xlu0 %v630, 32
  %v633 = vpop.permute.xlu0 %632
  %v635 = vadd.f32 %v625, %v633
  %v636 = vtanh.pop %v635
  %638 = vrot.lane.b32.xlu0 %v636, 64
  %v639 = vpop.permute.xlu0 %638
  %v641 = vmul.f32 %v620, %v639
  %v643 = vrot.slane %v536, 2
  %644 = vrot.lane.b32.xlu0 %v643, 32
  %v645 = vpop.permute.xlu0 %644
  %v646 = vsel %vm78, %v645, 0
  %648 = vmatprep.subr.mxu0 0.0
  %649 = vmatpush1.msra.mxu0 %v58
  %650 = vmatprep.subr.mxu0 0.0
  %651 = vmatpush1.msra.mxu0 %v59
  %652 = vmatprep.subr.mxu0 0.0
  %653 = vmatpush1.msra.mxu0 %v60
  %654 = vmatprep.subr.mxu0 0.0
  %655 = vmatpush1.msra.mxu0 %v61
  %656 = vmatprep.subr.mxu0 0.0
  %657 = vmatpush1.msra.mxu0 0.0
  %658 = vmatprep.subr.mxu0 0.0
  %659 = vmatpush1.msra.mxu0 0.0
  %660 = vmatprep.subr.mxu0 0.0
  %661 = vmatpush1.msra.mxu0 0.0
  %662 = vmatprep.subr.mxu0 0.0
  %663 = vmatpush1.msra.mxu0 0.0
  %664 = vmatprep.subr.mxu0 0.0
  %665 = vmatpush1.msra.mxu0 0.0
  %666 = vmatprep.subr.mxu0 0.0
  %667 = vmatpush1.msra.mxu0 0.0
  %668 = vmatprep.subr.mxu0 0.0
  %669 = vmatpush1.msra.mxu0 0.0
  %670 = vmatprep.subr.mxu0 0.0
  %671 = vmatpush1.msra.mxu0 0.0
  %672 = vmatprep.subr.mxu0 0.0
  %673 = vmatpush1.msra.mxu0 0.0
  %674 = vmatprep.subr.mxu0 0.0
  %675 = vmatpush1.msra.mxu0 0.0
  %676 = vmatprep.subr.mxu0 0.0
  %677 = vmatpush1.msra.mxu0 0.0
  %678 = vmatprep.subr.mxu0 0.0
  %679 = vmatpush1.msra.mxu0 0.0
  %680 = vmatprep.subr.mxu0 0.0
  %681 = vmatpush1.msra.mxu0 0.0
  %682 = vmatprep.subr.mxu0 0.0
  %683 = vmatpush1.msra.mxu0 0.0
  %684 = vmatprep.subr.mxu0 0.0
  %685 = vmatpush1.msra.mxu0 0.0
  %686 = vmatprep.subr.mxu0 0.0
  %687 = vmatpush1.msra.mxu0 0.0
  %688 = vmatprep.subr.mxu0 0.0
  %689 = vmatpush1.msra.mxu0 0.0
  %690 = vmatprep.subr.mxu0 0.0
  %691 = vmatpush1.msra.mxu0 0.0
  %692 = vmatprep.subr.mxu0 0.0
  %693 = vmatpush1.msra.mxu0 0.0
  %694 = vmatprep.subr.mxu0 0.0
  %695 = vmatpush1.msra.mxu0 0.0
  %696 = vmatprep.subr.mxu0 0.0
  %697 = vmatpush1.msra.mxu0 0.0
  %698 = vmatprep.subr.mxu0 0.0
  %699 = vmatpush1.msra.mxu0 0.0
  %700 = vmatprep.subr.mxu0 0.0
  %701 = vmatpush1.msra.mxu0 0.0
  %702 = vmatprep.subr.mxu0 0.0
  %703 = vmatpush1.msra.mxu0 0.0
  %704 = vmatprep.subr.mxu0 0.0
  %705 = vmatpush1.msra.mxu0 0.0
  %706 = vmatprep.subr.mxu0 0.0
  %707 = vmatpush1.msra.mxu0 0.0
  %708 = vmatprep.subr.mxu0 0.0
  %709 = vmatpush1.msra.mxu0 0.0
  %710 = vmatprep.subr.mxu0 0.0
  %711 = vmatpush1.msra.mxu0 0.0
  %712 = vmatprep.mubr.f32.mxu0 0.0
  %713 = vmatmul.mubr.f32.gmra.mrb[0].mxu0 %v646
  %v714 = vpop.f32.mrb[0].mxu0
  %v715 = vadd.f32 0.0, %v714
  %v716 = vpop.f32.mrb[0].mxu0
  %717 = vdwg.mxu0
  %v719 = vrot.slane %v715, 4
  %v721 = vadd.f32 %v152, %v719
  %v722 = vmul.f32 %v721, 0.5
  %v723 = vtanh.pop %v722
  %v724 = vadd.f32 %v723, 1.0
  %v725 = vmul.f32 %v724, 0.5
  %v726 = vtanh.pop %v721
  %v728 = vrot.slane %v530, 6
  %v730 = vmul.f32 %v725, %v728
  %732 = vrot.lane.b32.xlu0 %v726, 64
  %v733 = vpop.permute.xlu0 %732
  %v735 = vmul.f32 %v725, %v733
  %737 = vrot.lane.b32.xlu0 %v735, 32
  %v738 = vpop.permute.xlu0 %737
  %v740 = vadd.f32 %v730, %v738
  %v741 = vtanh.pop %v740
  %743 = vrot.lane.b32.xlu0 %v741, 64
  %v744 = vpop.permute.xlu0 %743
  %v746 = vmul.f32 %v725, %v744
  %v748 = vrot.slane %v641, 4
  %749 = vrot.lane.b32.xlu0 %v748, 32
  %v750 = vpop.permute.xlu0 %749
  %v751 = vsel %vm78, %v750, 0
  %753 = vmatprep.subr.mxu0 0.0
  %754 = vmatpush1.msra.mxu0 %v67
  %755 = vmatprep.subr.mxu0 0.0
  %756 = vmatpush1.msra.mxu0 %v68
  %757 = vmatprep.subr.mxu0 0.0
  %758 = vmatpush1.msra.mxu0 %v69
  %759 = vmatprep.subr.mxu0 0.0
  %760 = vmatpush1.msra.mxu0 %v70
  %761 = vmatprep.subr.mxu0 0.0
  %762 = vmatpush1.msra.mxu0 0.0
  %763 = vmatprep.subr.mxu0 0.0
  %764 = vmatpush1.msra.mxu0 0.0
  %765 = vmatprep.subr.mxu0 0.0
  %766 = vmatpush1.msra.mxu0 0.0
  %767 = vmatprep.subr.mxu0 0.0
  %768 = vmatpush1.msra.mxu0 0.0
  %769 = vmatprep.subr.mxu0 0.0
  %770 = vmatpush1.msra.mxu0 0.0
  %771 = vmatprep.subr.mxu0 0.0
  %772 = vmatpush1.msra.mxu0 0.0
  %773 = vmatprep.subr.mxu0 0.0
  %774 = vmatpush1.msra.mxu0 0.0
  %775 = vmatprep.subr.mxu0 0.0
  %776 = vmatpush1.msra.mxu0 0.0
  %777 = vmatprep.subr.mxu0 0.0
  %778 = vmatpush1.msra.mxu0 0.0
  %779 = vmatprep.subr.mxu0 0.0
  %780 = vmatpush1.msra.mxu0 0.0
  %781 = vmatprep.subr.mxu0 0.0
  %782 = vmatpush1.msra.mxu0 0.0
  %783 = vmatprep.subr.mxu0 0.0
  %784 = vmatpush1.msra.mxu0 0.0
  %785 = vmatprep.subr.mxu0 0.0
  %786 = vmatpush1.msra.mxu0 0.0
  %787 = vmatprep.subr.mxu0 0.0
  %788 = vmatpush1.msra.mxu0 0.0
  %789 = vmatprep.subr.mxu0 0.0
  %790 = vmatpush1.msra.mxu0 0.0
  %791 = vmatprep.subr.mxu0 0.0
  %792 = vmatpush1.msra.mxu0 0.0
  %793 = vmatprep.subr.mxu0 0.0
  %794 = vmatpush1.msra.mxu0 0.0
  %795 = vmatprep.subr.mxu0 0.0
  %796 = vmatpush1.msra.mxu0 0.0
  %797 = vmatprep.subr.mxu0 0.0
  %798 = vmatpush1.msra.mxu0 0.0
  %799 = vmatprep.subr.mxu0 0.0
  %800 = vmatpush1.msra.mxu0 0.0
  %801 = vmatprep.subr.mxu0 0.0
  %802 = vmatpush1.msra.mxu0 0.0
  %803 = vmatprep.subr.mxu0 0.0
  %804 = vmatpush1.msra.mxu0 0.0
  %805 = vmatprep.subr.mxu0 0.0
  %806 = vmatpush1.msra.mxu0 0.0
  %807 = vmatprep.subr.mxu0 0.0
  %808 = vmatpush1.msra.mxu0 0.0
  %809 = vmatprep.subr.mxu0 0.0
  %810 = vmatpush1.msra.mxu0 0.0
  %811 = vmatprep.subr.mxu0 0.0
  %812 = vmatpush1.msra.mxu0 0.0
  %813 = vmatprep.subr.mxu0 0.0
  %814 = vmatpush1.msra.mxu0 0.0
  %815 = vmatprep.subr.mxu0 0.0
  %816 = vmatpush1.msra.mxu0 0.0
  %817 = vmatprep.mubr.f32.mxu0 0.0
  %818 = vmatmul.mubr.f32.gmra.mrb[0].mxu0 %v751
  %v819 = vpop.f32.mrb[0].mxu0
  %v820 = vadd.f32 0.0, %v819
  %v821 = vpop.f32.mrb[0].mxu0
  %822 = vdwg.mxu0
  %v824 = vrot.slane %v820, 6
  %v826 = vadd.f32 %v238, %v824
  %v827 = vmul.f32 %v826, 0.5
  %v828 = vtanh.pop %v827
  %v829 = vadd.f32 %v828, 1.0
  %v830 = vmul.f32 %v829, 0.5
  %v831 = vtanh.pop %v826
  %v833 = vrot.slane %v635, 2
  %v835 = vmul.f32 %v830, %v833
  %837 = vrot.lane.b32.xlu0 %v831, 64
  %v838 = vpop.permute.xlu0 %837
  %v840 = vmul.f32 %v830, %v838
  %842 = vrot.lane.b32.xlu0 %v840, 32
  %v843 = vpop.permute.xlu0 %842
  %v845 = vadd.f32 %v835, %v843
  %v846 = vtanh.pop %v845
  %848 = vrot.lane.b32.xlu0 %v846, 64
  %v849 = vpop.permute.xlu0 %848
  %v851 = vmul.f32 %v830, %v849
  %v853 = vrot.slane %v746, 4
  %854 = vrot.lane.b32.xlu0 %v853, 32
  %v855 = vpop.permute.xlu0 %854
  %v856 = vsel %vm78, %v855, 0
  %858 = vmatprep.subr.mxu0 0.0
  %859 = vmatpush1.msra.mxu0 %v58
  %860 = vmatprep.subr.mxu0 0.0
  %861 = vmatpush1.msra.mxu0 %v59
  %862 = vmatprep.subr.mxu0 0.0
  %863 = vmatpush1.msra.mxu0 %v60
  %864 = vmatprep.subr.mxu0 0.0
  %865 = vmatpush1.msra.mxu0 %v61
  %866 = vmatprep.subr.mxu0 0.0
  %867 = vmatpush1.msra.mxu0 0.0
  %868 = vmatprep.subr.mxu0 0.0
  %869 = vmatpush1.msra.mxu0 0.0
  %870 = vmatprep.subr.mxu0 0.0
  %871 = vmatpush1.msra.mxu0 0.0
  %872 = vmatprep.subr.mxu0 0.0
  %873 = vmatpush1.msra.mxu0 0.0
  %874 = vmatprep.subr.mxu0 0.0
  %875 = vmatpush1.msra.mxu0 0.0
  %876 = vmatprep.subr.mxu0 0.0
  %877 = vmatpush1.msra.mxu0 0.0
  %878 = vmatprep.subr.mxu0 0.0
  %879 = vmatpush1.msra.mxu0 0.0
  %880 = vmatprep.subr.mxu0 0.0
  %881 = vmatpush1.msra.mxu0 0.0
  %882 = vmatprep.subr.mxu0 0.0
  %883 = vmatpush1.msra.mxu0 0.0
  %884 = vmatprep.subr.mxu0 0.0
  %885 = vmatpush1.msra.mxu0 0.0
  %886 = vmatprep.subr.mxu0 0.0
  %887 = vmatpush1.msra.mxu0 0.0
  %888 = vmatprep.subr.mxu0 0.0
  %889 = vmatpush1.msra.mxu0 0.0
  %890 = vmatprep.subr.mxu0 0.0
  %891 = vmatpush1.msra.mxu0 0.0
  %892 = vmatprep.subr.mxu0 0.0
  %893 = vmatpush1.msra.mxu0 0.0
  %894 = vmatprep.subr.mxu0 0.0
  %895 = vmatpush1.msra.mxu0 0.0
  %896 = vmatprep.subr.mxu0 0.0
  %897 = vmatpush1.msra.mxu0 0.0
  %898 = vmatprep.subr.mxu0 0.0
  %899 = vmatpush1.msra.mxu0 0.0
  %900 = vmatprep.subr.mxu0 0.0
  %901 = vmatpush1.msra.mxu0 0.0
  %902 = vmatprep.subr.mxu0 0.0
  %903 = vmatpush1.msra.mxu0 0.0
  %904 = vmatprep.subr.mxu0 0.0
  %905 = vmatpush1.msra.mxu0 0.0
  %906 = vmatprep.subr.mxu0 0.0
  %907 = vmatpush1.msra.mxu0 0.0
  %908 = vmatprep.subr.mxu0 0.0
  %909 = vmatpush1.msra.mxu0 0.0
  %910 = vmatprep.subr.mxu0 0.0
  %911 = vmatpush1.msra.mxu0 0.0
  %912 = vmatprep.subr.mxu0 0.0
  %913 = vmatpush1.msra.mxu0 0.0
  %914 = vmatprep.subr.mxu0 0.0
  %915 = vmatpush1.msra.mxu0 0.0
  %916 = vmatprep.subr.mxu0 0.0
  %917 = vmatpush1.msra.mxu0 0.0
  %918 = vmatprep.subr.mxu0 0.0
  %919 = vmatpush1.msra.mxu0 0.0
  %920 = vmatprep.subr.mxu0 0.0
  %921 = vmatpush1.msra.mxu0 0.0
  %922 = vmatprep.mubr.f32.mxu0 0.0
  %923 = vmatmul.mubr.f32.gmra.mrb[0].mxu0 %v856
  %v924 = vpop.f32.mrb[0].mxu0
  %v925 = vadd.f32 0.0, %v924
  %v926 = vpop.f32.mrb[0].mxu0
  %927 = vdwg.mxu0
  %v929 = vrot.slane %v925, 2
  %v931 = vadd.f32 %v152, %v929
  %v932 = vmul.f32 %v931, 0.5
  %v933 = vtanh.pop %v932
  %v934 = vadd.f32 %v933, 1.0
  %v935 = vmul.f32 %v934, 0.5
  %v936 = vtanh.pop %v931
  %v938 = vrot.slane %v740, 6
  %v940 = vmul.f32 %v935, %v938
  %942 = vrot.lane.b32.xlu0 %v936, 64
  %v943 = vpop.permute.xlu0 %942
  %v945 = vmul.f32 %v935, %v943
  %947 = vrot.lane.b32.xlu0 %v945, 32
  %v948 = vpop.permute.xlu0 %947
  %v950 = vadd.f32 %v940, %v948
  %v951 = vtanh.pop %v950
  %953 = vrot.lane.b32.xlu0 %v951, 64
  %v954 = vpop.permute.xlu0 %953
  %v956 = vmul.f32 %v935, %v954
  %v958 = vrot.slane %v851, 2
  %959 = vrot.lane.b32.xlu0 %v958, 32
  %v960 = vpop.permute.xlu0 %959
  %v961 = vsel %vm78, %v960, 0
  %963 = vmatprep.subr.mxu0 0.0
  %964 = vmatpush1.msra.mxu0 %v67
  %965 = vmatprep.subr.mxu0 0.0
  %966 = vmatpush1.msra.mxu0 %v68
  %967 = vmatprep.subr.mxu0 0.0
  %968 = vmatpush1.msra.mxu0 %v69
  %969 = vmatprep.subr.mxu0 0.0
  %970 = vmatpush1.msra.mxu0 %v70
  %971 = vmatprep.subr.mxu0 0.0
  %972 = vmatpush1.msra.mxu0 0.0
  %973 = vmatprep.subr.mxu0 0.0
  %974 = vmatpush1.msra.mxu0 0.0
  %975 = vmatprep.subr.mxu0 0.0
  %976 = vmatpush1.msra.mxu0 0.0
  %977 = vmatprep.subr.mxu0 0.0
  %978 = vmatpush1.msra.mxu0 0.0
  %979 = vmatprep.subr.mxu0 0.0
  %980 = vmatpush1.msra.mxu0 0.0
  %981 = vmatprep.subr.mxu0 0.0
  %982 = vmatpush1.msra.mxu0 0.0
  %983 = vmatprep.subr.mxu0 0.0
  %984 = vmatpush1.msra.mxu0 0.0
  %985 = vmatprep.subr.mxu0 0.0
  %986 = vmatpush1.msra.mxu0 0.0
  %987 = vmatprep.subr.mxu0 0.0
  %988 = vmatpush1.msra.mxu0 0.0
  %989 = vmatprep.subr.mxu0 0.0
  %990 = vmatpush1.msra.mxu0 0.0
  %991 = vmatprep.subr.mxu0 0.0
  %992 = vmatpush1.msra.mxu0 0.0
  %993 = vmatprep.subr.mxu0 0.0
  %994 = vmatpush1.msra.mxu0 0.0
  %995 = vmatprep.subr.mxu0 0.0
  %996 = vmatpush1.msra.mxu0 0.0
  %997 = vmatprep.subr.mxu0 0.0
  %998 = vmatpush1.msra.mxu0 0.0
  %999 = vmatprep.subr.mxu0 0.0
  %1000 = vmatpush1.msra.mxu0 0.0
  %1001 = vmatprep.subr.mxu0 0.0
  %1002 = vmatpush1.msra.mxu0 0.0
  %1003 = vmatprep.subr.mxu0 0.0
  %1004 = vmatpush1.msra.mxu0 0.0
  %1005 = vmatprep.subr.mxu0 0.0
  %1006 = vmatpush1.msra.mxu0 0.0
  %1007 = vmatprep.subr.mxu0 0.0
  %1008 = vmatpush1.msra.mxu0 0.0
  %1009 = vmatprep.subr.mxu0 0.0
  %1010 = vmatpush1.msra.mxu0 0.0
  %1011 = vmatprep.subr.mxu0 0.0
  %1012 = vmatpush1.msra.mxu0 0.0
  %1013 = vmatprep.subr.mxu0 0.0
  %1014 = vmatpush1.msra.mxu0 0.0
  %1015 = vmatprep.subr.mxu0 0.0
  %1016 = vmatpush1.msra.mxu0 0.0
  %1017 = vmatprep.subr.mxu0 0.0
  %1018 = vmatpush1.msra.mxu0 0.0
  %1019 = vmatprep.subr.mxu0 0.0
  %1020 = vmatpush1.msra.mxu0 0.0
  %1021 = vmatprep.subr.mxu0 0.0
  %1022 = vmatpush1.msra.mxu0 0.0
  %1023 = vmatprep.subr.mxu0 0.0
  %1024 = vmatpush1.msra.mxu0 0.0
  %1025 = vmatprep.subr.mxu0 0.0
  %1026 = vmatpush1.msra.mxu0 0.0
  %1027 = vmatprep.mubr.f32.mxu0 0.0
  %1028 = vmatmul.mubr.f32.gmra.mrb[0].mxu0 %v961
  %v1029 = vpop.f32.mrb[0].mxu0
  %v1030 = vadd.f32 0.0, %v1029
  %v1031 = vpop.f32.mrb[0].mxu0
  %1032 = vdwg.mxu0
  %v1033 = vadd.f32 %v238, %v1030
  %v1034 = vmul.f32 %v1033, 0.5
  %v1035 = vtanh.pop %v1034
  %v1036 = vadd.f32 %v1035, 1.0
  %v1037 = vmul.f32 %v1036, 0.5
  %v1038 = vtanh.pop %v1033
  %v1040 = vrot.slane %v845, 2
  %v1042 = vmul.f32 %v1037, %v1040
  %1044 = vrot.lane.b32.xlu0 %v1038, 64
  %v1045 = vpop.permute.xlu0 %1044
  %v1047 = vmul.f32 %v1037, %v1045
  %1049 = vrot.lane.b32.xlu0 %v1047, 32
  %v1050 = vpop.permute.xlu0 %1049
  %v1052 = vadd.f32 %v1042, %v1050
  %v1053 = vtanh.pop %v1052
  %1055 = vrot.lane.b32.xlu0 %v1053, 64
  %v1056 = vpop.permute.xlu0 %1055
  %v1058 = vmul.f32 %v1037, %v1056
  %v1060 = vrot.slane %v956, 6
  %1061 = vrot.lane.b32.xlu0 %v1060, 32
  %v1062 = vpop.permute.xlu0 %1061
  %v1063 = vsel %vm78, %v1062, 0
  %1065 = vmatprep.subr.mxu0 0.0
  %1066 = vmatpush1.msra.mxu0 %v58
  %1067 = vmatprep.subr.mxu0 0.0
  %1068 = vmatpush1.msra.mxu0 %v59
  %1069 = vmatprep.subr.mxu0 0.0
  %1070 = vmatpush1.msra.mxu0 %v60
  %1071 = vmatprep.subr.mxu0 0.0
  %1072 = vmatpush1.msra.mxu0 %v61
  %1073 = vmatprep.subr.mxu0 0.0
  %1074 = vmatpush1.msra.mxu0 0.0
  %1075 = vmatprep.subr.mxu0 0.0
  %1076 = vmatpush1.msra.mxu0 0.0
  %1077 = vmatprep.subr.mxu0 0.0
  %1078 = vmatpush1.msra.mxu0 0.0
  %1079 = vmatprep.subr.mxu0 0.0
  %1080 = vmatpush1.msra.mxu0 0.0
  %1081 = vmatprep.subr.mxu0 0.0
  %1082 = vmatpush1.msra.mxu0 0.0
  %1083 = vmatprep.subr.mxu0 0.0
  %1084 = vmatpush1.msra.mxu0 0.0
  %1085 = vmatprep.subr.mxu0 0.0
  %1086 = vmatpush1.msra.mxu0 0.0
  %1087 = vmatprep.subr.mxu0 0.0
  %1088 = vmatpush1.msra.mxu0 0.0
  %1089 = vmatprep.subr.mxu0 0.0
  %1090 = vmatpush1.msra.mxu0 0.0
  %1091 = vmatprep.subr.mxu0 0.0
  %1092 = vmatpush1.msra.mxu0 0.0
  %1093 = vmatprep.subr.mxu0 0.0
  %1094 = vmatpush1.msra.mxu0 0.0
  %1095 = vmatprep.subr.mxu0 0.0
  %1096 = vmatpush1.msra.mxu0 0.0
  %1097 = vmatprep.subr.mxu0 0.0
  %1098 = vmatpush1.msra.mxu0 0.0
  %1099 = vmatprep.subr.mxu0 0.0
  %1100 = vmatpush1.msra.mxu0 0.0
  %1101 = vmatprep.subr.mxu0 0.0
  %1102 = vmatpush1.msra.mxu0 0.0
  %1103 = vmatprep.subr.mxu0 0.0
  %1104 = vmatpush1.msra.mxu0 0.0
  %1105 = vmatprep.subr.mxu0 0.0
  %1106 = vmatpush1.msra.mxu0 0.0
  %1107 = vmatprep.subr.mxu0 0.0
  %1108 = vmatpush1.msra.mxu0 0.0
  %1109 = vmatprep.subr.mxu0 0.0
  %1110 = vmatpush1.msra.mxu0 0.0
  %1111 = vmatprep.subr.mxu0 0.0
  %1112 = vmatpush1.msra.mxu0 0.0
  %1113 = vmatprep.subr.mxu0 0.0
  %1114 = vmatpush1.msra.mxu0 0.0
  %1115 = vmatprep.subr.mxu0 0.0
  %1116 = vmatpush1.msra.mxu0 0.0
  %1117 = vmatprep.subr.mxu0 0.0
  %1118 = vmatpush1.msra.mxu0 0.0
  %1119 = vmatprep.subr.mxu0 0.0
  %1120 = vmatpush1.msra.mxu0 0.0
  %1121 = vmatprep.subr.mxu0 0.0
  %1122 = vmatpush1.msra.mxu0 0.0
  %1123 = vmatprep.subr.mxu0 0.0
  %1124 = vmatpush1.msra.mxu0 0.0
  %1125 = vmatprep.subr.mxu0 0.0
  %1126 = vmatpush1.msra.mxu0 0.0
  %1127 = vmatprep.subr.mxu0 0.0
  %1128 = vmatpush1.msra.mxu0 0.0
  %1129 = vmatprep.mubr.f32.mxu0 0.0
  %1130 = vmatmul.mubr.f32.gmra.mrb[0].mxu0 %v1063
  %v1131 = vpop.f32.mrb[0].mxu0
  %v1132 = vadd.f32 0.0, %v1131
  %v1133 = vpop.f32.mrb[0].mxu0
  %1134 = vdwg.mxu0
  %v1135 = vadd.f32 %v157, %v1132
  %v1136 = vmul.f32 %v1135, 0.5
  %v1137 = vtanh.pop %v1136
  %v1138 = vadd.f32 %v1137, 1.0
  %v1139 = vmul.f32 %v1138, 0.5
  %v1140 = vtanh.pop %v1135
  %v1142 = vrot.slane %v950, 6
  %v1144 = vmul.f32 %v1139, %v1142
  %1146 = vrot.lane.b32.xlu0 %v1140, 64
  %v1147 = vpop.permute.xlu0 %1146
  %v1149 = vmul.f32 %v1139, %v1147
  %1151 = vrot.lane.b32.xlu0 %v1149, 32
  %v1152 = vpop.permute.xlu0 %1151
  %v1154 = vadd.f32 %v1144, %v1152
  %v1155 = vtanh.pop %v1154
  %1157 = vrot.lane.b32.xlu0 %v1155, 64
  %v1158 = vpop.permute.xlu0 %1157
  %v1160 = vmul.f32 %v1139, %v1158
  %1162 = vrot.lane.b32.xlu0 %v1058, 32
  %v1163 = vpop.permute.xlu0 %1162
  %v1164 = vsel %vm78, %v1163, 0
  %1166 = vmatprep.subr.mxu0 0.0
  %1167 = vmatpush1.msra.mxu0 %v67
  %1168 = vmatprep.subr.mxu0 0.0
  %1169 = vmatpush1.msra.mxu0 %v68
  %1170 = vmatprep.subr.mxu0 0.0
  %1171 = vmatpush1.msra.mxu0 %v69
  %1172 = vmatprep.subr.mxu0 0.0
  %1173 = vmatpush1.msra.mxu0 %v70
  %1174 = vmatprep.subr.mxu0 0.0
  %1175 = vmatpush1.msra.mxu0 0.0
  %1176 = vmatprep.subr.mxu0 0.0
  %1177 = vmatpush1.msra.mxu0 0.0
  %1178 = vmatprep.subr.mxu0 0.0
  %1179 = vmatpush1.msra.mxu0 0.0
  %1180 = vmatprep.subr.mxu0 0.0
  %1181 = vmatpush1.msra.mxu0 0.0
  %1182 = vmatprep.subr.mxu0 0.0
  %1183 = vmatpush1.msra.mxu0 0.0
  %1184 = vmatprep.subr.mxu0 0.0
  %1185 = vmatpush1.msra.mxu0 0.0
  %1186 = vmatprep.subr.mxu0 0.0
  %1187 = vmatpush1.msra.mxu0 0.0
  %1188 = vmatprep.subr.mxu0 0.0
  %1189 = vmatpush1.msra.mxu0 0.0
  %1190 = vmatprep.subr.mxu0 0.0
  %1191 = vmatpush1.msra.mxu0 0.0
  %1192 = vmatprep.subr.mxu0 0.0
  %1193 = vmatpush1.msra.mxu0 0.0
  %1194 = vmatprep.subr.mxu0 0.0
  %1195 = vmatpush1.msra.mxu0 0.0
  %1196 = vmatprep.subr.mxu0 0.0
  %1197 = vmatpush1.msra.mxu0 0.0
  %1198 = vmatprep.subr.mxu0 0.0
  %1199 = vmatpush1.msra.mxu0 0.0
  %1200 = vmatprep.subr.mxu0 0.0
  %1201 = vmatpush1.msra.mxu0 0.0
  %1202 = vmatprep.subr.mxu0 0.0
  %1203 = vmatpush1.msra.mxu0 0.0
  %1204 = vmatprep.subr.mxu0 0.0
  %1205 = vmatpush1.msra.mxu0 0.0
  %1206 = vmatprep.subr.mxu0 0.0
  %1207 = vmatpush1.msra.mxu0 0.0
  %1208 = vmatprep.subr.mxu0 0.0
  %1209 = vmatpush1.msra.mxu0 0.0
  %1210 = vmatprep.subr.mxu0 0.0
  %1211 = vmatpush1.msra.mxu0 0.0
  %1212 = vmatprep.subr.mxu0 0.0
  %1213 = vmatpush1.msra.mxu0 0.0
  %1214 = vmatprep.subr.mxu0 0.0
  %1215 = vmatpush1.msra.mxu0 0.0
  %1216 = vmatprep.subr.mxu0 0.0
  %1217 = vmatpush1.msra.mxu0 0.0
  %1218 = vmatprep.subr.mxu0 0.0
  %1219 = vmatpush1.msra.mxu0 0.0
  %1220 = vmatprep.subr.mxu0 0.0
  %1221 = vmatpush1.msra.mxu0 0.0
  %1222 = vmatprep.subr.mxu0 0.0
  %1223 = vmatpush1.msra.mxu0 0.0
  %1224 = vmatprep.subr.mxu0 0.0
  %1225 = vmatpush1.msra.mxu0 0.0
  %1226 = vmatprep.subr.mxu0 0.0
  %1227 = vmatpush1.msra.mxu0 0.0
  %1228 = vmatprep.subr.mxu0 0.0
  %1229 = vmatpush1.msra.mxu0 0.0
  %1230 = vmatprep.mubr.f32.mxu0 0.0
  %1231 = vmatmul.mubr.f32.gmra.mrb[0].mxu0 %v1164
  %v1232 = vpop.f32.mrb[0].mxu0
  %v1233 = vadd.f32 0.0, %v1232
  %v1234 = vpop.f32.mrb[0].mxu0
  %1235 = vdwg.mxu0
  %v1237 = vrot.slane %v1233, 2
  %v1239 = vadd.f32 %v233, %v1237
  %v1240 = vmul.f32 %v1239, 0.5
  %v1241 = vtanh.pop %v1240
  %v1242 = vadd.f32 %v1241, 1.0
  %v1243 = vmul.f32 %v1242, 0.5
  %v1244 = vtanh.pop %v1239
  %v1246 = vrot.slane %v1052, 2
  %v1248 = vmul.f32 %v1243, %v1246
  %1250 = vrot.lane.b32.xlu0 %v1244, 64
  %v1251 = vpop.permute.xlu0 %1250
  %v1253 = vmul.f32 %v1243, %v1251
  %1255 = vrot.lane.b32.xlu0 %v1253, 32
  %v1256 = vpop.permute.xlu0 %1255
  %v1258 = vadd.f32 %v1248, %v1256
  %v1259 = vtanh.pop %v1258
  %1261 = vrot.lane.b32.xlu0 %v1259, 64
  %v1262 = vpop.permute.xlu0 %1261
  %v1264 = vmul.f32 %v1243, %v1262
  %1266 = vrot.lane.b32.xlu0 %v1160, 32
  %v1267 = vpop.permute.xlu0 %1266
  %v1268 = vsel %vm78, %v1267, 0
  %1270 = vmatprep.subr.mxu0 0.0
  %1271 = vmatpush1.msra.mxu0 %v58
  %1272 = vmatprep.subr.mxu0 0.0
  %1273 = vmatpush1.msra.mxu0 %v59
  %1274 = vmatprep.subr.mxu0 0.0
  %1275 = vmatpush1.msra.mxu0 %v60
  %1276 = vmatprep.subr.mxu0 0.0
  %1277 = vmatpush1.msra.mxu0 %v61
  %1278 = vmatprep.subr.mxu0 0.0
  %1279 = vmatpush1.msra.mxu0 0.0
  %1280 = vmatprep.subr.mxu0 0.0
  %1281 = vmatpush1.msra.mxu0 0.0
  %1282 = vmatprep.subr.mxu0 0.0
  %1283 = vmatpush1.msra.mxu0 0.0
  %1284 = vmatprep.subr.mxu0 0.0
  %1285 = vmatpush1.msra.mxu0 0.0
  %1286 = vmatprep.subr.mxu0 0.0
  %1287 = vmatpush1.msra.mxu0 0.0
  %1288 = vmatprep.subr.mxu0 0.0
  %1289 = vmatpush1.msra.mxu0 0.0
  %1290 = vmatprep.subr.mxu0 0.0
  %1291 = vmatpush1.msra.mxu0 0.0
  %1292 = vmatprep.subr.mxu0 0.0
  %1293 = vmatpush1.msra.mxu0 0.0
  %1294 = vmatprep.subr.mxu0 0.0
  %1295 = vmatpush1.msra.mxu0 0.0
  %1296 = vmatprep.subr.mxu0 0.0
  %1297 = vmatpush1.msra.mxu0 0.0
  %1298 = vmatprep.subr.mxu0 0.0
  %1299 = vmatpush1.msra.mxu0 0.0
  %1300 = vmatprep.subr.mxu0 0.0
  %1301 = vmatpush1.msra.mxu0 0.0
  %1302 = vmatprep.subr.mxu0 0.0
  %1303 = vmatpush1.msra.mxu0 0.0
  %1304 = vmatprep.subr.mxu0 0.0
  %1305 = vmatpush1.msra.mxu0 0.0
  %1306 = vmatprep.subr.mxu0 0.0
  %1307 = vmatpush1.msra.mxu0 0.0
  %1308 = vmatprep.subr.mxu0 0.0
  %1309 = vmatpush1.msra.mxu0 0.0
  %1310 = vmatprep.subr.mxu0 0.0
  %1311 = vmatpush1.msra.mxu0 0.0
  %1312 = vmatprep.subr.mxu0 0.0
  %1313 = vmatpush1.msra.mxu0 0.0
  %1314 = vmatprep.subr.mxu0 0.0
  %1315 = vmatpush1.msra.mxu0 0.0
  %1316 = vmatprep.subr.mxu0 0.0
  %1317 = vmatpush1.msra.mxu0 0.0
  %1318 = vmatprep.subr.mxu0 0.0
  %1319 = vmatpush1.msra.mxu0 0.0
  %1320 = vmatprep.subr.mxu0 0.0
  %1321 = vmatpush1.msra.mxu0 0.0
  %1322 = vmatprep.subr.mxu0 0.0
  %1323 = vmatpush1.msra.mxu0 0.0
  %1324 = vmatprep.subr.mxu0 0.0
  %1325 = vmatpush1.msra.mxu0 0.0
  %1326 = vmatprep.subr.mxu0 0.0
  %1327 = vmatpush1.msra.mxu0 0.0
  %1328 = vmatprep.subr.mxu0 0.0
  %1329 = vmatpush1.msra.mxu0 0.0
  %1330 = vmatprep.subr.mxu0 0.0
  %1331 = vmatpush1.msra.mxu0 0.0
  %1332 = vmatprep.subr.mxu0 0.0
  %1333 = vmatpush1.msra.mxu0 0.0
  %1334 = vmatprep.mubr.f32.mxu0 0.0
  %1335 = vmatmul.mubr.f32.gmra.mrb[0].mxu0 %v1268
  %v1336 = vpop.f32.mrb[0].mxu0
  %v1337 = vadd.f32 0.0, %v1336
  %v1338 = vpop.f32.mrb[0].mxu0
  %1339 = vdwg.mxu0
  %v1341 = vrot.slane %v1337, 6
  %v1343 = vadd.f32 %v157, %v1341
  %v1344 = vmul.f32 %v1343, 0.5
  %v1345 = vtanh.pop %v1344
  %v1346 = vadd.f32 %v1345, 1.0
  %v1347 = vmul.f32 %v1346, 0.5
  %v1348 = vtanh.pop %v1343
  %v1350 = vrot.slane %v1154, 6
  %v1352 = vmul.f32 %v1347, %v1350
  %1354 = vrot.lane.b32.xlu0 %v1348, 64
  %v1355 = vpop.permute.xlu0 %1354
  %v1357 = vmul.f32 %v1347, %v1355
  %1359 = vrot.lane.b32.xlu0 %v1357, 32
  %v1360 = vpop.permute.xlu0 %1359
  %v1362 = vadd.f32 %v1352, %v1360
  %v1363 = vtanh.pop %v1362
  %1365 = vrot.lane.b32.xlu0 %v1363, 64
  %v1366 = vpop.permute.xlu0 %1365
  %v1368 = vmul.f32 %v1347, %v1366
  %v1370 = vrot.slane %v1264, 6
  %1371 = vrot.lane.b32.xlu0 %v1370, 32
  %v1372 = vpop.permute.xlu0 %1371
  %v1373 = vsel %vm78, %v1372, 0
  %1375 = vmatprep.subr.mxu0 0.0
  %1376 = vmatpush1.msra.mxu0 %v67
  %1377 = vmatprep.subr.mxu0 0.0
  %1378 = vmatpush1.msra.mxu0 %v68
  %1379 = vmatprep.subr.mxu0 0.0
  %1380 = vmatpush1.msra.mxu0 %v69
  %1381 = vmatprep.subr.mxu0 0.0
  %1382 = vmatpush1.msra.mxu0 %v70
  %1383 = vmatprep.subr.mxu0 0.0
  %1384 = vmatpush1.msra.mxu0 0.0
  %1385 = vmatprep.subr.mxu0 0.0
  %1386 = vmatpush1.msra.mxu0 0.0
  %1387 = vmatprep.subr.mxu0 0.0
  %1388 = vmatpush1.msra.mxu0 0.0
  %1389 = vmatprep.subr.mxu0 0.0
  %1390 = vmatpush1.msra.mxu0 0.0
  %1391 = vmatprep.subr.mxu0 0.0
  %1392 = vmatpush1.msra.mxu0 0.0
  %1393 = vmatprep.subr.mxu0 0.0
  %1394 = vmatpush1.msra.mxu0 0.0
  %1395 = vmatprep.subr.mxu0 0.0
  %1396 = vmatpush1.msra.mxu0 0.0
  %1397 = vmatprep.subr.mxu0 0.0
  %1398 = vmatpush1.msra.mxu0 0.0
  %1399 = vmatprep.subr.mxu0 0.0
  %1400 = vmatpush1.msra.mxu0 0.0
  %1401 = vmatprep.subr.mxu0 0.0
  %1402 = vmatpush1.msra.mxu0 0.0
  %1403 = vmatprep.subr.mxu0 0.0
  %1404 = vmatpush1.msra.mxu0 0.0
  %1405 = vmatprep.subr.mxu0 0.0
  %1406 = vmatpush1.msra.mxu0 0.0
  %1407 = vmatprep.subr.mxu0 0.0
  %1408 = vmatpush1.msra.mxu0 0.0
  %1409 = vmatprep.subr.mxu0 0.0
  %1410 = vmatpush1.msra.mxu0 0.0
  %1411 = vmatprep.subr.mxu0 0.0
  %1412 = vmatpush1.msra.mxu0 0.0
  %1413 = vmatprep.subr.mxu0 0.0
  %1414 = vmatpush1.msra.mxu0 0.0
  %1415 = vmatprep.subr.mxu0 0.0
  %1416 = vmatpush1.msra.mxu0 0.0
  %1417 = vmatprep.subr.mxu0 0.0
  %1418 = vmatpush1.msra.mxu0 0.0
  %1419 = vmatprep.subr.mxu0 0.0
  %1420 = vmatpush1.msra.mxu0 0.0
  %1421 = vmatprep.subr.mxu0 0.0
  %1422 = vmatpush1.msra.mxu0 0.0
  %1423 = vmatprep.subr.mxu0 0.0
  %1424 = vmatpush1.msra.mxu0 0.0
  %1425 = vmatprep.subr.mxu0 0.0
  %1426 = vmatpush1.msra.mxu0 0.0
  %1427 = vmatprep.subr.mxu0 0.0
  %1428 = vmatpush1.msra.mxu0 0.0
  %1429 = vmatprep.subr.mxu0 0.0
  %1430 = vmatpush1.msra.mxu0 0.0
  %1431 = vmatprep.subr.mxu0 0.0
  %1432 = vmatpush1.msra.mxu0 0.0
  %1433 = vmatprep.subr.mxu0 0.0
  %1434 = vmatpush1.msra.mxu0 0.0
  %1435 = vmatprep.subr.mxu0 0.0
  %1436 = vmatpush1.msra.mxu0 0.0
  %1437 = vmatprep.subr.mxu0 0.0
  %1438 = vmatpush1.msra.mxu0 0.0
  %1439 = vmatprep.mubr.f32.mxu0 0.0
  %1440 = vmatmul.mubr.f32.gmra.mrb[0].mxu0 %v1373
  %v1441 = vpop.f32.mrb[0].mxu0
  %v1442 = vadd.f32 0.0, %v1441
  %v1443 = vpop.f32.mrb[0].mxu0
  %1444 = vdwg.mxu0
  %v1446 = vrot.slane %v1442, 4
  %v1448 = vadd.f32 %v233, %v1446
  %v1449 = vmul.f32 %v1448, 0.5
  %v1450 = vtanh.pop %v1449
  %v1451 = vadd.f32 %v1450, 1.0
  %v1452 = vmul.f32 %v1451, 0.5
  %v1453 = vtanh.pop %v1448
  %v1455 = vrot.slane %v1258, 2
  %v1457 = vmul.f32 %v1452, %v1455
  %1459 = vrot.lane.b32.xlu0 %v1453, 64
  %v1460 = vpop.permute.xlu0 %1459
  %v1462 = vmul.f32 %v1452, %v1460
  %1464 = vrot.lane.b32.xlu0 %v1462, 32
  %v1465 = vpop.permute.xlu0 %1464
  %v1467 = vadd.f32 %v1457, %v1465
  %v1468 = vtanh.pop %v1467
  %1470 = vrot.lane.b32.xlu0 %v1468, 64
  %v1471 = vpop.permute.xlu0 %1470
  %v1473 = vmul.f32 %v1452, %v1471
  %v1475 = vrot.slane %v1368, 2
  %1476 = vrot.lane.b32.xlu0 %v1475, 32
  %v1477 = vpop.permute.xlu0 %1476
  %v1478 = vsel %vm78, %v1477, 0
  %1480 = vmatprep.subr.mxu0 0.0
  %1481 = vmatpush1.msra.mxu0 %v58
  %1482 = vmatprep.subr.mxu0 0.0
  %1483 = vmatpush1.msra.mxu0 %v59
  %1484 = vmatprep.subr.mxu0 0.0
  %1485 = vmatpush1.msra.mxu0 %v60
  %1486 = vmatprep.subr.mxu0 0.0
  %1487 = vmatpush1.msra.mxu0 %v61
  %1488 = vmatprep.subr.mxu0 0.0
  %1489 = vmatpush1.msra.mxu0 0.0
  %1490 = vmatprep.subr.mxu0 0.0
  %1491 = vmatpush1.msra.mxu0 0.0
  %1492 = vmatprep.subr.mxu0 0.0
  %1493 = vmatpush1.msra.mxu0 0.0
  %1494 = vmatprep.subr.mxu0 0.0
  %1495 = vmatpush1.msra.mxu0 0.0
  %1496 = vmatprep.subr.mxu0 0.0
  %1497 = vmatpush1.msra.mxu0 0.0
  %1498 = vmatprep.subr.mxu0 0.0
  %1499 = vmatpush1.msra.mxu0 0.0
  %1500 = vmatprep.subr.mxu0 0.0
  %1501 = vmatpush1.msra.mxu0 0.0
  %1502 = vmatprep.subr.mxu0 0.0
  %1503 = vmatpush1.msra.mxu0 0.0
  %1504 = vmatprep.subr.mxu0 0.0
  %1505 = vmatpush1.msra.mxu0 0.0
  %1506 = vmatprep.subr.mxu0 0.0
  %1507 = vmatpush1.msra.mxu0 0.0
  %1508 = vmatprep.subr.mxu0 0.0
  %1509 = vmatpush1.msra.mxu0 0.0
  %1510 = vmatprep.subr.mxu0 0.0
  %1511 = vmatpush1.msra.mxu0 0.0
  %1512 = vmatprep.subr.mxu0 0.0
  %1513 = vmatpush1.msra.mxu0 0.0
  %1514 = vmatprep.subr.mxu0 0.0
  %1515 = vmatpush1.msra.mxu0 0.0
  %1516 = vmatprep.subr.mxu0 0.0
  %1517 = vmatpush1.msra.mxu0 0.0
  %1518 = vmatprep.subr.mxu0 0.0
  %1519 = vmatpush1.msra.mxu0 0.0
  %1520 = vmatprep.subr.mxu0 0.0
  %1521 = vmatpush1.msra.mxu0 0.0
  %1522 = vmatprep.subr.mxu0 0.0
  %1523 = vmatpush1.msra.mxu0 0.0
  %1524 = vmatprep.subr.mxu0 0.0
  %1525 = vmatpush1.msra.mxu0 0.0
  %1526 = vmatprep.subr.mxu0 0.0
  %1527 = vmatpush1.msra.mxu0 0.0
  %1528 = vmatprep.subr.mxu0 0.0
  %1529 = vmatpush1.msra.mxu0 0.0
  %1530 = vmatprep.subr.mxu0 0.0
  %1531 = vmatpush1.msra.mxu0 0.0
  %1532 = vmatprep.subr.mxu0 0.0
  %1533 = vmatpush1.msra.mxu0 0.0
  %1534 = vmatprep.subr.mxu0 0.0
  %1535 = vmatpush1.msra.mxu0 0.0
  %1536 = vmatprep.subr.mxu0 0.0
  %1537 = vmatpush1.msra.mxu0 0.0
  %1538 = vmatprep.subr.mxu0 0.0
  %1539 = vmatpush1.msra.mxu0 0.0
  %1540 = vmatprep.subr.mxu0 0.0
  %1541 = vmatpush1.msra.mxu0 0.0
  %1542 = vmatprep.subr.mxu0 0.0
  %1543 = vmatpush1.msra.mxu0 0.0
  %1544 = vmatprep.mubr.f32.mxu0 0.0
  %1545 = vmatmul.mubr.f32.gmra.mrb[0].mxu0 %v1478
  %v1546 = vpop.f32.mrb[0].mxu0
  %v1547 = vadd.f32 0.0, %v1546
  %v1548 = vpop.f32.mrb[0].mxu0
  %1549 = vdwg.mxu0
  %v1551 = vrot.slane %v1547, 4
  %v1553 = vadd.f32 %v157, %v1551
  %v1554 = vmul.f32 %v1553, 0.5
  %v1555 = vtanh.pop %v1554
  %v1556 = vadd.f32 %v1555, 1.0
  %v1557 = vmul.f32 %v1556, 0.5
  %v1558 = vtanh.pop %v1553
  %v1560 = vrot.slane %v1362, 6
  %v1562 = vmul.f32 %v1557, %v1560
  %1564 = vrot.lane.b32.xlu0 %v1558, 64
  %v1565 = vpop.permute.xlu0 %1564
  %v1567 = vmul.f32 %v1557, %v1565
  %1569 = vrot.lane.b32.xlu0 %v1567, 32
  %v1570 = vpop.permute.xlu0 %1569
  %v1572 = vadd.f32 %v1562, %v1570
  %v1573 = vtanh.pop %v1572
  %1575 = vrot.lane.b32.xlu0 %v1573, 64
  %v1576 = vpop.permute.xlu0 %1575
  %v1578 = vmul.f32 %v1557, %v1576
  %v1580 = vrot.slane %v1473, 4
  %1581 = vrot.lane.b32.xlu0 %v1580, 32
  %v1582 = vpop.permute.xlu0 %1581
  %v1583 = vsel %vm78, %v1582, 0
  %1585 = vmatprep.subr.mxu0 0.0
  %1586 = vmatpush1.msra.mxu0 %v67
  %1587 = vmatprep.subr.mxu0 0.0
  %1588 = vmatpush1.msra.mxu0 %v68
  %1589 = vmatprep.subr.mxu0 0.0
  %1590 = vmatpush1.msra.mxu0 %v69
  %1591 = vmatprep.subr.mxu0 0.0
  %1592 = vmatpush1.msra.mxu0 %v70
  %1593 = vmatprep.subr.mxu0 0.0
  %1594 = vmatpush1.msra.mxu0 0.0
  %1595 = vmatprep.subr.mxu0 0.0
  %1596 = vmatpush1.msra.mxu0 0.0
  %1597 = vmatprep.subr.mxu0 0.0
  %1598 = vmatpush1.msra.mxu0 0.0
  %1599 = vmatprep.subr.mxu0 0.0
  %1600 = vmatpush1.msra.mxu0 0.0
  %1601 = vmatprep.subr.mxu0 0.0
  %1602 = vmatpush1.msra.mxu0 0.0
  %1603 = vmatprep.subr.mxu0 0.0
  %1604 = vmatpush1.msra.mxu0 0.0
  %1605 = vmatprep.subr.mxu0 0.0
  %1606 = vmatpush1.msra.mxu0 0.0
  %1607 = vmatprep.subr.mxu0 0.0
  %1608 = vmatpush1.msra.mxu0 0.0
  %1609 = vmatprep.subr.mxu0 0.0
  %1610 = vmatpush1.msra.mxu0 0.0
  %1611 = vmatprep.subr.mxu0 0.0
  %1612 = vmatpush1.msra.mxu0 0.0
  %1613 = vmatprep.subr.mxu0 0.0
  %1614 = vmatpush1.msra.mxu0 0.0
  %1615 = vmatprep.subr.mxu0 0.0
  %1616 = vmatpush1.msra.mxu0 0.0
  %1617 = vmatprep.subr.mxu0 0.0
  %1618 = vmatpush1.msra.mxu0 0.0
  %1619 = vmatprep.subr.mxu0 0.0
  %1620 = vmatpush1.msra.mxu0 0.0
  %1621 = vmatprep.subr.mxu0 0.0
  %1622 = vmatpush1.msra.mxu0 0.0
  %1623 = vmatprep.subr.mxu0 0.0
  %1624 = vmatpush1.msra.mxu0 0.0
  %1625 = vmatprep.subr.mxu0 0.0
  %1626 = vmatpush1.msra.mxu0 0.0
  %1627 = vmatprep.subr.mxu0 0.0
  %1628 = vmatpush1.msra.mxu0 0.0
  %1629 = vmatprep.subr.mxu0 0.0
  %1630 = vmatpush1.msra.mxu0 0.0
  %1631 = vmatprep.subr.mxu0 0.0
  %1632 = vmatpush1.msra.mxu0 0.0
  %1633 = vmatprep.subr.mxu0 0.0
  %1634 = vmatpush1.msra.mxu0 0.0
  %1635 = vmatprep.subr.mxu0 0.0
  %1636 = vmatpush1.msra.mxu0 0.0
  %1637 = vmatprep.subr.mxu0 0.0
  %1638 = vmatpush1.msra.mxu0 0.0
  %1639 = vmatprep.subr.mxu0 0.0
  %1640 = vmatpush1.msra.mxu0 0.0
  %1641 = vmatprep.subr.mxu0 0.0
  %1642 = vmatpush1.msra.mxu0 0.0
  %1643 = vmatprep.subr.mxu0 0.0
  %1644 = vmatpush1.msra.mxu0 0.0
  %1645 = vmatprep.subr.mxu0 0.0
  %1646 = vmatpush1.msra.mxu0 0.0
  %1647 = vmatprep.subr.mxu0 0.0
  %1648 = vmatpush1.msra.mxu0 0.0
  %1649 = vmatprep.mubr.f32.mxu0 0.0
  %1650 = vmatmul.mubr.f32.gmra.mrb[0].mxu0 %v1583
  %v1651 = vpop.f32.mrb[0].mxu0
  %v1652 = vadd.f32 0.0, %v1651
  %v1653 = vpop.f32.mrb[0].mxu0
  %1654 = vdwg.mxu0
  %v1656 = vrot.slane %v1652, 6
  %v1658 = vadd.f32 %v233, %v1656
  %v1659 = vmul.f32 %v1658, 0.5
  %v1660 = vtanh.pop %v1659
  %v1661 = vadd.f32 %v1660, 1.0
  %v1662 = vmul.f32 %v1661, 0.5
  %v1663 = vtanh.pop %v1658
  %v1665 = vrot.slane %v1467, 2
  %v1667 = vmul.f32 %v1662, %v1665
  %1669 = vrot.lane.b32.xlu0 %v1663, 64
  %v1670 = vpop.permute.xlu0 %1669
  %v1672 = vmul.f32 %v1662, %v1670
  %1674 = vrot.lane.b32.xlu0 %v1672, 32
  %v1675 = vpop.permute.xlu0 %1674
  %v1677 = vadd.f32 %v1667, %v1675
  %v1678 = vtanh.pop %v1677
  %1680 = vrot.lane.b32.xlu0 %v1678, 64
  %v1681 = vpop.permute.xlu0 %1680
  %v1683 = vmul.f32 %v1662, %v1681
  %v1685 = vrot.slane %v1578, 4
  %1686 = vrot.lane.b32.xlu0 %v1685, 32
  %v1687 = vpop.permute.xlu0 %1686
  %v1688 = vsel %vm78, %v1687, 0
  %1690 = vmatprep.subr.mxu0 0.0
  %1691 = vmatpush1.msra.mxu0 %v58
  %1692 = vmatprep.subr.mxu0 0.0
  %1693 = vmatpush1.msra.mxu0 %v59
  %1694 = vmatprep.subr.mxu0 0.0
  %1695 = vmatpush1.msra.mxu0 %v60
  %1696 = vmatprep.subr.mxu0 0.0
  %1697 = vmatpush1.msra.mxu0 %v61
  %1698 = vmatprep.subr.mxu0 0.0
  %1699 = vmatpush1.msra.mxu0 0.0
  %1700 = vmatprep.subr.mxu0 0.0
  %1701 = vmatpush1.msra.mxu0 0.0
  %1702 = vmatprep.subr.mxu0 0.0
  %1703 = vmatpush1.msra.mxu0 0.0
  %1704 = vmatprep.subr.mxu0 0.0
  %1705 = vmatpush1.msra.mxu0 0.0
  %1706 = vmatprep.subr.mxu0 0.0
  %1707 = vmatpush1.msra.mxu0 0.0
  %1708 = vmatprep.subr.mxu0 0.0
  %1709 = vmatpush1.msra.mxu0 0.0
  %1710 = vmatprep.subr.mxu0 0.0
  %1711 = vmatpush1.msra.mxu0 0.0
  %1712 = vmatprep.subr.mxu0 0.0
  %1713 = vmatpush1.msra.mxu0 0.0
  %1714 = vmatprep.subr.mxu0 0.0
  %1715 = vmatpush1.msra.mxu0 0.0
  %1716 = vmatprep.subr.mxu0 0.0
  %1717 = vmatpush1.msra.mxu0 0.0
  %1718 = vmatprep.subr.mxu0 0.0
  %1719 = vmatpush1.msra.mxu0 0.0
  %1720 = vmatprep.subr.mxu0 0.0
  %1721 = vmatpush1.msra.mxu0 0.0
  %1722 = vmatprep.subr.mxu0 0.0
  %1723 = vmatpush1.msra.mxu0 0.0
  %1724 = vmatprep.subr.mxu0 0.0
  %1725 = vmatpush1.msra.mxu0 0.0
  %1726 = vmatprep.subr.mxu0 0.0
  %1727 = vmatpush1.msra.mxu0 0.0
  %1728 = vmatprep.subr.mxu0 0.0
  %1729 = vmatpush1.msra.mxu0 0.0
  %1730 = vmatprep.subr.mxu0 0.0
  %1731 = vmatpush1.msra.mxu0 0.0
  %1732 = vmatprep.subr.mxu0 0.0
  %1733 = vmatpush1.msra.mxu0 0.0
  %1734 = vmatprep.subr.mxu0 0.0
  %1735 = vmatpush1.msra.mxu0 0.0
  %1736 = vmatprep.subr.mxu0 0.0
  %1737 = vmatpush1.msra.mxu0 0.0
  %1738 = vmatprep.subr.mxu0 0.0
  %1739 = vmatpush1.msra.mxu0 0.0
  %1740 = vmatprep.subr.mxu0 0.0
  %1741 = vmatpush1.msra.mxu0 0.0
  %1742 = vmatprep.subr.mxu0 0.0
  %1743 = vmatpush1.msra.mxu0 0.0
  %1744 = vmatprep.subr.mxu0 0.0
  %1745 = vmatpush1.msra.mxu0 0.0
  %1746 = vmatprep.subr.mxu0 0.0
  %1747 = vmatpush1.msra.mxu0 0.0
  %1748 = vmatprep.subr.mxu0 0.0
  %1749 = vmatpush1.msra.mxu0 0.0
  %1750 = vmatprep.subr.mxu0 0.0
  %1751 = vmatpush1.msra.mxu0 0.0
  %1752 = vmatprep.subr.mxu0 0.0
  %1753 = vmatpush1.msra.mxu0 0.0
  %1754 = vmatprep.mubr.f32.mxu0 0.0
  %1755 = vmatmul.mubr.f32.gmra.mrb[0].mxu0 %v1688
  %v1756 = vpop.f32.mrb[0].mxu0
  %v1757 = vadd.f32 0.0, %v1756
  %v1758 = vpop.f32.mrb[0].mxu0
  %1759 = vdwg.mxu0
  %v1761 = vrot.slane %v1757, 2
  %v1763 = vadd.f32 %v157, %v1761
  %v1764 = vmul.f32 %v1763, 0.5
  %v1765 = vtanh.pop %v1764
  %v1766 = vadd.f32 %v1765, 1.0
  %v1767 = vmul.f32 %v1766, 0.5
  %v1768 = vtanh.pop %v1763
  %v1770 = vrot.slane %v1572, 6
  %v1772 = vmul.f32 %v1767, %v1770
  %1774 = vrot.lane.b32.xlu0 %v1768, 64
  %v1775 = vpop.permute.xlu0 %1774
  %v1777 = vmul.f32 %v1767, %v1775
  %1779 = vrot.lane.b32.xlu0 %v1777, 32
  %v1780 = vpop.permute.xlu0 %1779
  %v1782 = vadd.f32 %v1772, %v1780
  %v1783 = vtanh.pop %v1782
  %1785 = vrot.lane.b32.xlu0 %v1783, 64
  %v1786 = vpop.permute.xlu0 %1785
  %v1788 = vmul.f32 %v1767, %v1786
  %v1790 = vrot.slane %v1683, 2
  %1791 = vrot.lane.b32.xlu0 %v1790, 32
  %v1792 = vpop.permute.xlu0 %1791
  %v1793 = vsel %vm78, %v1792, 0
  %1795 = vmatprep.subr.mxu0 0.0
  %1796 = vmatpush1.msra.mxu0 %v67
  %1797 = vmatprep.subr.mxu0 0.0
  %1798 = vmatpush1.msra.mxu0 %v68
  %1799 = vmatprep.subr.mxu0 0.0
  %1800 = vmatpush1.msra.mxu0 %v69
  %1801 = vmatprep.subr.mxu0 0.0
  %1802 = vmatpush1.msra.mxu0 %v70
  %1803 = vmatprep.subr.mxu0 0.0
  %1804 = vmatpush1.msra.mxu0 0.0
  %1805 = vmatprep.subr.mxu0 0.0
  %1806 = vmatpush1.msra.mxu0 0.0
  %1807 = vmatprep.subr.mxu0 0.0
  %1808 = vmatpush1.msra.mxu0 0.0
  %1809 = vmatprep.subr.mxu0 0.0
  %1810 = vmatpush1.msra.mxu0 0.0
  %1811 = vmatprep.subr.mxu0 0.0
  %1812 = vmatpush1.msra.mxu0 0.0
  %1813 = vmatprep.subr.mxu0 0.0
  %1814 = vmatpush1.msra.mxu0 0.0
  %1815 = vmatprep.subr.mxu0 0.0
  %1816 = vmatpush1.msra.mxu0 0.0
  %1817 = vmatprep.subr.mxu0 0.0
  %1818 = vmatpush1.msra.mxu0 0.0
  %1819 = vmatprep.subr.mxu0 0.0
  %1820 = vmatpush1.msra.mxu0 0.0
  %1821 = vmatprep.subr.mxu0 0.0
  %1822 = vmatpush1.msra.mxu0 0.0
  %1823 = vmatprep.subr.mxu0 0.0
  %1824 = vmatpush1.msra.mxu0 0.0
  %1825 = vmatprep.subr.mxu0 0.0
  %1826 = vmatpush1.msra.mxu0 0.0
  %1827 = vmatprep.subr.mxu0 0.0
  %1828 = vmatpush1.msra.mxu0 0.0
  %1829 = vmatprep.subr.mxu0 0.0
  %1830 = vmatpush1.msra.mxu0 0.0
  %1831 = vmatprep.subr.mxu0 0.0
  %1832 = vmatpush1.msra.mxu0 0.0
  %1833 = vmatprep.subr.mxu0 0.0
  %1834 = vmatpush1.msra.mxu0 0.0
  %1835 = vmatprep.subr.mxu0 0.0
  %1836 = vmatpush1.msra.mxu0 0.0
  %1837 = vmatprep.subr.mxu0 0.0
  %1838 = vmatpush1.msra.mxu0 0.0
  %1839 = vmatprep.subr.mxu0 0.0
  %1840 = vmatpush1.msra.mxu0 0.0
  %1841 = vmatprep.subr.mxu0 0.0
  %1842 = vmatpush1.msra.mxu0 0.0
  %1843 = vmatprep.subr.mxu0 0.0
  %1844 = vmatpush1.msra.mxu0 0.0
  %1845 = vmatprep.subr.mxu0 0.0
  %1846 = vmatpush1.msra.mxu0 0.0
  %1847 = vmatprep.subr.mxu0 0.0
  %1848 = vmatpush1.msra.mxu0 0.0
  %1849 = vmatprep.subr.mxu0 0.0
  %1850 = vmatpush1.msra.mxu0 0.0
  %1851 = vmatprep.subr.mxu0 0.0
  %1852 = vmatpush1.msra.mxu0 0.0
  %1853 = vmatprep.subr.mxu0 0.0
  %1854 = vmatpush1.msra.mxu0 0.0
  %1855 = vmatprep.subr.mxu0 0.0
  %1856 = vmatpush1.msra.mxu0 0.0
  %1857 = vmatprep.subr.mxu0 0.0
  %1858 = vmatpush1.msra.mxu0 0.0
  %1859 = vmatprep.mubr.f32.mxu0 0.0
  %1860 = vmatmul.mubr.f32.gmra.mrb[0].mxu0 %v1793
  %v1861 = vpop.f32.mrb[0].mxu0
  %v1862 = vadd.f32 0.0, %v1861
  %v1863 = vpop.f32.mrb[0].mxu0
  %1864 = vdwg.mxu0
  %v1865 = vadd.f32 %v233, %v1862
  %v1866 = vmul.f32 %v1865, 0.5
  %v1867 = vtanh.pop %v1866
  %v1868 = vadd.f32 %v1867, 1.0
  %v1869 = vmul.f32 %v1868, 0.5
  %v1870 = vtanh.pop %v1865
  %v1872 = vrot.slane %v1677, 2
  %v1874 = vmul.f32 %v1869, %v1872
  %1876 = vrot.lane.b32.xlu0 %v1870, 64
  %v1877 = vpop.permute.xlu0 %1876
  %v1879 = vmul.f32 %v1869, %v1877
  %1881 = vrot.lane.b32.xlu0 %v1879, 32
  %v1882 = vpop.permute.xlu0 %1881
  %v1884 = vadd.f32 %v1874, %v1882
  %v1885 = vtanh.pop %v1884
  %1887 = vrot.lane.b32.xlu0 %v1885, 64
  %v1888 = vpop.permute.xlu0 %1887
  %v1890 = vmul.f32 %v1869, %v1888
  %vm1891 = vcmask 1041408
  %v1892 = vsel %vm1891, %v336, %v536
  %vm1893 = vcmask 1043456
  %v1894 = vsel %vm1893, %v1892, %v746
  %vm1895 = vcmask 1045504
  %v1896 = vsel %vm1895, %v1894, %v956
  %v1897 = vsel %vm1891, %v1160, %v1368
  %v1898 = vsel %vm1893, %v1897, %v1578
  %v1899 = vsel %vm1895, %v1898, %v1788
  %v1900 = vsel %vm1891, %v1890, %v1683
  %v1901 = vsel %vm1893, %v1900, %v1473
  %v1902 = vsel %vm1895, %v1901, %v1264
  %v1903 = vsel %vm1891, %v1058, %v851
  %v1904 = vsel %vm1893, %v1903, %v641
  %v1905 = vsel %vm1895, %v1904, %v432
  %1908 = vrot.lane.b32.xlu0 %v1896, 32
  %v1909 = vpop.permute.xlu0 %1908
  %1910 = vrot.lane.b32.xlu0 %v1899, 32
  %v1911 = vpop.permute.xlu0 %1910
  %1916 = vrot.lane.b32.xlu0 %v1902, 64
  %v1917 = vpop.permute.xlu0 %1916
  %1918 = vrot.lane.b32.xlu0 %v1905, 64
  %v1919 = vpop.permute.xlu0 %1918
  %v1922 = vsel %vm78, %v1909, %v1917
  %v1923 = vsel %vm78, %v1911, %v1919
  %v1924 = vld [vmem:[%s7] sm:$0xff]
  %v1925 = vld [vmem:[%s7 + $0x8] sm:$0xff]
  %v1926 = vld [vmem:[%s7 + $0x10] sm:$0xff]
  %v1927 = vld [vmem:[%s7 + $0x18] sm:$0xff]
  %v1928 = vld [vmem:[%s7 + $0x20] sm:$0xff]
  %v1929 = vld [vmem:[%s7 + $0x28] sm:$0xff]
  %v1930 = vld [vmem:[%s7 + $0x30] sm:$0xff]
  %v1931 = vld [vmem:[%s7 + $0x38] sm:$0xff]
  %v1932 = vld [vmem:[%s8] sm:$0xff]
  %v1933 = vld [vmem:[%s8 + $0x8] sm:$0xff]
  %v1934 = vld [vmem:[%s8 + $0x10] sm:$0xff]
  %v1935 = vld [vmem:[%s8 + $0x18] sm:$0xff]
  %v1936 = vld [vmem:[%s9] sm:$0x1]
  %v1937 = vld [vmem:[%s10] sm:$0xff]
  %v1938 = vld [vmem:[%s10 + $0x8] sm:$0xff]
  %v1939 = vld [vmem:[%s10 + $0x10] sm:$0xff]
  %v1940 = vld [vmem:[%s10 + $0x18] sm:$0xff]
  %v1941 = vld [vmem:[%s10 + $0x20] sm:$0xff]
  %v1942 = vld [vmem:[%s10 + $0x28] sm:$0xff]
  %v1943 = vld [vmem:[%s10 + $0x30] sm:$0xff]
  %v1944 = vld [vmem:[%s10 + $0x38] sm:$0xff]
  %v1945 = vld [vmem:[%s11] sm:$0xff]
  %v1946 = vld [vmem:[%s11 + $0x8] sm:$0xff]
  %v1947 = vld [vmem:[%s11 + $0x10] sm:$0xff]
  %v1948 = vld [vmem:[%s11 + $0x18] sm:$0xff]
  %v1949 = vld [vmem:[%s12] sm:$0x1]
  %v1951 = vlaneseq
  %v1952 = vshrl.u32 %v1951, 7
  %v1953 = vsub.s32 0, %v1952
  %v1954 = vrot.slane %v1936, %v1953
  %vm1956 = vcmask 523264
  %v1958 = vsel %vm1956, %v1922, 0
  %v1961 = vsel %vm1956, %v1923, 0
  %1963 = vmatprep.subr.mxu0 0.0
  %1964 = vmatpush1.msra.mxu0 %v1924
  %1965 = vmatprep.subr.mxu0 0.0
  %1966 = vmatpush1.msra.mxu0 %v1925
  %1967 = vmatprep.subr.mxu0 0.0
  %1968 = vmatpush1.msra.mxu0 %v1926
  %1969 = vmatprep.subr.mxu0 0.0
  %1970 = vmatpush1.msra.mxu0 %v1927
  %1971 = vmatprep.subr.mxu0 0.0
  %1972 = vmatpush1.msra.mxu0 %v1928
  %1973 = vmatprep.subr.mxu0 0.0
  %1974 = vmatpush1.msra.mxu0 %v1929
  %1975 = vmatprep.subr.mxu0 0.0
  %1976 = vmatpush1.msra.mxu0 %v1930
  %1977 = vmatprep.subr.mxu0 0.0
  %1978 = vmatpush1.msra.mxu0 %v1931
  %1979 = vmatprep.subr.mxu0 0.0
  %1980 = vmatpush1.msra.mxu0 0.0
  %1981 = vmatprep.subr.mxu0 0.0
  %1982 = vmatpush1.msra.mxu0 0.0
  %1983 = vmatprep.subr.mxu0 0.0
  %1984 = vmatpush1.msra.mxu0 0.0
  %1985 = vmatprep.subr.mxu0 0.0
  %1986 = vmatpush1.msra.mxu0 0.0
  %1987 = vmatprep.subr.mxu0 0.0
  %1988 = vmatpush1.msra.mxu0 0.0
  %1989 = vmatprep.subr.mxu0 0.0
  %1990 = vmatpush1.msra.mxu0 0.0
  %1991 = vmatprep.subr.mxu0 0.0
  %1992 = vmatpush1.msra.mxu0 0.0
  %1993 = vmatprep.subr.mxu0 0.0
  %1994 = vmatpush1.msra.mxu0 0.0
  %1995 = vmatprep.subr.mxu0 0.0
  %1996 = vmatpush1.msra.mxu0 0.0
  %1997 = vmatprep.subr.mxu0 0.0
  %1998 = vmatpush1.msra.mxu0 0.0
  %1999 = vmatprep.subr.mxu0 0.0
  %2000 = vmatpush1.msra.mxu0 0.0
  %2001 = vmatprep.subr.mxu0 0.0
  %2002 = vmatpush1.msra.mxu0 0.0
  %2003 = vmatprep.subr.mxu0 0.0
  %2004 = vmatpush1.msra.mxu0 0.0
  %2005 = vmatprep.subr.mxu0 0.0
  %2006 = vmatpush1.msra.mxu0 0.0
  %2007 = vmatprep.subr.mxu0 0.0
  %2008 = vmatpush1.msra.mxu0 0.0
  %2009 = vmatprep.subr.mxu0 0.0
  %2010 = vmatpush1.msra.mxu0 0.0
  %2011 = vmatprep.subr.mxu0 0.0
  %2012 = vmatpush1.msra.mxu0 0.0
  %2013 = vmatprep.subr.mxu0 0.0
  %2014 = vmatpush1.msra.mxu0 0.0
  %2015 = vmatprep.subr.mxu0 0.0
  %2016 = vmatpush1.msra.mxu0 0.0
  %2017 = vmatprep.subr.mxu0 0.0
  %2018 = vmatpush1.msra.mxu0 0.0
  %2019 = vmatprep.subr.mxu0 0.0
  %2020 = vmatpush1.msra.mxu0 0.0
  %2021 = vmatprep.subr.mxu0 0.0
  %2022 = vmatpush1.msra.mxu0 0.0
  %2023 = vmatprep.subr.mxu0 0.0
  %2024 = vmatpush1.msra.mxu0 0.0
  %2025 = vmatprep.subr.mxu0 0.0
  %2026 = vmatpush1.msra.mxu0 0.0
  %2027 = vmatprep.mubr.f32.mxu0 0.0
  %2028 = vmatmul.mubr.f32.gmra.mrb[0].mxu0 %v1958
  %v2029 = vpop.f32.mrb[0].mxu0
  %v2030 = vadd.f32 %v1954, %v2029
  %v2031 = vpop.f32.mrb[0].mxu0
  %2032 = vmatprep.mubr.f32.mxu0 0.0
  %2033 = vmatmul.mubr.f32.gmra.mrb[0].mxu0 %v1961
  %v2034 = vpop.f32.mrb[0].mxu0
  %v2035 = vadd.f32 %v1954, %v2034
  %v2036 = vpop.f32.mrb[0].mxu0
  %2037 = vdwg.mxu0
  %v2039 = vlaneseq
  %v2040 = vshrl.u32 %v2039, 7
  %v2041 = vsub.s32 0, %v2040
  %v2042 = vrot.slane %v1949, %v2041
  %2044 = vmatprep.subr.mxu0 0.0
  %2045 = vmatpush1.msra.mxu0 %v1937
  %2046 = vmatprep.subr.mxu0 0.0
  %2047 = vmatpush1.msra.mxu0 %v1938
  %2048 = vmatprep.subr.mxu0 0.0
  %2049 = vmatpush1.msra.mxu0 %v1939
  %2050 = vmatprep.subr.mxu0 0.0
  %2051 = vmatpush1.msra.mxu0 %v1940
  %2052 = vmatprep.subr.mxu0 0.0
  %2053 = vmatpush1.msra.mxu0 %v1941
  %2054 = vmatprep.subr.mxu0 0.0
  %2055 = vmatpush1.msra.mxu0 %v1942
  %2056 = vmatprep.subr.mxu0 0.0
  %2057 = vmatpush1.msra.mxu0 %v1943
  %2058 = vmatprep.subr.mxu0 0.0
  %2059 = vmatpush1.msra.mxu0 %v1944
  %2060 = vmatprep.subr.mxu0 0.0
  %2061 = vmatpush1.msra.mxu0 0.0
  %2062 = vmatprep.subr.mxu0 0.0
  %2063 = vmatpush1.msra.mxu0 0.0
  %2064 = vmatprep.subr.mxu0 0.0
  %2065 = vmatpush1.msra.mxu0 0.0
  %2066 = vmatprep.subr.mxu0 0.0
  %2067 = vmatpush1.msra.mxu0 0.0
  %2068 = vmatprep.subr.mxu0 0.0
  %2069 = vmatpush1.msra.mxu0 0.0
  %2070 = vmatprep.subr.mxu0 0.0
  %2071 = vmatpush1.msra.mxu0 0.0
  %2072 = vmatprep.subr.mxu0 0.0
  %2073 = vmatpush1.msra.mxu0 0.0
  %2074 = vmatprep.subr.mxu0 0.0
  %2075 = vmatpush1.msra.mxu0 0.0
  %2076 = vmatprep.subr.mxu0 0.0
  %2077 = vmatpush1.msra.mxu0 0.0
  %2078 = vmatprep.subr.mxu0 0.0
  %2079 = vmatpush1.msra.mxu0 0.0
  %2080 = vmatprep.subr.mxu0 0.0
  %2081 = vmatpush1.msra.mxu0 0.0
  %2082 = vmatprep.subr.mxu0 0.0
  %2083 = vmatpush1.msra.mxu0 0.0
  %2084 = vmatprep.subr.mxu0 0.0
  %2085 = vmatpush1.msra.mxu0 0.0
  %2086 = vmatprep.subr.mxu0 0.0
  %2087 = vmatpush1.msra.mxu0 0.0
  %2088 = vmatprep.subr.mxu0 0.0
  %2089 = vmatpush1.msra.mxu0 0.0
  %2090 = vmatprep.subr.mxu0 0.0
  %2091 = vmatpush1.msra.mxu0 0.0
  %2092 = vmatprep.subr.mxu0 0.0
  %2093 = vmatpush1.msra.mxu0 0.0
  %2094 = vmatprep.subr.mxu0 0.0
  %2095 = vmatpush1.msra.mxu0 0.0
  %2096 = vmatprep.subr.mxu0 0.0
  %2097 = vmatpush1.msra.mxu0 0.0
  %2098 = vmatprep.subr.mxu0 0.0
  %2099 = vmatpush1.msra.mxu0 0.0
  %2100 = vmatprep.subr.mxu0 0.0
  %2101 = vmatpush1.msra.mxu0 0.0
  %2102 = vmatprep.subr.mxu0 0.0
  %2103 = vmatpush1.msra.mxu0 0.0
  %2104 = vmatprep.subr.mxu0 0.0
  %2105 = vmatpush1.msra.mxu0 0.0
  %2106 = vmatprep.subr.mxu0 0.0
  %2107 = vmatpush1.msra.mxu0 0.0
  %2108 = vmatprep.mubr.f32.mxu0 0.0
  %2109 = vmatmul.mubr.f32.gmra.mrb[0].mxu0 %v1958
  %v2110 = vpop.f32.mrb[0].mxu0
  %v2111 = vadd.f32 %v2042, %v2110
  %v2112 = vpop.f32.mrb[0].mxu0
  %2113 = vmatprep.mubr.f32.mxu0 0.0
  %2114 = vmatmul.mubr.f32.gmra.mrb[0].mxu0 %v1961
  %v2115 = vpop.f32.mrb[0].mxu0
  %v2116 = vadd.f32 %v2042, %v2115
  %v2117 = vpop.f32.mrb[0].mxu0
  %2118 = vdwg.mxu0
  %2119 = vmatprep.subr.mxu0 0.0
  %2120 = vmatpush1.msra.mxu0 %v1932
  %2121 = vmatprep.subr.mxu0 0.0
  %2122 = vmatpush1.msra.mxu0 %v1933
  %2123 = vmatprep.subr.mxu0 0.0
  %2124 = vmatpush1.msra.mxu0 %v1934
  %2125 = vmatprep.subr.mxu0 0.0
  %2126 = vmatpush1.msra.mxu0 %v1935
  %2127 = vmatprep.subr.mxu0 0.0
  %2128 = vmatpush1.msra.mxu0 0.0
  %2129 = vmatprep.subr.mxu0 0.0
  %2130 = vmatpush1.msra.mxu0 0.0
  %2131 = vmatprep.subr.mxu0 0.0
  %2132 = vmatpush1.msra.mxu0 0.0
  %2133 = vmatprep.subr.mxu0 0.0
  %2134 = vmatpush1.msra.mxu0 0.0
  %2135 = vmatprep.subr.mxu0 0.0
  %2136 = vmatpush1.msra.mxu0 0.0
  %2137 = vmatprep.subr.mxu0 0.0
  %2138 = vmatpush1.msra.mxu0 0.0
  %2139 = vmatprep.subr.mxu0 0.0
  %2140 = vmatpush1.msra.mxu0 0.0
  %2141 = vmatprep.subr.mxu0 0.0
  %2142 = vmatpush1.msra.mxu0 0.0
  %2143 = vmatprep.subr.mxu0 0.0
  %2144 = vmatpush1.msra.mxu0 0.0
  %2145 = vmatprep.subr.mxu0 0.0
  %2146 = vmatpush1.msra.mxu0 0.0
  %2147 = vmatprep.subr.mxu0 0.0
  %2148 = vmatpush1.msra.mxu0 0.0
  %2149 = vmatprep.subr.mxu0 0.0
  %2150 = vmatpush1.msra.mxu0 0.0
  %2151 = vmatprep.subr.mxu0 0.0
  %2152 = vmatpush1.msra.mxu0 0.0
  %2153 = vmatprep.subr.mxu0 0.0
  %2154 = vmatpush1.msra.mxu0 0.0
  %2155 = vmatprep.subr.mxu0 0.0
  %2156 = vmatpush1.msra.mxu0 0.0
  %2157 = vmatprep.subr.mxu0 0.0
  %2158 = vmatpush1.msra.mxu0 0.0
  %2159 = vmatprep.subr.mxu0 0.0
  %2160 = vmatpush1.msra.mxu0 0.0
  %2161 = vmatprep.subr.mxu0 0.0
  %2162 = vmatpush1.msra.mxu0 0.0
  %2163 = vmatprep.subr.mxu0 0.0
  %2164 = vmatpush1.msra.mxu0 0.0
  %2165 = vmatprep.subr.mxu0 0.0
  %2166 = vmatpush1.msra.mxu0 0.0
  %2167 = vmatprep.subr.mxu0 0.0
  %2168 = vmatpush1.msra.mxu0 0.0
  %2169 = vmatprep.subr.mxu0 0.0
  %2170 = vmatpush1.msra.mxu0 0.0
  %2171 = vmatprep.subr.mxu0 0.0
  %2172 = vmatpush1.msra.mxu0 0.0
  %2173 = vmatprep.subr.mxu0 0.0
  %2174 = vmatpush1.msra.mxu0 0.0
  %2175 = vmatprep.subr.mxu0 0.0
  %2176 = vmatpush1.msra.mxu0 0.0
  %2177 = vmatprep.subr.mxu0 0.0
  %2178 = vmatpush1.msra.mxu0 0.0
  %2179 = vmatprep.subr.mxu0 0.0
  %2180 = vmatpush1.msra.mxu0 0.0
  %2181 = vmatprep.subr.mxu0 0.0
  %2182 = vmatpush1.msra.mxu0 0.0
  %2183 = vmatprep.mubr.f32.mxu0 0.0
  %2184 = vmatmul.mubr.f32.gmra.mrb[0].mxu0 %v242
  %v2185 = vpop.f32.mrb[0].mxu0
  %v2186 = vadd.f32 0.0, %v2185
  %v2187 = vpop.f32.mrb[0].mxu0
  %2188 = vdwg.mxu0
  %v2189 = vadd.f32 %v2030, %v2186
  %v2190 = vmul.f32 %v2189, 0.5
  %v2191 = vtanh.pop %v2190
  %v2192 = vadd.f32 %v2191, 1.0
  %v2193 = vmul.f32 %v2192, 0.5
  %v2194 = vtanh.pop %v2189
  %v2195 = vmul.f32 %v2193, 0.0
  %2197 = vrot.lane.b32.xlu0 %v2194, 64
  %v2198 = vpop.permute.xlu0 %2197
  %v2200 = vmul.f32 %v2193, %v2198
  %2202 = vrot.lane.b32.xlu0 %v2200, 32
  %v2203 = vpop.permute.xlu0 %2202
  %v2205 = vadd.f32 %v2195, %v2203
  %v2206 = vtanh.pop %v2205
  %2208 = vrot.lane.b32.xlu0 %v2206, 64
  %v2209 = vpop.permute.xlu0 %2208
  %v2211 = vmul.f32 %v2193, %v2209
  %2212 = vmatprep.subr.mxu0 0.0
  %2213 = vmatpush1.msra.mxu0 %v1945
  %2214 = vmatprep.subr.mxu0 0.0
  %2215 = vmatpush1.msra.mxu0 %v1946
  %2216 = vmatprep.subr.mxu0 0.0
  %2217 = vmatpush1.msra.mxu0 %v1947
  %2218 = vmatprep.subr.mxu0 0.0
  %2219 = vmatpush1.msra.mxu0 %v1948
  %2220 = vmatprep.subr.mxu0 0.0
  %2221 = vmatpush1.msra.mxu0 0.0
  %2222 = vmatprep.subr.mxu0 0.0
  %2223 = vmatpush1.msra.mxu0 0.0
  %2224 = vmatprep.subr.mxu0 0.0
  %2225 = vmatpush1.msra.mxu0 0.0
  %2226 = vmatprep.subr.mxu0 0.0
  %2227 = vmatpush1.msra.mxu0 0.0
  %2228 = vmatprep.subr.mxu0 0.0
  %2229 = vmatpush1.msra.mxu0 0.0
  %2230 = vmatprep.subr.mxu0 0.0
  %2231 = vmatpush1.msra.mxu0 0.0
  %2232 = vmatprep.subr.mxu0 0.0
  %2233 = vmatpush1.msra.mxu0 0.0
  %2234 = vmatprep.subr.mxu0 0.0
  %2235 = vmatpush1.msra.mxu0 0.0
  %2236 = vmatprep.subr.mxu0 0.0
  %2237 = vmatpush1.msra.mxu0 0.0
  %2238 = vmatprep.subr.mxu0 0.0
  %2239 = vmatpush1.msra.mxu0 0.0
  %2240 = vmatprep.subr.mxu0 0.0
  %2241 = vmatpush1.msra.mxu0 0.0
  %2242 = vmatprep.subr.mxu0 0.0
  %2243 = vmatpush1.msra.mxu0 0.0
  %2244 = vmatprep.subr.mxu0 0.0
  %2245 = vmatpush1.msra.mxu0 0.0
  %2246 = vmatprep.subr.mxu0 0.0
  %2247 = vmatpush1.msra.mxu0 0.0
  %2248 = vmatprep.subr.mxu0 0.0
  %2249 = vmatpush1.msra.mxu0 0.0
  %2250 = vmatprep.subr.mxu0 0.0
  %2251 = vmatpush1.msra.mxu0 0.0
  %2252 = vmatprep.subr.mxu0 0.0
  %2253 = vmatpush1.msra.mxu0 0.0
  %2254 = vmatprep.subr.mxu0 0.0
  %2255 = vmatpush1.msra.mxu0 0.0
  %2256 = vmatprep.subr.mxu0 0.0
  %2257 = vmatpush1.msra.mxu0 0.0
  %2258 = vmatprep.subr.mxu0 0.0
  %2259 = vmatpush1.msra.mxu0 0.0
  %2260 = vmatprep.subr.mxu0 0.0
  %2261 = vmatpush1.msra.mxu0 0.0
  %2262 = vmatprep.subr.mxu0 0.0
  %2263 = vmatpush1.msra.mxu0 0.0
  %2264 = vmatprep.subr.mxu0 0.0
  %2265 = vmatpush1.msra.mxu0 0.0
  %2266 = vmatprep.subr.mxu0 0.0
  %2267 = vmatpush1.msra.mxu0 0.0
  %2268 = vmatprep.subr.mxu0 0.0
  %2269 = vmatpush1.msra.mxu0 0.0
  %2270 = vmatprep.subr.mxu0 0.0
  %2271 = vmatpush1.msra.mxu0 0.0
  %2272 = vmatprep.subr.mxu0 0.0
  %2273 = vmatpush1.msra.mxu0 0.0
  %2274 = vmatprep.subr.mxu0 0.0
  %2275 = vmatpush1.msra.mxu0 0.0
  %2276 = vmatprep.mubr.f32.mxu0 0.0
  %2277 = vmatmul.mubr.f32.gmra.mrb[0].mxu0 %v242
  %v2278 = vpop.f32.mrb[0].mxu0
  %v2279 = vadd.f32 0.0, %v2278
  %v2280 = vpop.f32.mrb[0].mxu0
  %2281 = vdwg.mxu0
  %v2283 = vrot.slane %v2279, 2
  %v2285 = vadd.f32 %v2116, %v2283
  %v2286 = vmul.f32 %v2285, 0.5
  %v2287 = vtanh.pop %v2286
  %v2288 = vadd.f32 %v2287, 1.0
  %v2289 = vmul.f32 %v2288, 0.5
  %v2290 = vtanh.pop %v2285
  %v2291 = vmul.f32 %v2289, 0.0
  %2293 = vrot.lane.b32.xlu0 %v2290, 64
  %v2294 = vpop.permute.xlu0 %2293
  %v2296 = vmul.f32 %v2289, %v2294
  %2298 = vrot.lane.b32.xlu0 %v2296, 32
  %v2299 = vpop.permute.xlu0 %2298
  %v2301 = vadd.f32 %v2291, %v2299
  %v2302 = vtanh.pop %v2301
  %2304 = vrot.lane.b32.xlu0 %v2302, 64
  %v2305 = vpop.permute.xlu0 %2304
  %v2307 = vmul.f32 %v2289, %v2305
  %2309 = vrot.lane.b32.xlu0 %v2211, 32
  %v2310 = vpop.permute.xlu0 %2309
  %v2311 = vsel %vm78, %v2310, 0
  %2313 = vmatprep.subr.mxu0 0.0
  %2314 = vmatpush1.msra.mxu0 %v1932
  %2315 = vmatprep.subr.mxu0 0.0
  %2316 = vmatpush1.msra.mxu0 %v1933
  %2317 = vmatprep.subr.mxu0 0.0
  %2318 = vmatpush1.msra.mxu0 %v1934
  %2319 = vmatprep.subr.mxu0 0.0
  %2320 = vmatpush1.msra.mxu0 %v1935
  %2321 = vmatprep.subr.mxu0 0.0
  %2322 = vmatpush1.msra.mxu0 0.0
  %2323 = vmatprep.subr.mxu0 0.0
  %2324 = vmatpush1.msra.mxu0 0.0
  %2325 = vmatprep.subr.mxu0 0.0
  %2326 = vmatpush1.msra.mxu0 0.0
  %2327 = vmatprep.subr.mxu0 0.0
  %2328 = vmatpush1.msra.mxu0 0.0
  %2329 = vmatprep.subr.mxu0 0.0
  %2330 = vmatpush1.msra.mxu0 0.0
  %2331 = vmatprep.subr.mxu0 0.0
  %2332 = vmatpush1.msra.mxu0 0.0
  %2333 = vmatprep.subr.mxu0 0.0
  %2334 = vmatpush1.msra.mxu0 0.0
  %2335 = vmatprep.subr.mxu0 0.0
  %2336 = vmatpush1.msra.mxu0 0.0
  %2337 = vmatprep.subr.mxu0 0.0
  %2338 = vmatpush1.msra.mxu0 0.0
  %2339 = vmatprep.subr.mxu0 0.0
  %2340 = vmatpush1.msra.mxu0 0.0
  %2341 = vmatprep.subr.mxu0 0.0
  %2342 = vmatpush1.msra.mxu0 0.0
  %2343 = vmatprep.subr.mxu0 0.0
  %2344 = vmatpush1.msra.mxu0 0.0
  %2345 = vmatprep.subr.mxu0 0.0
  %2346 = vmatpush1.msra.mxu0 0.0
  %2347 = vmatprep.subr.mxu0 0.0
  %2348 = vmatpush1.msra.mxu0 0.0
  %2349 = vmatprep.subr.mxu0 0.0
  %2350 = vmatpush1.msra.mxu0 0.0
  %2351 = vmatprep.subr.mxu0 0.0
  %2352 = vmatpush1.msra.mxu0 0.0
  %2353 = vmatprep.subr.mxu0 0.0
  %2354 = vmatpush1.msra.mxu0 0.0
  %2355 = vmatprep.subr.mxu0 0.0
  %2356 = vmatpush1.msra.mxu0 0.0
  %2357 = vmatprep.subr.mxu0 0.0
  %2358 = vmatpush1.msra.mxu0 0.0
  %2359 = vmatprep.subr.mxu0 0.0
  %2360 = vmatpush1.msra.mxu0 0.0
  %2361 = vmatprep.subr.mxu0 0.0
  %2362 = vmatpush1.msra.mxu0 0.0
  %2363 = vmatprep.subr.mxu0 0.0
  %2364 = vmatpush1.msra.mxu0 0.0
  %2365 = vmatprep.subr.mxu0 0.0
  %2366 = vmatpush1.msra.mxu0 0.0
  %2367 = vmatprep.subr.mxu0 0.0
  %2368 = vmatpush1.msra.mxu0 0.0
  %2369 = vmatprep.subr.mxu0 0.0
  %2370 = vmatpush1.msra.mxu0 0.0
  %2371 = vmatprep.subr.mxu0 0.0
  %2372 = vmatpush1.msra.mxu0 0.0
  %2373 = vmatprep.subr.mxu0 0.0
  %2374 = vmatpush1.msra.mxu0 0.0
  %2375 = vmatprep.subr.mxu0 0.0
  %2376 = vmatpush1.msra.mxu0 0.0
  %2377 = vmatprep.mubr.f32.mxu0 0.0
  %2378 = vmatmul.mubr.f32.gmra.mrb[0].mxu0 %v2311
  %v2379 = vpop.f32.mrb[0].mxu0
  %v2380 = vadd.f32 0.0, %v2379
  %v2381 = vpop.f32.mrb[0].mxu0
  %2382 = vdwg.mxu0
  %v2384 = vrot.slane %v2380, 6
  %v2386 = vadd.f32 %v2030, %v2384
  %v2387 = vmul.f32 %v2386, 0.5
  %v2388 = vtanh.pop %v2387
  %v2389 = vadd.f32 %v2388, 1.0
  %v2390 = vmul.f32 %v2389, 0.5
  %v2391 = vtanh.pop %v2386
  %v2393 = vrot.slane %v2205, 6
  %v2395 = vmul.f32 %v2390, %v2393
  %2397 = vrot.lane.b32.xlu0 %v2391, 64
  %v2398 = vpop.permute.xlu0 %2397
  %v2400 = vmul.f32 %v2390, %v2398
  %2402 = vrot.lane.b32.xlu0 %v2400, 32
  %v2403 = vpop.permute.xlu0 %2402
  %v2405 = vadd.f32 %v2395, %v2403
  %v2406 = vtanh.pop %v2405
  %2408 = vrot.lane.b32.xlu0 %v2406, 64
  %v2409 = vpop.permute.xlu0 %2408
  %v2411 = vmul.f32 %v2390, %v2409
  %v2413 = vrot.slane %v2307, 6
  %2414 = vrot.lane.b32.xlu0 %v2413, 32
  %v2415 = vpop.permute.xlu0 %2414
  %v2416 = vsel %vm78, %v2415, 0
  %2418 = vmatprep.subr.mxu0 0.0
  %2419 = vmatpush1.msra.mxu0 %v1945
  %2420 = vmatprep.subr.mxu0 0.0
  %2421 = vmatpush1.msra.mxu0 %v1946
  %2422 = vmatprep.subr.mxu0 0.0
  %2423 = vmatpush1.msra.mxu0 %v1947
  %2424 = vmatprep.subr.mxu0 0.0
  %2425 = vmatpush1.msra.mxu0 %v1948
  %2426 = vmatprep.subr.mxu0 0.0
  %2427 = vmatpush1.msra.mxu0 0.0
  %2428 = vmatprep.subr.mxu0 0.0
  %2429 = vmatpush1.msra.mxu0 0.0
  %2430 = vmatprep.subr.mxu0 0.0
  %2431 = vmatpush1.msra.mxu0 0.0
  %2432 = vmatprep.subr.mxu0 0.0
  %2433 = vmatpush1.msra.mxu0 0.0
  %2434 = vmatprep.subr.mxu0 0.0
  %2435 = vmatpush1.msra.mxu0 0.0
  %2436 = vmatprep.subr.mxu0 0.0
  %2437 = vmatpush1.msra.mxu0 0.0
  %2438 = vmatprep.subr.mxu0 0.0
  %2439 = vmatpush1.msra.mxu0 0.0
  %2440 = vmatprep.subr.mxu0 0.0
  %2441 = vmatpush1.msra.mxu0 0.0
  %2442 = vmatprep.subr.mxu0 0.0
  %2443 = vmatpush1.msra.mxu0 0.0
  %2444 = vmatprep.subr.mxu0 0.0
  %2445 = vmatpush1.msra.mxu0 0.0
  %2446 = vmatprep.subr.mxu0 0.0
  %2447 = vmatpush1.msra.mxu0 0.0
  %2448 = vmatprep.subr.mxu0 0.0
  %2449 = vmatpush1.msra.mxu0 0.0
  %2450 = vmatprep.subr.mxu0 0.0
  %2451 = vmatpush1.msra.mxu0 0.0
  %2452 = vmatprep.subr.mxu0 0.0
  %2453 = vmatpush1.msra.mxu0 0.0
  %2454 = vmatprep.subr.mxu0 0.0
  %2455 = vmatpush1.msra.mxu0 0.0
  %2456 = vmatprep.subr.mxu0 0.0
  %2457 = vmatpush1.msra.mxu0 0.0
  %2458 = vmatprep.subr.mxu0 0.0
  %2459 = vmatpush1.msra.mxu0 0.0
  %2460 = vmatprep.subr.mxu0 0.0
  %2461 = vmatpush1.msra.mxu0 0.0
  %2462 = vmatprep.subr.mxu0 0.0
  %2463 = vmatpush1.msra.mxu0 0.0
  %2464 = vmatprep.subr.mxu0 0.0
  %2465 = vmatpush1.msra.mxu0 0.0
  %2466 = vmatprep.subr.mxu0 0.0
  %2467 = vmatpush1.msra.mxu0 0.0
  %2468 = vmatprep.subr.mxu0 0.0
  %2469 = vmatpush1.msra.mxu0 0.0
  %2470 = vmatprep.subr.mxu0 0.0
  %2471 = vmatpush1.msra.mxu0 0.0
  %2472 = vmatprep.subr.mxu0 0.0
  %2473 = vmatpush1.msra.mxu0 0.0
  %2474 = vmatprep.subr.mxu0 0.0
  %2475 = vmatpush1.msra.mxu0 0.0
  %2476 = vmatprep.subr.mxu0 0.0
  %2477 = vmatpush1.msra.mxu0 0.0
  %2478 = vmatprep.subr.mxu0 0.0
  %2479 = vmatpush1.msra.mxu0 0.0
  %2480 = vmatprep.subr.mxu0 0.0
  %2481 = vmatpush1.msra.mxu0 0.0
  %2482 = vmatprep.mubr.f32.mxu0 0.0
  %2483 = vmatmul.mubr.f32.gmra.mrb[0].mxu0 %v2416
  %v2484 = vpop.f32.mrb[0].mxu0
  %v2485 = vadd.f32 0.0, %v2484
  %v2486 = vpop.f32.mrb[0].mxu0
  %2487 = vdwg.mxu0
  %v2489 = vrot.slane %v2485, 4
  %v2491 = vadd.f32 %v2116, %v2489
  %v2492 = vmul.f32 %v2491, 0.5
  %v2493 = vtanh.pop %v2492
  %v2494 = vadd.f32 %v2493, 1.0
  %v2495 = vmul.f32 %v2494, 0.5
  %v2496 = vtanh.pop %v2491
  %v2498 = vrot.slane %v2301, 2
  %v2500 = vmul.f32 %v2495, %v2498
  %2502 = vrot.lane.b32.xlu0 %v2496, 64
  %v2503 = vpop.permute.xlu0 %2502
  %v2505 = vmul.f32 %v2495, %v2503
  %2507 = vrot.lane.b32.xlu0 %v2505, 32
  %v2508 = vpop.permute.xlu0 %2507
  %v2510 = vadd.f32 %v2500, %v2508
  %v2511 = vtanh.pop %v2510
  %2513 = vrot.lane.b32.xlu0 %v2511, 64
  %v2514 = vpop.permute.xlu0 %2513
  %v2516 = vmul.f32 %v2495, %v2514
  %v2518 = vrot.slane %v2411, 2
  %2519 = vrot.lane.b32.xlu0 %v2518, 32
  %v2520 = vpop.permute.xlu0 %2519
  %v2521 = vsel %vm78, %v2520, 0
  %2523 = vmatprep.subr.mxu0 0.0
  %2524 = vmatpush1.msra.mxu0 %v1932
  %2525 = vmatprep.subr.mxu0 0.0
  %2526 = vmatpush1.msra.mxu0 %v1933
  %2527 = vmatprep.subr.mxu0 0.0
  %2528 = vmatpush1.msra.mxu0 %v1934
  %2529 = vmatprep.subr.mxu0 0.0
  %2530 = vmatpush1.msra.mxu0 %v1935
  %2531 = vmatprep.subr.mxu0 0.0
  %2532 = vmatpush1.msra.mxu0 0.0
  %2533 = vmatprep.subr.mxu0 0.0
  %2534 = vmatpush1.msra.mxu0 0.0
  %2535 = vmatprep.subr.mxu0 0.0
  %2536 = vmatpush1.msra.mxu0 0.0
  %2537 = vmatprep.subr.mxu0 0.0
  %2538 = vmatpush1.msra.mxu0 0.0
  %2539 = vmatprep.subr.mxu0 0.0
  %2540 = vmatpush1.msra.mxu0 0.0
  %2541 = vmatprep.subr.mxu0 0.0
  %2542 = vmatpush1.msra.mxu0 0.0
  %2543 = vmatprep.subr.mxu0 0.0
  %2544 = vmatpush1.msra.mxu0 0.0
  %2545 = vmatprep.subr.mxu0 0.0
  %2546 = vmatpush1.msra.mxu0 0.0
  %2547 = vmatprep.subr.mxu0 0.0
  %2548 = vmatpush1.msra.mxu0 0.0
  %2549 = vmatprep.subr.mxu0 0.0
  %2550 = vmatpush1.msra.mxu0 0.0
  %2551 = vmatprep.subr.mxu0 0.0
  %2552 = vmatpush1.msra.mxu0 0.0
  %2553 = vmatprep.subr.mxu0 0.0
  %2554 = vmatpush1.msra.mxu0 0.0
  %2555 = vmatprep.subr.mxu0 0.0
  %2556 = vmatpush1.msra.mxu0 0.0
  %2557 = vmatprep.subr.mxu0 0.0
  %2558 = vmatpush1.msra.mxu0 0.0
  %2559 = vmatprep.subr.mxu0 0.0
  %2560 = vmatpush1.msra.mxu0 0.0
  %2561 = vmatprep.subr.mxu0 0.0
  %2562 = vmatpush1.msra.mxu0 0.0
  %2563 = vmatprep.subr.mxu0 0.0
  %2564 = vmatpush1.msra.mxu0 0.0
  %2565 = vmatprep.subr.mxu0 0.0
  %2566 = vmatpush1.msra.mxu0 0.0
  %2567 = vmatprep.subr.mxu0 0.0
  %2568 = vmatpush1.msra.mxu0 0.0
  %2569 = vmatprep.subr.mxu0 0.0
  %2570 = vmatpush1.msra.mxu0 0.0
  %2571 = vmatprep.subr.mxu0 0.0
  %2572 = vmatpush1.msra.mxu0 0.0
  %2573 = vmatprep.subr.mxu0 0.0
  %2574 = vmatpush1.msra.mxu0 0.0
  %2575 = vmatprep.subr.mxu0 0.0
  %2576 = vmatpush1.msra.mxu0 0.0
  %2577 = vmatprep.subr.mxu0 0.0
  %2578 = vmatpush1.msra.mxu0 0.0
  %2579 = vmatprep.subr.mxu0 0.0
  %2580 = vmatpush1.msra.mxu0 0.0
  %2581 = vmatprep.subr.mxu0 0.0
  %2582 = vmatpush1.msra.mxu0 0.0
  %2583 = vmatprep.subr.mxu0 0.0
  %2584 = vmatpush1.msra.mxu0 0.0
  %2585 = vmatprep.subr.mxu0 0.0
  %2586 = vmatpush1.msra.mxu0 0.0
  %2587 = vmatprep.mubr.f32.mxu0 0.0
  %2588 = vmatmul.mubr.f32.gmra.mrb[0].mxu0 %v2521
  %v2589 = vpop.f32.mrb[0].mxu0
  %v2590 = vadd.f32 0.0, %v2589
  %v2591 = vpop.f32.mrb[0].mxu0
  %2592 = vdwg.mxu0
  %v2594 = vrot.slane %v2590, 4
  %v2596 = vadd.f32 %v2030, %v2594
  %v2597 = vmul.f32 %v2596, 0.5
  %v2598 = vtanh.pop %v2597
  %v2599 = vadd.f32 %v2598, 1.0
  %v2600 = vmul.f32 %v2599, 0.5
  %v2601 = vtanh.pop %v2596
  %v2603 = vrot.slane %v2405, 6
  %v2605 = vmul.f32 %v2600, %v2603
  %2607 = vrot.lane.b32.xlu0 %v2601, 64
  %v2608 = vpop.permute.xlu0 %2607
  %v2610 = vmul.f32 %v2600, %v2608
  %2612 = vrot.lane.b32.xlu0 %v2610, 32
  %v2613 = vpop.permute.xlu0 %2612
  %v2615 = vadd.f32 %v2605, %v2613
  %v2616 = vtanh.pop %v2615
  %2618 = vrot.lane.b32.xlu0 %v2616, 64
  %v2619 = vpop.permute.xlu0 %2618
  %v2621 = vmul.f32 %v2600, %v2619
  %v2623 = vrot.slane %v2516, 4
  %2624 = vrot.lane.b32.xlu0 %v2623, 32
  %v2625 = vpop.permute.xlu0 %2624
  %v2626 = vsel %vm78, %v2625, 0
  %2628 = vmatprep.subr.mxu0 0.0
  %2629 = vmatpush1.msra.mxu0 %v1945
  %2630 = vmatprep.subr.mxu0 0.0
  %2631 = vmatpush1.msra.mxu0 %v1946
  %2632 = vmatprep.subr.mxu0 0.0
  %2633 = vmatpush1.msra.mxu0 %v1947
  %2634 = vmatprep.subr.mxu0 0.0
  %2635 = vmatpush1.msra.mxu0 %v1948
  %2636 = vmatprep.subr.mxu0 0.0
  %2637 = vmatpush1.msra.mxu0 0.0
  %2638 = vmatprep.subr.mxu0 0.0
  %2639 = vmatpush1.msra.mxu0 0.0
  %2640 = vmatprep.subr.mxu0 0.0
  %2641 = vmatpush1.msra.mxu0 0.0
  %2642 = vmatprep.subr.mxu0 0.0
  %2643 = vmatpush1.msra.mxu0 0.0
  %2644 = vmatprep.subr.mxu0 0.0
  %2645 = vmatpush1.msra.mxu0 0.0
  %2646 = vmatprep.subr.mxu0 0.0
  %2647 = vmatpush1.msra.mxu0 0.0
  %2648 = vmatprep.subr.mxu0 0.0
  %2649 = vmatpush1.msra.mxu0 0.0
  %2650 = vmatprep.subr.mxu0 0.0
  %2651 = vmatpush1.msra.mxu0 0.0
  %2652 = vmatprep.subr.mxu0 0.0
  %2653 = vmatpush1.msra.mxu0 0.0
  %2654 = vmatprep.subr.mxu0 0.0
  %2655 = vmatpush1.msra.mxu0 0.0
  %2656 = vmatprep.subr.mxu0 0.0
  %2657 = vmatpush1.msra.mxu0 0.0
  %2658 = vmatprep.subr.mxu0 0.0
  %2659 = vmatpush1.msra.mxu0 0.0
  %2660 = vmatprep.subr.mxu0 0.0
  %2661 = vmatpush1.msra.mxu0 0.0
  %2662 = vmatprep.subr.mxu0 0.0
  %2663 = vmatpush1.msra.mxu0 0.0
  %2664 = vmatprep.subr.mxu0 0.0
  %2665 = vmatpush1.msra.mxu0 0.0
  %2666 = vmatprep.subr.mxu0 0.0
  %2667 = vmatpush1.msra.mxu0 0.0
  %2668 = vmatprep.subr.mxu0 0.0
  %2669 = vmatpush1.msra.mxu0 0.0
  %2670 = vmatprep.subr.mxu0 0.0
  %2671 = vmatpush1.msra.mxu0 0.0
  %2672 = vmatprep.subr.mxu0 0.0
  %2673 = vmatpush1.msra.mxu0 0.0
  %2674 = vmatprep.subr.mxu0 0.0
  %2675 = vmatpush1.msra.mxu0 0.0
  %2676 = vmatprep.subr.mxu0 0.0
  %2677 = vmatpush1.msra.mxu0 0.0
  %2678 = vmatprep.subr.mxu0 0.0
  %2679 = vmatpush1.msra.mxu0 0.0
  %2680 = vmatprep.subr.mxu0 0.0
  %2681 = vmatpush1.msra.mxu0 0.0
  %2682 = vmatprep.subr.mxu0 0.0
  %2683 = vmatpush1.msra.mxu0 0.0
  %2684 = vmatprep.subr.mxu0 0.0
  %2685 = vmatpush1.msra.mxu0 0.0
  %2686 = vmatprep.subr.mxu0 0.0
  %2687 = vmatpush1.msra.mxu0 0.0
  %2688 = vmatprep.subr.mxu0 0.0
  %2689 = vmatpush1.msra.mxu0 0.0
  %2690 = vmatprep.subr.mxu0 0.0
  %2691 = vmatpush1.msra.mxu0 0.0
  %2692 = vmatprep.mubr.f32.mxu0 0.0
  %2693 = vmatmul.mubr.f32.gmra.mrb[0].mxu0 %v2626
  %v2694 = vpop.f32.mrb[0].mxu0
  %v2695 = vadd.f32 0.0, %v2694
  %v2696 = vpop.f32.mrb[0].mxu0
  %2697 = vdwg.mxu0
  %v2699 = vrot.slane %v2695, 6
  %v2701 = vadd.f32 %v2116, %v2699
  %v2702 = vmul.f32 %v2701, 0.5
  %v2703 = vtanh.pop %v2702
  %v2704 = vadd.f32 %v2703, 1.0
  %v2705 = vmul.f32 %v2704, 0.5
  %v2706 = vtanh.pop %v2701
  %v2708 = vrot.slane %v2510, 2
  %v2710 = vmul.f32 %v2705, %v2708
  %2712 = vrot.lane.b32.xlu0 %v2706, 64
  %v2713 = vpop.permute.xlu0 %2712
  %v2715 = vmul.f32 %v2705, %v2713
  %2717 = vrot.lane.b32.xlu0 %v2715, 32
  %v2718 = vpop.permute.xlu0 %2717
  %v2720 = vadd.f32 %v2710, %v2718
  %v2721 = vtanh.pop %v2720
  %2723 = vrot.lane.b32.xlu0 %v2721, 64
  %v2724 = vpop.permute.xlu0 %2723
  %v2726 = vmul.f32 %v2705, %v2724
  %v2728 = vrot.slane %v2621, 4
  %2729 = vrot.lane.b32.xlu0 %v2728, 32
  %v2730 = vpop.permute.xlu0 %2729
  %v2731 = vsel %vm78, %v2730, 0
  %2733 = vmatprep.subr.mxu0 0.0
  %2734 = vmatpush1.msra.mxu0 %v1932
  %2735 = vmatprep.subr.mxu0 0.0
  %2736 = vmatpush1.msra.mxu0 %v1933
  %2737 = vmatprep.subr.mxu0 0.0
  %2738 = vmatpush1.msra.mxu0 %v1934
  %2739 = vmatprep.subr.mxu0 0.0
  %2740 = vmatpush1.msra.mxu0 %v1935
  %2741 = vmatprep.subr.mxu0 0.0
  %2742 = vmatpush1.msra.mxu0 0.0
  %2743 = vmatprep.subr.mxu0 0.0
  %2744 = vmatpush1.msra.mxu0 0.0
  %2745 = vmatprep.subr.mxu0 0.0
  %2746 = vmatpush1.msra.mxu0 0.0
  %2747 = vmatprep.subr.mxu0 0.0
  %2748 = vmatpush1.msra.mxu0 0.0
  %2749 = vmatprep.subr.mxu0 0.0
  %2750 = vmatpush1.msra.mxu0 0.0
  %2751 = vmatprep.subr.mxu0 0.0
  %2752 = vmatpush1.msra.mxu0 0.0
  %2753 = vmatprep.subr.mxu0 0.0
  %2754 = vmatpush1.msra.mxu0 0.0
  %2755 = vmatprep.subr.mxu0 0.0
  %2756 = vmatpush1.msra.mxu0 0.0
  %2757 = vmatprep.subr.mxu0 0.0
  %2758 = vmatpush1.msra.mxu0 0.0
  %2759 = vmatprep.subr.mxu0 0.0
  %2760 = vmatpush1.msra.mxu0 0.0
  %2761 = vmatprep.subr.mxu0 0.0
  %2762 = vmatpush1.msra.mxu0 0.0
  %2763 = vmatprep.subr.mxu0 0.0
  %2764 = vmatpush1.msra.mxu0 0.0
  %2765 = vmatprep.subr.mxu0 0.0
  %2766 = vmatpush1.msra.mxu0 0.0
  %2767 = vmatprep.subr.mxu0 0.0
  %2768 = vmatpush1.msra.mxu0 0.0
  %2769 = vmatprep.subr.mxu0 0.0
  %2770 = vmatpush1.msra.mxu0 0.0
  %2771 = vmatprep.subr.mxu0 0.0
  %2772 = vmatpush1.msra.mxu0 0.0
  %2773 = vmatprep.subr.mxu0 0.0
  %2774 = vmatpush1.msra.mxu0 0.0
  %2775 = vmatprep.subr.mxu0 0.0
  %2776 = vmatpush1.msra.mxu0 0.0
  %2777 = vmatprep.subr.mxu0 0.0
  %2778 = vmatpush1.msra.mxu0 0.0
  %2779 = vmatprep.subr.mxu0 0.0
  %2780 = vmatpush1.msra.mxu0 0.0
  %2781 = vmatprep.subr.mxu0 0.0
  %2782 = vmatpush1.msra.mxu0 0.0
  %2783 = vmatprep.subr.mxu0 0.0
  %2784 = vmatpush1.msra.mxu0 0.0
  %2785 = vmatprep.subr.mxu0 0.0
  %2786 = vmatpush1.msra.mxu0 0.0
  %2787 = vmatprep.subr.mxu0 0.0
  %2788 = vmatpush1.msra.mxu0 0.0
  %2789 = vmatprep.subr.mxu0 0.0
  %2790 = vmatpush1.msra.mxu0 0.0
  %2791 = vmatprep.subr.mxu0 0.0
  %2792 = vmatpush1.msra.mxu0 0.0
  %2793 = vmatprep.subr.mxu0 0.0
  %2794 = vmatpush1.msra.mxu0 0.0
  %2795 = vmatprep.subr.mxu0 0.0
  %2796 = vmatpush1.msra.mxu0 0.0
  %2797 = vmatprep.mubr.f32.mxu0 0.0
  %2798 = vmatmul.mubr.f32.gmra.mrb[0].mxu0 %v2731
  %v2799 = vpop.f32.mrb[0].mxu0
  %v2800 = vadd.f32 0.0, %v2799
  %v2801 = vpop.f32.mrb[0].mxu0
  %2802 = vdwg.mxu0
  %v2804 = vrot.slane %v2800, 2
  %v2806 = vadd.f32 %v2030, %v2804
  %v2807 = vmul.f32 %v2806, 0.5
  %v2808 = vtanh.pop %v2807
  %v2809 = vadd.f32 %v2808, 1.0
  %v2810 = vmul.f32 %v2809, 0.5
  %v2811 = vtanh.pop %v2806
  %v2813 = vrot.slane %v2615, 6
  %v2815 = vmul.f32 %v2810, %v2813
  %2817 = vrot.lane.b32.xlu0 %v2811, 64
  %v2818 = vpop.permute.xlu0 %2817
  %v2820 = vmul.f32 %v2810, %v2818
  %2822 = vrot.lane.b32.xlu0 %v2820, 32
  %v2823 = vpop.permute.xlu0 %2822
  %v2825 = vadd.f32 %v2815, %v2823
  %v2826 = vtanh.pop %v2825
  %2828 = vrot.lane.b32.xlu0 %v2826, 64
  %v2829 = vpop.permute.xlu0 %2828
  %v2831 = vmul.f32 %v2810, %v2829
  %v2833 = vrot.slane %v2726, 2
  %2834 = vrot.lane.b32.xlu0 %v2833, 32
  %v2835 = vpop.permute.xlu0 %2834
  %v2836 = vsel %vm78, %v2835, 0
  %2838 = vmatprep.subr.mxu0 0.0
  %2839 = vmatpush1.msra.mxu0 %v1945
  %2840 = vmatprep.subr.mxu0 0.0
  %2841 = vmatpush1.msra.mxu0 %v1946
  %2842 = vmatprep.subr.mxu0 0.0
  %2843 = vmatpush1.msra.mxu0 %v1947
  %2844 = vmatprep.subr.mxu0 0.0
  %2845 = vmatpush1.msra.mxu0 %v1948
  %2846 = vmatprep.subr.mxu0 0.0
  %2847 = vmatpush1.msra.mxu0 0.0
  %2848 = vmatprep.subr.mxu0 0.0
  %2849 = vmatpush1.msra.mxu0 0.0
  %2850 = vmatprep.subr.mxu0 0.0
  %2851 = vmatpush1.msra.mxu0 0.0
  %2852 = vmatprep.subr.mxu0 0.0
  %2853 = vmatpush1.msra.mxu0 0.0
  %2854 = vmatprep.subr.mxu0 0.0
  %2855 = vmatpush1.msra.mxu0 0.0
  %2856 = vmatprep.subr.mxu0 0.0
  %2857 = vmatpush1.msra.mxu0 0.0
  %2858 = vmatprep.subr.mxu0 0.0
  %2859 = vmatpush1.msra.mxu0 0.0
  %2860 = vmatprep.subr.mxu0 0.0
  %2861 = vmatpush1.msra.mxu0 0.0
  %2862 = vmatprep.subr.mxu0 0.0
  %2863 = vmatpush1.msra.mxu0 0.0
  %2864 = vmatprep.subr.mxu0 0.0
  %2865 = vmatpush1.msra.mxu0 0.0
  %2866 = vmatprep.subr.mxu0 0.0
  %2867 = vmatpush1.msra.mxu0 0.0
  %2868 = vmatprep.subr.mxu0 0.0
  %2869 = vmatpush1.msra.mxu0 0.0
  %2870 = vmatprep.subr.mxu0 0.0
  %2871 = vmatpush1.msra.mxu0 0.0
  %2872 = vmatprep.subr.mxu0 0.0
  %2873 = vmatpush1.msra.mxu0 0.0
  %2874 = vmatprep.subr.mxu0 0.0
  %2875 = vmatpush1.msra.mxu0 0.0
  %2876 = vmatprep.subr.mxu0 0.0
  %2877 = vmatpush1.msra.mxu0 0.0
  %2878 = vmatprep.subr.mxu0 0.0
  %2879 = vmatpush1.msra.mxu0 0.0
  %2880 = vmatprep.subr.mxu0 0.0
  %2881 = vmatpush1.msra.mxu0 0.0
  %2882 = vmatprep.subr.mxu0 0.0
  %2883 = vmatpush1.msra.mxu0 0.0
  %2884 = vmatprep.subr.mxu0 0.0
  %2885 = vmatpush1.msra.mxu0 0.0
  %2886 = vmatprep.subr.mxu0 0.0
  %2887 = vmatpush1.msra.mxu0 0.0
  %2888 = vmatprep.subr.mxu0 0.0
  %2889 = vmatpush1.msra.mxu0 0.0
  %2890 = vmatprep.subr.mxu0 0.0
  %2891 = vmatpush1.msra.mxu0 0.0
  %2892 = vmatprep.subr.mxu0 0.0
  %2893 = vmatpush1.msra.mxu0 0.0
  %2894 = vmatprep.subr.mxu0 0.0
  %2895 = vmatpush1.msra.mxu0 0.0
  %2896 = vmatprep.subr.mxu0 0.0
  %2897 = vmatpush1.msra.mxu0 0.0
  %2898 = vmatprep.subr.mxu0 0.0
  %2899 = vmatpush1.msra.mxu0 0.0
  %2900 = vmatprep.subr.mxu0 0.0
  %2901 = vmatpush1.msra.mxu0 0.0
  %2902 = vmatprep.mubr.f32.mxu0 0.0
  %2903 = vmatmul.mubr.f32.gmra.mrb[0].mxu0 %v2836
  %v2904 = vpop.f32.mrb[0].mxu0
  %v2905 = vadd.f32 0.0, %v2904
  %v2906 = vpop.f32.mrb[0].mxu0
  %2907 = vdwg.mxu0
  %v2908 = vadd.f32 %v2116, %v2905
  %v2909 = vmul.f32 %v2908, 0.5
  %v2910 = vtanh.pop %v2909
  %v2911 = vadd.f32 %v2910, 1.0
  %v2912 = vmul.f32 %v2911, 0.5
  %v2913 = vtanh.pop %v2908
  %v2915 = vrot.slane %v2720, 2
  %v2917 = vmul.f32 %v2912, %v2915
  %2919 = vrot.lane.b32.xlu0 %v2913, 64
  %v2920 = vpop.permute.xlu0 %2919
  %v2922 = vmul.f32 %v2912, %v2920
  %2924 = vrot.lane.b32.xlu0 %v2922, 32
  %v2925 = vpop.permute.xlu0 %2924
  %v2927 = vadd.f32 %v2917, %v2925
  %v2928 = vtanh.pop %v2927
  %2930 = vrot.lane.b32.xlu0 %v2928, 64
  %v2931 = vpop.permute.xlu0 %2930
  %v2933 = vmul.f32 %v2912, %v2931
  %v2935 = vrot.slane %v2831, 6
  %2936 = vrot.lane.b32.xlu0 %v2935, 32
  %v2937 = vpop.permute.xlu0 %2936
  %v2938 = vsel %vm78, %v2937, 0
  %2940 = vmatprep.subr.mxu0 0.0
  %2941 = vmatpush1.msra.mxu0 %v1932
  %2942 = vmatprep.subr.mxu0 0.0
  %2943 = vmatpush1.msra.mxu0 %v1933
  %2944 = vmatprep.subr.mxu0 0.0
  %2945 = vmatpush1.msra.mxu0 %v1934
  %2946 = vmatprep.subr.mxu0 0.0
  %2947 = vmatpush1.msra.mxu0 %v1935
  %2948 = vmatprep.subr.mxu0 0.0
  %2949 = vmatpush1.msra.mxu0 0.0
  %2950 = vmatprep.subr.mxu0 0.0
  %2951 = vmatpush1.msra.mxu0 0.0
  %2952 = vmatprep.subr.mxu0 0.0
  %2953 = vmatpush1.msra.mxu0 0.0
  %2954 = vmatprep.subr.mxu0 0.0
  %2955 = vmatpush1.msra.mxu0 0.0
  %2956 = vmatprep.subr.mxu0 0.0
  %2957 = vmatpush1.msra.mxu0 0.0
  %2958 = vmatprep.subr.mxu0 0.0
  %2959 = vmatpush1.msra.mxu0 0.0
  %2960 = vmatprep.subr.mxu0 0.0
  %2961 = vmatpush1.msra.mxu0 0.0
  %2962 = vmatprep.subr.mxu0 0.0
  %2963 = vmatpush1.msra.mxu0 0.0
  %2964 = vmatprep.subr.mxu0 0.0
  %2965 = vmatpush1.msra.mxu0 0.0
  %2966 = vmatprep.subr.mxu0 0.0
  %2967 = vmatpush1.msra.mxu0 0.0
  %2968 = vmatprep.subr.mxu0 0.0
  %2969 = vmatpush1.msra.mxu0 0.0
  %2970 = vmatprep.subr.mxu0 0.0
  %2971 = vmatpush1.msra.mxu0 0.0
  %2972 = vmatprep.subr.mxu0 0.0
  %2973 = vmatpush1.msra.mxu0 0.0
  %2974 = vmatprep.subr.mxu0 0.0
  %2975 = vmatpush1.msra.mxu0 0.0
  %2976 = vmatprep.subr.mxu0 0.0
  %2977 = vmatpush1.msra.mxu0 0.0
  %2978 = vmatprep.subr.mxu0 0.0
  %2979 = vmatpush1.msra.mxu0 0.0
  %2980 = vmatprep.subr.mxu0 0.0
  %2981 = vmatpush1.msra.mxu0 0.0
  %2982 = vmatprep.subr.mxu0 0.0
  %2983 = vmatpush1.msra.mxu0 0.0
  %2984 = vmatprep.subr.mxu0 0.0
  %2985 = vmatpush1.msra.mxu0 0.0
  %2986 = vmatprep.subr.mxu0 0.0
  %2987 = vmatpush1.msra.mxu0 0.0
  %2988 = vmatprep.subr.mxu0 0.0
  %2989 = vmatpush1.msra.mxu0 0.0
  %2990 = vmatprep.subr.mxu0 0.0
  %2991 = vmatpush1.msra.mxu0 0.0
  %2992 = vmatprep.subr.mxu0 0.0
  %2993 = vmatpush1.msra.mxu0 0.0
  %2994 = vmatprep.subr.mxu0 0.0
  %2995 = vmatpush1.msra.mxu0 0.0
  %2996 = vmatprep.subr.mxu0 0.0
  %2997 = vmatpush1.msra.mxu0 0.0
  %2998 = vmatprep.subr.mxu0 0.0
  %2999 = vmatpush1.msra.mxu0 0.0
  %3000 = vmatprep.subr.mxu0 0.0
  %3001 = vmatpush1.msra.mxu0 0.0
  %3002 = vmatprep.subr.mxu0 0.0
  %3003 = vmatpush1.msra.mxu0 0.0
  %3004 = vmatprep.mubr.f32.mxu0 0.0
  %3005 = vmatmul.mubr.f32.gmra.mrb[0].mxu0 %v2938
  %v3006 = vpop.f32.mrb[0].mxu0
  %v3007 = vadd.f32 0.0, %v3006
  %v3008 = vpop.f32.mrb[0].mxu0
  %3009 = vdwg.mxu0
  %v3010 = vadd.f32 %v2035, %v3007
  %v3011 = vmul.f32 %v3010, 0.5
  %v3012 = vtanh.pop %v3011
  %v3013 = vadd.f32 %v3012, 1.0
  %v3014 = vmul.f32 %v3013, 0.5
  %v3015 = vtanh.pop %v3010
  %v3017 = vrot.slane %v2825, 6
  %v3019 = vmul.f32 %v3014, %v3017
  %3021 = vrot.lane.b32.xlu0 %v3015, 64
  %v3022 = vpop.permute.xlu0 %3021
  %v3024 = vmul.f32 %v3014, %v3022
  %3026 = vrot.lane.b32.xlu0 %v3024, 32
  %v3027 = vpop.permute.xlu0 %3026
  %v3029 = vadd.f32 %v3019, %v3027
  %v3030 = vtanh.pop %v3029
  %3032 = vrot.lane.b32.xlu0 %v3030, 64
  %v3033 = vpop.permute.xlu0 %3032
  %v3035 = vmul.f32 %v3014, %v3033
  %3037 = vrot.lane.b32.xlu0 %v2933, 32
  %v3038 = vpop.permute.xlu0 %3037
  %v3039 = vsel %vm78, %v3038, 0
  %3041 = vmatprep.subr.mxu0 0.0
  %3042 = vmatpush1.msra.mxu0 %v1945
  %3043 = vmatprep.subr.mxu0 0.0
  %3044 = vmatpush1.msra.mxu0 %v1946
  %3045 = vmatprep.subr.mxu0 0.0
  %3046 = vmatpush1.msra.mxu0 %v1947
  %3047 = vmatprep.subr.mxu0 0.0
  %3048 = vmatpush1.msra.mxu0 %v1948
  %3049 = vmatprep.subr.mxu0 0.0
  %3050 = vmatpush1.msra.mxu0 0.0
  %3051 = vmatprep.subr.mxu0 0.0
  %3052 = vmatpush1.msra.mxu0 0.0
  %3053 = vmatprep.subr.mxu0 0.0
  %3054 = vmatpush1.msra.mxu0 0.0
  %3055 = vmatprep.subr.mxu0 0.0
  %3056 = vmatpush1.msra.mxu0 0.0
  %3057 = vmatprep.subr.mxu0 0.0
  %3058 = vmatpush1.msra.mxu0 0.0
  %3059 = vmatprep.subr.mxu0 0.0
  %3060 = vmatpush1.msra.mxu0 0.0
  %3061 = vmatprep.subr.mxu0 0.0
  %3062 = vmatpush1.msra.mxu0 0.0
  %3063 = vmatprep.subr.mxu0 0.0
  %3064 = vmatpush1.msra.mxu0 0.0
  %3065 = vmatprep.subr.mxu0 0.0
  %3066 = vmatpush1.msra.mxu0 0.0
  %3067 = vmatprep.subr.mxu0 0.0
  %3068 = vmatpush1.msra.mxu0 0.0
  %3069 = vmatprep.subr.mxu0 0.0
  %3070 = vmatpush1.msra.mxu0 0.0
  %3071 = vmatprep.subr.mxu0 0.0
  %3072 = vmatpush1.msra.mxu0 0.0
  %3073 = vmatprep.subr.mxu0 0.0
  %3074 = vmatpush1.msra.mxu0 0.0
  %3075 = vmatprep.subr.mxu0 0.0
  %3076 = vmatpush1.msra.mxu0 0.0
  %3077 = vmatprep.subr.mxu0 0.0
  %3078 = vmatpush1.msra.mxu0 0.0
  %3079 = vmatprep.subr.mxu0 0.0
  %3080 = vmatpush1.msra.mxu0 0.0
  %3081 = vmatprep.subr.mxu0 0.0
  %3082 = vmatpush1.msra.mxu0 0.0
  %3083 = vmatprep.subr.mxu0 0.0
  %3084 = vmatpush1.msra.mxu0 0.0
  %3085 = vmatprep.subr.mxu0 0.0
  %3086 = vmatpush1.msra.mxu0 0.0
  %3087 = vmatprep.subr.mxu0 0.0
  %3088 = vmatpush1.msra.mxu0 0.0
  %3089 = vmatprep.subr.mxu0 0.0
  %3090 = vmatpush1.msra.mxu0 0.0
  %3091 = vmatprep.subr.mxu0 0.0
  %3092 = vmatpush1.msra.mxu0 0.0
  %3093 = vmatprep.subr.mxu0 0.0
  %3094 = vmatpush1.msra.mxu0 0.0
  %3095 = vmatprep.subr.mxu0 0.0
  %3096 = vmatpush1.msra.mxu0 0.0
  %3097 = vmatprep.subr.mxu0 0.0
  %3098 = vmatpush1.msra.mxu0 0.0
  %3099 = vmatprep.subr.mxu0 0.0
  %3100 = vmatpush1.msra.mxu0 0.0
  %3101 = vmatprep.subr.mxu0 0.0
  %3102 = vmatpush1.msra.mxu0 0.0
  %3103 = vmatprep.subr.mxu0 0.0
  %3104 = vmatpush1.msra.mxu0 0.0
  %3105 = vmatprep.mubr.f32.mxu0 0.0
  %3106 = vmatmul.mubr.f32.gmra.mrb[0].mxu0 %v3039
  %v3107 = vpop.f32.mrb[0].mxu0
  %v3108 = vadd.f32 0.0, %v3107
  %v3109 = vpop.f32.mrb[0].mxu0
  %3110 = vdwg.mxu0
  %v3112 = vrot.slane %v3108, 2
  %v3114 = vadd.f32 %v2111, %v3112
  %v3115 = vmul.f32 %v3114, 0.5
  %v3116 = vtanh.pop %v3115
  %v3117 = vadd.f32 %v3116, 1.0
  %v3118 = vmul.f32 %v3117, 0.5
  %v3119 = vtanh.pop %v3114
  %v3121 = vrot.slane %v2927, 2
  %v3123 = vmul.f32 %v3118, %v3121
  %3125 = vrot.lane.b32.xlu0 %v3119, 64
  %v3126 = vpop.permute.xlu0 %3125
  %v3128 = vmul.f32 %v3118, %v3126
  %3130 = vrot.lane.b32.xlu0 %v3128, 32
  %v3131 = vpop.permute.xlu0 %3130
  %v3133 = vadd.f32 %v3123, %v3131
  %v3134 = vtanh.pop %v3133
  %3136 = vrot.lane.b32.xlu0 %v3134, 64
  %v3137 = vpop.permute.xlu0 %3136
  %v3139 = vmul.f32 %v3118, %v3137
  %3141 = vrot.lane.b32.xlu0 %v3035, 32
  %v3142 = vpop.permute.xlu0 %3141
  %v3143 = vsel %vm78, %v3142, 0
  %3145 = vmatprep.subr.mxu0 0.0
  %3146 = vmatpush1.msra.mxu0 %v1932
  %3147 = vmatprep.subr.mxu0 0.0
  %3148 = vmatpush1.msra.mxu0 %v1933
  %3149 = vmatprep.subr.mxu0 0.0
  %3150 = vmatpush1.msra.mxu0 %v1934
  %3151 = vmatprep.subr.mxu0 0.0
  %3152 = vmatpush1.msra.mxu0 %v1935
  %3153 = vmatprep.subr.mxu0 0.0
  %3154 = vmatpush1.msra.mxu0 0.0
  %3155 = vmatprep.subr.mxu0 0.0
  %3156 = vmatpush1.msra.mxu0 0.0
  %3157 = vmatprep.subr.mxu0 0.0
  %3158 = vmatpush1.msra.mxu0 0.0
  %3159 = vmatprep.subr.mxu0 0.0
  %3160 = vmatpush1.msra.mxu0 0.0
  %3161 = vmatprep.subr.mxu0 0.0
  %3162 = vmatpush1.msra.mxu0 0.0
  %3163 = vmatprep.subr.mxu0 0.0
  %3164 = vmatpush1.msra.mxu0 0.0
  %3165 = vmatprep.subr.mxu0 0.0
  %3166 = vmatpush1.msra.mxu0 0.0
  %3167 = vmatprep.subr.mxu0 0.0
  %3168 = vmatpush1.msra.mxu0 0.0
  %3169 = vmatprep.subr.mxu0 0.0
  %3170 = vmatpush1.msra.mxu0 0.0
  %3171 = vmatprep.subr.mxu0 0.0
  %3172 = vmatpush1.msra.mxu0 0.0
  %3173 = vmatprep.subr.mxu0 0.0
  %3174 = vmatpush1.msra.mxu0 0.0
  %3175 = vmatprep.subr.mxu0 0.0
  %3176 = vmatpush1.msra.mxu0 0.0
  %3177 = vmatprep.subr.mxu0 0.0
  %3178 = vmatpush1.msra.mxu0 0.0
  %3179 = vmatprep.subr.mxu0 0.0
  %3180 = vmatpush1.msra.mxu0 0.0
  %3181 = vmatprep.subr.mxu0 0.0
  %3182 = vmatpush1.msra.mxu0 0.0
  %3183 = vmatprep.subr.mxu0 0.0
  %3184 = vmatpush1.msra.mxu0 0.0
  %3185 = vmatprep.subr.mxu0 0.0
  %3186 = vmatpush1.msra.mxu0 0.0
  %3187 = vmatprep.subr.mxu0 0.0
  %3188 = vmatpush1.msra.mxu0 0.0
  %3189 = vmatprep.subr.mxu0 0.0
  %3190 = vmatpush1.msra.mxu0 0.0
  %3191 = vmatprep.subr.mxu0 0.0
  %3192 = vmatpush1.msra.mxu0 0.0
  %3193 = vmatprep.subr.mxu0 0.0
  %3194 = vmatpush1.msra.mxu0 0.0
  %3195 = vmatprep.subr.mxu0 0.0
  %3196 = vmatpush1.msra.mxu0 0.0
  %3197 = vmatprep.subr.mxu0 0.0
  %3198 = vmatpush1.msra.mxu0 0.0
  %3199 = vmatprep.subr.mxu0 0.0
  %3200 = vmatpush1.msra.mxu0 0.0
  %3201 = vmatprep.subr.mxu0 0.0
  %3202 = vmatpush1.msra.mxu0 0.0
  %3203 = vmatprep.subr.mxu0 0.0
  %3204 = vmatpush1.msra.mxu0 0.0
  %3205 = vmatprep.subr.mxu0 0.0
  %3206 = vmatpush1.msra.mxu0 0.0
  %3207 = vmatprep.subr.mxu0 0.0
  %3208 = vmatpush1.msra.mxu0 0.0
  %3209 = vmatprep.mubr.f32.mxu0 0.0
  %3210 = vmatmul.mubr.f32.gmra.mrb[0].mxu0 %v3143
  %v3211 = vpop.f32.mrb[0].mxu0
  %v3212 = vadd.f32 0.0, %v3211
  %v3213 = vpop.f32.mrb[0].mxu0
  %3214 = vdwg.mxu0
  %v3216 = vrot.slane %v3212, 6
  %v3218 = vadd.f32 %v2035, %v3216
  %v3219 = vmul.f32 %v3218, 0.5
  %v3220 = vtanh.pop %v3219
  %v3221 = vadd.f32 %v3220, 1.0
  %v3222 = vmul.f32 %v3221, 0.5
  %v3223 = vtanh.pop %v3218
  %v3225 = vrot.slane %v3029, 6
  %v3227 = vmul.f32 %v3222, %v3225
  %3229 = vrot.lane.b32.xlu0 %v3223, 64
  %v3230 = vpop.permute.xlu0 %3229
  %v3232 = vmul.f32 %v3222, %v3230
  %3234 = vrot.lane.b32.xlu0 %v3232, 32
  %v3235 = vpop.permute.xlu0 %3234
  %v3237 = vadd.f32 %v3227, %v3235
  %v3238 = vtanh.pop %v3237
  %3240 = vrot.lane.b32.xlu0 %v3238, 64
  %v3241 = vpop.permute.xlu0 %3240
  %v3243 = vmul.f32 %v3222, %v3241
  %v3245 = vrot.slane %v3139, 6
  %3246 = vrot.lane.b32.xlu0 %v3245, 32
  %v3247 = vpop.permute.xlu0 %3246
  %v3248 = vsel %vm78, %v3247, 0
  %3250 = vmatprep.subr.mxu0 0.0
  %3251 = vmatpush1.msra.mxu0 %v1945
  %3252 = vmatprep.subr.mxu0 0.0
  %3253 = vmatpush1.msra.mxu0 %v1946
  %3254 = vmatprep.subr.mxu0 0.0
  %3255 = vmatpush1.msra.mxu0 %v1947
  %3256 = vmatprep.subr.mxu0 0.0
  %3257 = vmatpush1.msra.mxu0 %v1948
  %3258 = vmatprep.subr.mxu0 0.0
  %3259 = vmatpush1.msra.mxu0 0.0
  %3260 = vmatprep.subr.mxu0 0.0
  %3261 = vmatpush1.msra.mxu0 0.0
  %3262 = vmatprep.subr.mxu0 0.0
  %3263 = vmatpush1.msra.mxu0 0.0
  %3264 = vmatprep.subr.mxu0 0.0
  %3265 = vmatpush1.msra.mxu0 0.0
  %3266 = vmatprep.subr.mxu0 0.0
  %3267 = vmatpush1.msra.mxu0 0.0
  %3268 = vmatprep.subr.mxu0 0.0
  %3269 = vmatpush1.msra.mxu0 0.0
  %3270 = vmatprep.subr.mxu0 0.0
  %3271 = vmatpush1.msra.mxu0 0.0
  %3272 = vmatprep.subr.mxu0 0.0
  %3273 = vmatpush1.msra.mxu0 0.0
  %3274 = vmatprep.subr.mxu0 0.0
  %3275 = vmatpush1.msra.mxu0 0.0
  %3276 = vmatprep.subr.mxu0 0.0
  %3277 = vmatpush1.msra.mxu0 0.0
  %3278 = vmatprep.subr.mxu0 0.0
  %3279 = vmatpush1.msra.mxu0 0.0
  %3280 = vmatprep.subr.mxu0 0.0
  %3281 = vmatpush1.msra.mxu0 0.0
  %3282 = vmatprep.subr.mxu0 0.0
  %3283 = vmatpush1.msra.mxu0 0.0
  %3284 = vmatprep.subr.mxu0 0.0
  %3285 = vmatpush1.msra.mxu0 0.0
  %3286 = vmatprep.subr.mxu0 0.0
  %3287 = vmatpush1.msra.mxu0 0.0
  %3288 = vmatprep.subr.mxu0 0.0
  %3289 = vmatpush1.msra.mxu0 0.0
  %3290 = vmatprep.subr.mxu0 0.0
  %3291 = vmatpush1.msra.mxu0 0.0
  %3292 = vmatprep.subr.mxu0 0.0
  %3293 = vmatpush1.msra.mxu0 0.0
  %3294 = vmatprep.subr.mxu0 0.0
  %3295 = vmatpush1.msra.mxu0 0.0
  %3296 = vmatprep.subr.mxu0 0.0
  %3297 = vmatpush1.msra.mxu0 0.0
  %3298 = vmatprep.subr.mxu0 0.0
  %3299 = vmatpush1.msra.mxu0 0.0
  %3300 = vmatprep.subr.mxu0 0.0
  %3301 = vmatpush1.msra.mxu0 0.0
  %3302 = vmatprep.subr.mxu0 0.0
  %3303 = vmatpush1.msra.mxu0 0.0
  %3304 = vmatprep.subr.mxu0 0.0
  %3305 = vmatpush1.msra.mxu0 0.0
  %3306 = vmatprep.subr.mxu0 0.0
  %3307 = vmatpush1.msra.mxu0 0.0
  %3308 = vmatprep.subr.mxu0 0.0
  %3309 = vmatpush1.msra.mxu0 0.0
  %3310 = vmatprep.subr.mxu0 0.0
  %3311 = vmatpush1.msra.mxu0 0.0
  %3312 = vmatprep.subr.mxu0 0.0
  %3313 = vmatpush1.msra.mxu0 0.0
  %3314 = vmatprep.mubr.f32.mxu0 0.0
  %3315 = vmatmul.mubr.f32.gmra.mrb[0].mxu0 %v3248
  %v3316 = vpop.f32.mrb[0].mxu0
  %v3317 = vadd.f32 0.0, %v3316
  %v3318 = vpop.f32.mrb[0].mxu0
  %3319 = vdwg.mxu0
  %v3321 = vrot.slane %v3317, 4
  %v3323 = vadd.f32 %v2111, %v3321
  %v3324 = vmul.f32 %v3323, 0.5
  %v3325 = vtanh.pop %v3324
  %v3326 = vadd.f32 %v3325, 1.0
  %v3327 = vmul.f32 %v3326, 0.5
  %v3328 = vtanh.pop %v3323
  %v3330 = vrot.slane %v3133, 2
  %v3332 = vmul.f32 %v3327, %v3330
  %3334 = vrot.lane.b32.xlu0 %v3328, 64
  %v3335 = vpop.permute.xlu0 %3334
  %v3337 = vmul.f32 %v3327, %v3335
  %3339 = vrot.lane.b32.xlu0 %v3337, 32
  %v3340 = vpop.permute.xlu0 %3339
  %v3342 = vadd.f32 %v3332, %v3340
  %v3343 = vtanh.pop %v3342
  %3345 = vrot.lane.b32.xlu0 %v3343, 64
  %v3346 = vpop.permute.xlu0 %3345
  %v3348 = vmul.f32 %v3327, %v3346
  %v3350 = vrot.slane %v3243, 2
  %3351 = vrot.lane.b32.xlu0 %v3350, 32
  %v3352 = vpop.permute.xlu0 %3351
  %v3353 = vsel %vm78, %v3352, 0
  %3355 = vmatprep.subr.mxu0 0.0
  %3356 = vmatpush1.msra.mxu0 %v1932
  %3357 = vmatprep.subr.mxu0 0.0
  %3358 = vmatpush1.msra.mxu0 %v1933
  %3359 = vmatprep.subr.mxu0 0.0
  %3360 = vmatpush1.msra.mxu0 %v1934
  %3361 = vmatprep.subr.mxu0 0.0
  %3362 = vmatpush1.msra.mxu0 %v1935
  %3363 = vmatprep.subr.mxu0 0.0
  %3364 = vmatpush1.msra.mxu0 0.0
  %3365 = vmatprep.subr.mxu0 0.0
  %3366 = vmatpush1.msra.mxu0 0.0
  %3367 = vmatprep.subr.mxu0 0.0
  %3368 = vmatpush1.msra.mxu0 0.0
  %3369 = vmatprep.subr.mxu0 0.0
  %3370 = vmatpush1.msra.mxu0 0.0
  %3371 = vmatprep.subr.mxu0 0.0
  %3372 = vmatpush1.msra.mxu0 0.0
  %3373 = vmatprep.subr.mxu0 0.0
  %3374 = vmatpush1.msra.mxu0 0.0
  %3375 = vmatprep.subr.mxu0 0.0
  %3376 = vmatpush1.msra.mxu0 0.0
  %3377 = vmatprep.subr.mxu0 0.0
  %3378 = vmatpush1.msra.mxu0 0.0
  %3379 = vmatprep.subr.mxu0 0.0
  %3380 = vmatpush1.msra.mxu0 0.0
  %3381 = vmatprep.subr.mxu0 0.0
  %3382 = vmatpush1.msra.mxu0 0.0
  %3383 = vmatprep.subr.mxu0 0.0
  %3384 = vmatpush1.msra.mxu0 0.0
  %3385 = vmatprep.subr.mxu0 0.0
  %3386 = vmatpush1.msra.mxu0 0.0
  %3387 = vmatprep.subr.mxu0 0.0
  %3388 = vmatpush1.msra.mxu0 0.0
  %3389 = vmatprep.subr.mxu0 0.0
  %3390 = vmatpush1.msra.mxu0 0.0
  %3391 = vmatprep.subr.mxu0 0.0
  %3392 = vmatpush1.msra.mxu0 0.0
  %3393 = vmatprep.subr.mxu0 0.0
  %3394 = vmatpush1.msra.mxu0 0.0
  %3395 = vmatprep.subr.mxu0 0.0
  %3396 = vmatpush1.msra.mxu0 0.0
  %3397 = vmatprep.subr.mxu0 0.0
  %3398 = vmatpush1.msra.mxu0 0.0
  %3399 = vmatprep.subr.mxu0 0.0
  %3400 = vmatpush1.msra.mxu0 0.0
  %3401 = vmatprep.subr.mxu0 0.0
  %3402 = vmatpush1.msra.mxu0 0.0
  %3403 = vmatprep.subr.mxu0 0.0
  %3404 = vmatpush1.msra.mxu0 0.0
  %3405 = vmatprep.subr.mxu0 0.0
  %3406 = vmatpush1.msra.mxu0 0.0
  %3407 = vmatprep.subr.mxu0 0.0
  %3408 = vmatpush1.msra.mxu0 0.0
  %3409 = vmatprep.subr.mxu0 0.0
  %3410 = vmatpush1.msra.mxu0 0.0
  %3411 = vmatprep.subr.mxu0 0.0
  %3412 = vmatpush1.msra.mxu0 0.0
  %3413 = vmatprep.subr.mxu0 0.0
  %3414 = vmatpush1.msra.mxu0 0.0
  %3415 = vmatprep.subr.mxu0 0.0
  %3416 = vmatpush1.msra.mxu0 0.0
  %3417 = vmatprep.subr.mxu0 0.0
  %3418 = vmatpush1.msra.mxu0 0.0
  %3419 = vmatprep.mubr.f32.mxu0 0.0
  %3420 = vmatmul.mubr.f32.gmra.mrb[0].mxu0 %v3353
  %v3421 = vpop.f32.mrb[0].mxu0
  %v3422 = vadd.f32 0.0, %v3421
  %v3423 = vpop.f32.mrb[0].mxu0
  %3424 = vdwg.mxu0
  %v3426 = vrot.slane %v3422, 4
  %v3428 = vadd.f32 %v2035, %v3426
  %v3429 = vmul.f32 %v3428, 0.5
  %v3430 = vtanh.pop %v3429
  %v3431 = vadd.f32 %v3430, 1.0
  %v3432 = vmul.f32 %v3431, 0.5
  %v3433 = vtanh.pop %v3428
  %v3435 = vrot.slane %v3237, 6
  %v3437 = vmul.f32 %v3432, %v3435
  %3439 = vrot.lane.b32.xlu0 %v3433, 64
  %v3440 = vpop.permute.xlu0 %3439
  %v3442 = vmul.f32 %v3432, %v3440
  %3444 = vrot.lane.b32.xlu0 %v3442, 32
  %v3445 = vpop.permute.xlu0 %3444
  %v3447 = vadd.f32 %v3437, %v3445
  %v3448 = vtanh.pop %v3447
  %3450 = vrot.lane.b32.xlu0 %v3448, 64
  %v3451 = vpop.permute.xlu0 %3450
  %v3453 = vmul.f32 %v3432, %v3451
  %v3455 = vrot.slane %v3348, 4
  %3456 = vrot.lane.b32.xlu0 %v3455, 32
  %v3457 = vpop.permute.xlu0 %3456
  %v3458 = vsel %vm78, %v3457, 0
  %3460 = vmatprep.subr.mxu0 0.0
  %3461 = vmatpush1.msra.mxu0 %v1945
  %3462 = vmatprep.subr.mxu0 0.0
  %3463 = vmatpush1.msra.mxu0 %v1946
  %3464 = vmatprep.subr.mxu0 0.0
  %3465 = vmatpush1.msra.mxu0 %v1947
  %3466 = vmatprep.subr.mxu0 0.0
  %3467 = vmatpush1.msra.mxu0 %v1948
  %3468 = vmatprep.subr.mxu0 0.0
  %3469 = vmatpush1.msra.mxu0 0.0
  %3470 = vmatprep.subr.mxu0 0.0
  %3471 = vmatpush1.msra.mxu0 0.0
  %3472 = vmatprep.subr.mxu0 0.0
  %3473 = vmatpush1.msra.mxu0 0.0
  %3474 = vmatprep.subr.mxu0 0.0
  %3475 = vmatpush1.msra.mxu0 0.0
  %3476 = vmatprep.subr.mxu0 0.0
  %3477 = vmatpush1.msra.mxu0 0.0
  %3478 = vmatprep.subr.mxu0 0.0
  %3479 = vmatpush1.msra.mxu0 0.0
  %3480 = vmatprep.subr.mxu0 0.0
  %3481 = vmatpush1.msra.mxu0 0.0
  %3482 = vmatprep.subr.mxu0 0.0
  %3483 = vmatpush1.msra.mxu0 0.0
  %3484 = vmatprep.subr.mxu0 0.0
  %3485 = vmatpush1.msra.mxu0 0.0
  %3486 = vmatprep.subr.mxu0 0.0
  %3487 = vmatpush1.msra.mxu0 0.0
  %3488 = vmatprep.subr.mxu0 0.0
  %3489 = vmatpush1.msra.mxu0 0.0
  %3490 = vmatprep.subr.mxu0 0.0
  %3491 = vmatpush1.msra.mxu0 0.0
  %3492 = vmatprep.subr.mxu0 0.0
  %3493 = vmatpush1.msra.mxu0 0.0
  %3494 = vmatprep.subr.mxu0 0.0
  %3495 = vmatpush1.msra.mxu0 0.0
  %3496 = vmatprep.subr.mxu0 0.0
  %3497 = vmatpush1.msra.mxu0 0.0
  %3498 = vmatprep.subr.mxu0 0.0
  %3499 = vmatpush1.msra.mxu0 0.0
  %3500 = vmatprep.subr.mxu0 0.0
  %3501 = vmatpush1.msra.mxu0 0.0
  %3502 = vmatprep.subr.mxu0 0.0
  %3503 = vmatpush1.msra.mxu0 0.0
  %3504 = vmatprep.subr.mxu0 0.0
  %3505 = vmatpush1.msra.mxu0 0.0
  %3506 = vmatprep.subr.mxu0 0.0
  %3507 = vmatpush1.msra.mxu0 0.0
  %3508 = vmatprep.subr.mxu0 0.0
  %3509 = vmatpush1.msra.mxu0 0.0
  %3510 = vmatprep.subr.mxu0 0.0
  %3511 = vmatpush1.msra.mxu0 0.0
  %3512 = vmatprep.subr.mxu0 0.0
  %3513 = vmatpush1.msra.mxu0 0.0
  %3514 = vmatprep.subr.mxu0 0.0
  %3515 = vmatpush1.msra.mxu0 0.0
  %3516 = vmatprep.subr.mxu0 0.0
  %3517 = vmatpush1.msra.mxu0 0.0
  %3518 = vmatprep.subr.mxu0 0.0
  %3519 = vmatpush1.msra.mxu0 0.0
  %3520 = vmatprep.subr.mxu0 0.0
  %3521 = vmatpush1.msra.mxu0 0.0
  %3522 = vmatprep.subr.mxu0 0.0
  %3523 = vmatpush1.msra.mxu0 0.0
  %3524 = vmatprep.mubr.f32.mxu0 0.0
  %3525 = vmatmul.mubr.f32.gmra.mrb[0].mxu0 %v3458
  %v3526 = vpop.f32.mrb[0].mxu0
  %v3527 = vadd.f32 0.0, %v3526
  %v3528 = vpop.f32.mrb[0].mxu0
  %3529 = vdwg.mxu0
  %v3531 = vrot.slane %v3527, 6
  %v3533 = vadd.f32 %v2111, %v3531
  %v3534 = vmul.f32 %v3533, 0.5
  %v3535 = vtanh.pop %v3534
  %v3536 = vadd.f32 %v3535, 1.0
  %v3537 = vmul.f32 %v3536, 0.5
  %v3538 = vtanh.pop %v3533
  %v3540 = vrot.slane %v3342, 2
  %v3542 = vmul.f32 %v3537, %v3540
  %3544 = vrot.lane.b32.xlu0 %v3538, 64
  %v3545 = vpop.permute.xlu0 %3544
  %v3547 = vmul.f32 %v3537, %v3545
  %3549 = vrot.lane.b32.xlu0 %v3547, 32
  %v3550 = vpop.permute.xlu0 %3549
  %v3552 = vadd.f32 %v3542, %v3550
  %v3553 = vtanh.pop %v3552
  %3555 = vrot.lane.b32.xlu0 %v3553, 64
  %v3556 = vpop.permute.xlu0 %3555
  %v3558 = vmul.f32 %v3537, %v3556
  %v3560 = vrot.slane %v3453, 4
  %3561 = vrot.lane.b32.xlu0 %v3560, 32
  %v3562 = vpop.permute.xlu0 %3561
  %v3563 = vsel %vm78, %v3562, 0
  %3565 = vmatprep.subr.mxu0 0.0
  %3566 = vmatpush1.msra.mxu0 %v1932
  %3567 = vmatprep.subr.mxu0 0.0
  %3568 = vmatpush1.msra.mxu0 %v1933
  %3569 = vmatprep.subr.mxu0 0.0
  %3570 = vmatpush1.msra.mxu0 %v1934
  %3571 = vmatprep.subr.mxu0 0.0
  %3572 = vmatpush1.msra.mxu0 %v1935
  %3573 = vmatprep.subr.mxu0 0.0
  %3574 = vmatpush1.msra.mxu0 0.0
  %3575 = vmatprep.subr.mxu0 0.0
  %3576 = vmatpush1.msra.mxu0 0.0
  %3577 = vmatprep.subr.mxu0 0.0
  %3578 = vmatpush1.msra.mxu0 0.0
  %3579 = vmatprep.subr.mxu0 0.0
  %3580 = vmatpush1.msra.mxu0 0.0
  %3581 = vmatprep.subr.mxu0 0.0
  %3582 = vmatpush1.msra.mxu0 0.0
  %3583 = vmatprep.subr.mxu0 0.0
  %3584 = vmatpush1.msra.mxu0 0.0
  %3585 = vmatprep.subr.mxu0 0.0
  %3586 = vmatpush1.msra.mxu0 0.0
  %3587 = vmatprep.subr.mxu0 0.0
  %3588 = vmatpush1.msra.mxu0 0.0
  %3589 = vmatprep.subr.mxu0 0.0
  %3590 = vmatpush1.msra.mxu0 0.0
  %3591 = vmatprep.subr.mxu0 0.0
  %3592 = vmatpush1.msra.mxu0 0.0
  %3593 = vmatprep.subr.mxu0 0.0
  %3594 = vmatpush1.msra.mxu0 0.0
  %3595 = vmatprep.subr.mxu0 0.0
  %3596 = vmatpush1.msra.mxu0 0.0
  %3597 = vmatprep.subr.mxu0 0.0
  %3598 = vmatpush1.msra.mxu0 0.0
  %3599 = vmatprep.subr.mxu0 0.0
  %3600 = vmatpush1.msra.mxu0 0.0
  %3601 = vmatprep.subr.mxu0 0.0
  %3602 = vmatpush1.msra.mxu0 0.0
  %3603 = vmatprep.subr.mxu0 0.0
  %3604 = vmatpush1.msra.mxu0 0.0
  %3605 = vmatprep.subr.mxu0 0.0
  %3606 = vmatpush1.msra.mxu0 0.0
  %3607 = vmatprep.subr.mxu0 0.0
  %3608 = vmatpush1.msra.mxu0 0.0
  %3609 = vmatprep.subr.mxu0 0.0
  %3610 = vmatpush1.msra.mxu0 0.0
  %3611 = vmatprep.subr.mxu0 0.0
  %3612 = vmatpush1.msra.mxu0 0.0
  %3613 = vmatprep.subr.mxu0 0.0
  %3614 = vmatpush1.msra.mxu0 0.0
  %3615 = vmatprep.subr.mxu0 0.0
  %3616 = vmatpush1.msra.mxu0 0.0
  %3617 = vmatprep.subr.mxu0 0.0
  %3618 = vmatpush1.msra.mxu0 0.0
  %3619 = vmatprep.subr.mxu0 0.0
  %3620 = vmatpush1.msra.mxu0 0.0
  %3621 = vmatprep.subr.mxu0 0.0
  %3622 = vmatpush1.msra.mxu0 0.0
  %3623 = vmatprep.subr.mxu0 0.0
  %3624 = vmatpush1.msra.mxu0 0.0
  %3625 = vmatprep.subr.mxu0 0.0
  %3626 = vmatpush1.msra.mxu0 0.0
  %3627 = vmatprep.subr.mxu0 0.0
  %3628 = vmatpush1.msra.mxu0 0.0
  %3629 = vmatprep.mubr.f32.mxu0 0.0
  %3630 = vmatmul.mubr.f32.gmra.mrb[0].mxu0 %v3563
  %v3631 = vpop.f32.mrb[0].mxu0
  %v3632 = vadd.f32 0.0, %v3631
  %v3633 = vpop.f32.mrb[0].mxu0
  %3634 = vdwg.mxu0
  %v3636 = vrot.slane %v3632, 2
  %v3638 = vadd.f32 %v2035, %v3636
  %v3639 = vmul.f32 %v3638, 0.5
  %v3640 = vtanh.pop %v3639
  %v3641 = vadd.f32 %v3640, 1.0
  %v3642 = vmul.f32 %v3641, 0.5
  %v3643 = vtanh.pop %v3638
  %v3645 = vrot.slane %v3447, 6
  %v3647 = vmul.f32 %v3642, %v3645
  %3649 = vrot.lane.b32.xlu0 %v3643, 64
  %v3650 = vpop.permute.xlu0 %3649
  %v3652 = vmul.f32 %v3642, %v3650
  %3654 = vrot.lane.b32.xlu0 %v3652, 32
  %v3655 = vpop.permute.xlu0 %3654
  %v3657 = vadd.f32 %v3647, %v3655
  %v3658 = vtanh.pop %v3657
  %3660 = vrot.lane.b32.xlu0 %v3658, 64
  %v3661 = vpop.permute.xlu0 %3660
  %v3663 = vmul.f32 %v3642, %v3661
  %v3665 = vrot.slane %v3558, 2
  %3666 = vrot.lane.b32.xlu0 %v3665, 32
  %v3667 = vpop.permute.xlu0 %3666
  %v3668 = vsel %vm78, %v3667, 0
  %3670 = vmatprep.subr.mxu0 0.0
  %3671 = vmatpush1.msra.mxu0 %v1945
  %3672 = vmatprep.subr.mxu0 0.0
  %3673 = vmatpush1.msra.mxu0 %v1946
  %3674 = vmatprep.subr.mxu0 0.0
  %3675 = vmatpush1.msra.mxu0 %v1947
  %3676 = vmatprep.subr.mxu0 0.0
  %3677 = vmatpush1.msra.mxu0 %v1948
  %3678 = vmatprep.subr.mxu0 0.0
  %3679 = vmatpush1.msra.mxu0 0.0
  %3680 = vmatprep.subr.mxu0 0.0
  %3681 = vmatpush1.msra.mxu0 0.0
  %3682 = vmatprep.subr.mxu0 0.0
  %3683 = vmatpush1.msra.mxu0 0.0
  %3684 = vmatprep.subr.mxu0 0.0
  %3685 = vmatpush1.msra.mxu0 0.0
  %3686 = vmatprep.subr.mxu0 0.0
  %3687 = vmatpush1.msra.mxu0 0.0
  %3688 = vmatprep.subr.mxu0 0.0
  %3689 = vmatpush1.msra.mxu0 0.0
  %3690 = vmatprep.subr.mxu0 0.0
  %3691 = vmatpush1.msra.mxu0 0.0
  %3692 = vmatprep.subr.mxu0 0.0
  %3693 = vmatpush1.msra.mxu0 0.0
  %3694 = vmatprep.subr.mxu0 0.0
  %3695 = vmatpush1.msra.mxu0 0.0
  %3696 = vmatprep.subr.mxu0 0.0
  %3697 = vmatpush1.msra.mxu0 0.0
  %3698 = vmatprep.subr.mxu0 0.0
  %3699 = vmatpush1.msra.mxu0 0.0
  %3700 = vmatprep.subr.mxu0 0.0
  %3701 = vmatpush1.msra.mxu0 0.0
  %3702 = vmatprep.subr.mxu0 0.0
  %3703 = vmatpush1.msra.mxu0 0.0
  %3704 = vmatprep.subr.mxu0 0.0
  %3705 = vmatpush1.msra.mxu0 0.0
  %3706 = vmatprep.subr.mxu0 0.0
  %3707 = vmatpush1.msra.mxu0 0.0
  %3708 = vmatprep.subr.mxu0 0.0
  %3709 = vmatpush1.msra.mxu0 0.0
  %3710 = vmatprep.subr.mxu0 0.0
  %3711 = vmatpush1.msra.mxu0 0.0
  %3712 = vmatprep.subr.mxu0 0.0
  %3713 = vmatpush1.msra.mxu0 0.0
  %3714 = vmatprep.subr.mxu0 0.0
  %3715 = vmatpush1.msra.mxu0 0.0
  %3716 = vmatprep.subr.mxu0 0.0
  %3717 = vmatpush1.msra.mxu0 0.0
  %3718 = vmatprep.subr.mxu0 0.0
  %3719 = vmatpush1.msra.mxu0 0.0
  %3720 = vmatprep.subr.mxu0 0.0
  %3721 = vmatpush1.msra.mxu0 0.0
  %3722 = vmatprep.subr.mxu0 0.0
  %3723 = vmatpush1.msra.mxu0 0.0
  %3724 = vmatprep.subr.mxu0 0.0
  %3725 = vmatpush1.msra.mxu0 0.0
  %3726 = vmatprep.subr.mxu0 0.0
  %3727 = vmatpush1.msra.mxu0 0.0
  %3728 = vmatprep.subr.mxu0 0.0
  %3729 = vmatpush1.msra.mxu0 0.0
  %3730 = vmatprep.subr.mxu0 0.0
  %3731 = vmatpush1.msra.mxu0 0.0
  %3732 = vmatprep.subr.mxu0 0.0
  %3733 = vmatpush1.msra.mxu0 0.0
  %3734 = vmatprep.mubr.f32.mxu0 0.0
  %3735 = vmatmul.mubr.f32.gmra.mrb[0].mxu0 %v3668
  %v3736 = vpop.f32.mrb[0].mxu0
  %v3737 = vadd.f32 0.0, %v3736
  %v3738 = vpop.f32.mrb[0].mxu0
  %3739 = vdwg.mxu0
  %v3740 = vadd.f32 %v2111, %v3737
  %v3741 = vmul.f32 %v3740, 0.5
  %v3742 = vtanh.pop %v3741
  %v3743 = vadd.f32 %v3742, 1.0
  %v3744 = vmul.f32 %v3743, 0.5
  %v3745 = vtanh.pop %v3740
  %v3747 = vrot.slane %v3552, 2
  %v3749 = vmul.f32 %v3744, %v3747
  %3751 = vrot.lane.b32.xlu0 %v3745, 64
  %v3752 = vpop.permute.xlu0 %3751
  %v3754 = vmul.f32 %v3744, %v3752
  %3756 = vrot.lane.b32.xlu0 %v3754, 32
  %v3757 = vpop.permute.xlu0 %3756
  %v3759 = vadd.f32 %v3749, %v3757
  %v3760 = vtanh.pop %v3759
  %3762 = vrot.lane.b32.xlu0 %v3760, 64
  %v3763 = vpop.permute.xlu0 %3762
  %v3765 = vmul.f32 %v3744, %v3763
  %3767 = vrot.lane.b32.xlu0 %v3663, 32
  %v3768 = vpop.permute.xlu0 %3767
  %v3771 = vrot.slane %v3765, 2
  %3772 = vrot.lane.b32.xlu0 %v3771, 64
  %v3773 = vpop.permute.xlu0 %3772
  %v3775 = vsel %vm78, %v3768, %v3773
  %v3776 = vld [vmem:[%s13] sm:$0xff]
  %v3777 = vld [vmem:[%s13 + $0x8] sm:$0xff]
  %v3778 = vld [vmem:[%s13 + $0x10] sm:$0xff]
  %v3779 = vld [vmem:[%s13 + $0x18] sm:$0xff]
  %v3780 = vld [vmem:[%s13 + $0x20] sm:$0xff]
  %v3781 = vld [vmem:[%s13 + $0x28] sm:$0xff]
  %v3782 = vld [vmem:[%s13 + $0x30] sm:$0xff]
  %v3783 = vld [vmem:[%s13 + $0x38] sm:$0xff]
  %v3784 = vld [vmem:[#allocation2] sm:$0x1]
  %v3786 = vlaneseq
  %v3787 = vshrl.u32 %v3786, 7
  %v3788 = vsub.s32 0, %v3787
  %v3789 = vrot.slane %v3784, %v3788
  %v3792 = vrot.slane %v3775, 6
  %v3793 = vsel %vm1956, %v3792, 0
  %3795 = vmatprep.subr.mxu0 0.0
  %3796 = vmatpush1.msra.mxu0 %v3776
  %3797 = vmatprep.subr.mxu0 0.0
  %3798 = vmatpush1.msra.mxu0 %v3777
  %3799 = vmatprep.subr.mxu0 0.0
  %3800 = vmatpush1.msra.mxu0 %v3778
  %3801 = vmatprep.subr.mxu0 0.0
  %3802 = vmatpush1.msra.mxu0 %v3779
  %3803 = vmatprep.subr.mxu0 0.0
  %3804 = vmatpush1.msra.mxu0 %v3780
  %3805 = vmatprep.subr.mxu0 0.0
  %3806 = vmatpush1.msra.mxu0 %v3781
  %3807 = vmatprep.subr.mxu0 0.0
  %3808 = vmatpush1.msra.mxu0 %v3782
  %3809 = vmatprep.subr.mxu0 0.0
  %3810 = vmatpush1.msra.mxu0 %v3783
  %3811 = vmatprep.subr.mxu0 0.0
  %3812 = vmatpush1.msra.mxu0 0.0
  %3813 = vmatprep.subr.mxu0 0.0
  %3814 = vmatpush1.msra.mxu0 0.0
  %3815 = vmatprep.subr.mxu0 0.0
  %3816 = vmatpush1.msra.mxu0 0.0
  %3817 = vmatprep.subr.mxu0 0.0
  %3818 = vmatpush1.msra.mxu0 0.0
  %3819 = vmatprep.subr.mxu0 0.0
  %3820 = vmatpush1.msra.mxu0 0.0
  %3821 = vmatprep.subr.mxu0 0.0
  %3822 = vmatpush1.msra.mxu0 0.0
  %3823 = vmatprep.subr.mxu0 0.0
  %3824 = vmatpush1.msra.mxu0 0.0
  %3825 = vmatprep.subr.mxu0 0.0
  %3826 = vmatpush1.msra.mxu0 0.0
  %3827 = vmatprep.subr.mxu0 0.0
  %3828 = vmatpush1.msra.mxu0 0.0
  %3829 = vmatprep.subr.mxu0 0.0
  %3830 = vmatpush1.msra.mxu0 0.0
  %3831 = vmatprep.subr.mxu0 0.0
  %3832 = vmatpush1.msra.mxu0 0.0
  %3833 = vmatprep.subr.mxu0 0.0
  %3834 = vmatpush1.msra.mxu0 0.0
  %3835 = vmatprep.subr.mxu0 0.0
  %3836 = vmatpush1.msra.mxu0 0.0
  %3837 = vmatprep.subr.mxu0 0.0
  %3838 = vmatpush1.msra.mxu0 0.0
  %3839 = vmatprep.subr.mxu0 0.0
  %3840 = vmatpush1.msra.mxu0 0.0
  %3841 = vmatprep.subr.mxu0 0.0
  %3842 = vmatpush1.msra.mxu0 0.0
  %3843 = vmatprep.subr.mxu0 0.0
  %3844 = vmatpush1.msra.mxu0 0.0
  %3845 = vmatprep.subr.mxu0 0.0
  %3846 = vmatpush1.msra.mxu0 0.0
  %3847 = vmatprep.subr.mxu0 0.0
  %3848 = vmatpush1.msra.mxu0 0.0
  %3849 = vmatprep.subr.mxu0 0.0
  %3850 = vmatpush1.msra.mxu0 0.0
  %3851 = vmatprep.subr.mxu0 0.0
  %3852 = vmatpush1.msra.mxu0 0.0
  %3853 = vmatprep.subr.mxu0 0.0
  %3854 = vmatpush1.msra.mxu0 0.0
  %3855 = vmatprep.subr.mxu0 0.0
  %3856 = vmatpush1.msra.mxu0 0.0
  %3857 = vmatprep.subr.mxu0 0.0
  %3858 = vmatpush1.msra.mxu0 0.0
  %3859 = vmatprep.mubr.f32.mxu0 0.0
  %3860 = vmatmul.mubr.f32.gmra.mrb[0].mxu0 %v3793
  %v3861 = vpop.f32.mrb[0].mxu0
  %v3862 = vadd.f32 %v3789, %v3861
  %v3863 = vpop.f32.mrb[0].mxu0
  %3864 = vdwg.mxu0
  %vm3865 = vcmask 1024
  %3866 = vst.msk [vmem:[%s15] sm:$0x3] %vm3865, %v3862
  // Predicated region
  $region62: #{rnn_forward.1} parent=0 // pred_check
    _
  $region63: #{rnn_forward.1} parent=0 // pred_check_branch
    %3868 = sbr.rel (0) target = $region65
  $region64: #{rnn_forward.1} parent=0 // pred_region
    _
  $region65: #{rnn_forward.1} parent=0 // pred_fallthru
    _
  // Predicated region
  $region66: #{rnn_forward.1} parent=0 // pred_check
    _
  $region67: #{rnn_forward.1} parent=0 // pred_check_branch
    %3870 = sbr.rel (0) target = $region69
  $region68: #{rnn_forward.1} parent=0 // pred_region
    _
  $region69: #{rnn_forward.1} parent=0 // pred_fallthru
    _

</llo_original>
